<compile_context>
chip_gen: v7x
topology: tpu7x:2x2x1
jax: 0.10.0
libtpu: 0.0.40
codegen_flags: <defaults>
</compile_context>

<pallas_src>
import functools
import math

import jax
import jax.numpy as jnp
from jax.experimental import pallas as pl
from jax.experimental.pallas import tpu as pltpu

_NEG = -1e30  # large finite negative additive mask bias


# ------------------------- per-(batch, layer) decoder kernel -------------------------

def _decoder_layer_kernel(
        x_ref, mem_ref, trg_kb_ref, src_kb_ref,
        a1_wqkv_ref, a1_bqkv_ref, a1_wo_ref, a1_bo_ref,
        a2_wq_ref, a2_bq_ref, a2_wkv_ref, a2_bkv_ref, a2_wo_ref, a2_bo_ref,
        ff1_w_ref, ff1_b_ref, ff2_w_ref, ff2_b_ref,
        ln1_g_ref, ln1_b_ref, ln2_g_ref, ln2_b_ref, ln3_g_ref, ln3_b_ref,
        nf_g_ref, nf_b_ref, out_w_ref, out_b_ref,
        logits_ref,
        y_ref,
        *, num_layers, num_heads, d_head, eps):
    l = pl.program_id(1)
    D = num_heads * d_head
    S = y_ref.shape[0]
    Ssrc = mem_ref.shape[1]

    @pl.when(l == 0)
    def _():
        y_ref[...] = x_ref[0]                       # residual stream init (f32)

    def bf16(v):
        return v.astype(jnp.bfloat16)

    def layer_norm(x, g, b):
        # one-pass stats: var = E[x^2] - E[x]^2
        m = jnp.mean(x, axis=-1, keepdims=True)
        m2 = jnp.mean(x * x, axis=-1, keepdims=True)
        var = m2 - m * m
        return (x - m) * jax.lax.rsqrt(var + eps) * g + b

    def mha(q, k, v, wo, bo, bias):
        # q: (Sq, D) f32 (1/sqrt(dk) pre-folded into the Q weights), k/v: (Sk, D) f32.
        qb, kb, vb = bf16(q), bf16(k), bf16(v)
        ctx = []
        for h in range(num_heads):
            lo, hi = h * d_head, (h + 1) * d_head
            s = jax.lax.dot_general(qb[:, lo:hi], kb[:, lo:hi],
                                    (((1,), (1,)), ((), ())),
                                    preferred_element_type=jnp.float32) + bias
            s = s - jnp.max(s, axis=-1, keepdims=True)
            p = jnp.exp(s)
            p = p * pl.reciprocal(jnp.sum(p, axis=-1, keepdims=True), approx=True)
            ctx.append(jnp.dot(bf16(p), vb[:, lo:hi], preferred_element_type=jnp.float32))
        ctx = jnp.concatenate(ctx, axis=-1)          # (Sq, D) heads packed along lanes
        # single K=D O-projection (no per-head K=8 partial sums)
        return jnp.dot(bf16(ctx), wo, preferred_element_type=jnp.float32) + bo

    # additive attention biases: in-kernel causal mask + tiny per-batch key-pad vectors
    q_pos = jax.lax.broadcasted_iota(jnp.int32, (S, S), 0)
    k_pos = jax.lax.broadcasted_iota(jnp.int32, (S, S), 1)
    trg_bias = jnp.where(k_pos > q_pos, _NEG, 0.0) + trg_kb_ref[0]   # (S, S)
    src_bias = src_kb_ref[0]                                         # (1, Ssrc), broadcasts

    y = y_ref[...]                                   # (S, D) f32
    mem = mem_ref[0]                                 # (Ssrc, D) f32

    # residual 0: masked self-attention (pre-norm), fused QKV projection
    n = layer_norm(y, ln1_g_ref[0], ln1_b_ref[0])
    qkv = jnp.dot(bf16(n), a1_wqkv_ref[0], preferred_element_type=jnp.float32) + a1_bqkv_ref[0]
    y = y + mha(qkv[:, 0 * D:1 * D], qkv[:, 1 * D:2 * D], qkv[:, 2 * D:3 * D],
                a1_wo_ref[0], a1_bo_ref[0], trg_bias)

    # residual 1: cross-attention over encoder memory, fused KV projection
    n = layer_norm(y, ln2_g_ref[0], ln2_b_ref[0])
    q = jnp.dot(bf16(n), a2_wq_ref[0], preferred_element_type=jnp.float32) + a2_bq_ref[0]
    kv = jnp.dot(bf16(mem), a2_wkv_ref[0], preferred_element_type=jnp.float32) + a2_bkv_ref[0]
    y = y + mha(q, kv[:, 0 * D:1 * D], kv[:, 1 * D:2 * D],
                a2_wo_ref[0], a2_bo_ref[0], src_bias)

    # residual 2: feed-forward
    n = layer_norm(y, ln3_g_ref[0], ln3_b_ref[0])
    hid = jnp.maximum(
        jnp.dot(bf16(n), ff1_w_ref[0], preferred_element_type=jnp.float32) + ff1_b_ref[0], 0.0)
    y = y + jnp.dot(bf16(hid), ff2_w_ref[0], preferred_element_type=jnp.float32) + ff2_b_ref[0]

    y_ref[...] = y

    # final LayerNorm + (lane-dense, vocab-padded) projection on the last layer iteration
    @pl.when(l == num_layers - 1)
    def _():
        nfin = layer_norm(y, nf_g_ref[...], nf_b_ref[...])
        logits = jnp.dot(bf16(nfin), out_w_ref[...],
                         preferred_element_type=jnp.float32) + out_b_ref[...]
        logits_ref[0] = logits


# ------------------------- host-side packing & wrapper -------------------------

def pack_decoder_params(params, cfg):
    """Stack per-block params on a leading layer axis; fuse QKV / KV weights; fold 1/sqrt(dk)
    into the Q columns; store matmul weights as bf16 (biases / LN params stay f32)."""
    D, H, V = cfg['d_embed'], cfg['h'], cfg['decoder_vocab_size']
    dk = D // H
    scale = 1.0 / math.sqrt(dk)
    Vp = ((V + 127) // 128) * 128
    blocks = params['blocks']

    stack = lambda f: jnp.stack([f(b) for b in blocks], axis=0)
    row = lambda v: v.reshape(1, -1)
    bf = lambda a: a.astype(jnp.bfloat16)

    def qkv_w(b):
        return jnp.concatenate([b['attn1']['q']['w'] * scale,
                                b['attn1']['k']['w'], b['attn1']['v']['w']], axis=1)

    def qkv_b(b):
        return jnp.concatenate([b['attn1']['q']['b'] * scale,
                                b['attn1']['k']['b'], b['attn1']['v']['b']]).reshape(1, -1)

    def kv_w(b):
        return jnp.concatenate([b['attn2']['k']['w'], b['attn2']['v']['w']], axis=1)

    def kv_b(b):
        return jnp.concatenate([b['attn2']['k']['b'], b['attn2']['v']['b']]).reshape(1, -1)

    out_w = jnp.zeros((D, Vp), jnp.float32).at[:, :V].set(params['out']['w'])
    out_b = jnp.zeros((1, Vp), jnp.float32).at[:, :V].set(params['out']['b'].reshape(1, -1))

    return {
        'a1_wqkv': bf(stack(qkv_w)), 'a1_bqkv': stack(qkv_b),
        'a1_wo': bf(stack(lambda b: b['attn1']['o']['w'])),
        'a1_bo': stack(lambda b: row(b['attn1']['o']['b'])),
        'a2_wq': bf(stack(lambda b: b['attn2']['q']['w'] * scale)),
        'a2_bq': stack(lambda b: row(b['attn2']['q']['b'] * scale)),
        'a2_wkv': bf(stack(kv_w)), 'a2_bkv': stack(kv_b),
        'a2_wo': bf(stack(lambda b: b['attn2']['o']['w'])),
        'a2_bo': stack(lambda b: row(b['attn2']['o']['b'])),
        'ff1_w': bf(stack(lambda b: b['ff1']['w'])),
        'ff1_b': stack(lambda b: row(b['ff1']['b'])),
        'ff2_w': bf(stack(lambda b: b['ff2']['w'])),
        'ff2_b': stack(lambda b: row(b['ff2']['b'])),
        'ln1_g': stack(lambda b: row(b['ln1']['g'])), 'ln1_b': stack(lambda b: row(b['ln1']['b'])),
        'ln2_g': stack(lambda b: row(b['ln2']['g'])), 'ln2_b': stack(lambda b: row(b['ln2']['b'])),
        'ln3_g': stack(lambda b: row(b['ln3']['g'])), 'ln3_b': stack(lambda b: row(b['ln3']['b'])),
        'nf_g': row(params['norm']['g']), 'nf_b': row(params['norm']['b']),
        'out_w': bf(out_w), 'out_b': out_b,
        'tok_embed': params['tok_embed'], 'pos_embed': params['pos_embed'],
        'vocab_padded': Vp,
    }


def decoder_forward(packed, cfg, memory, src_mask, trg, trg_pad_mask):
    B, S = trg.shape
    Ssrc = memory.shape[1]
    D, H, V, L = cfg['d_embed'], cfg['h'], cfg['decoder_vocab_size'], cfg['N_decoder']
    dk = D // H
    Vp = packed['vocab_padded']

    # TODO(synk): nn.Dropout layers are identity (eval/inference semantics).
    # TODO(synk): token-embedding gather + positional add stay in plain-JAX glue outside the kernel.
    x = (jnp.take(packed['tok_embed'], trg, axis=0)
         + packed['pos_embed'][:, :S, :]).astype(jnp.float32)
    mem = memory.astype(jnp.float32)

    # per-batch additive key-padding bias vectors (0 keep / -1e30 mask)
    trg_kb = jnp.where(trg_pad_mask[:, 0, 0, :], _NEG, 0.0).astype(jnp.float32).reshape(B, 1, S)
    src_kb = jnp.where(src_mask[:, 0, 0, :], _NEG, 0.0).astype(jnp.float32).reshape(B, 1, Ssrc)

    def batch_spec(arr):
        nd = arr.ndim
        return pl.BlockSpec((1,) + arr.shape[1:], lambda b, l, _n=nd: (b,) + (0,) * (_n - 1))

    def layer_spec(arr):
        nd = arr.ndim
        return pl.BlockSpec((1,) + arr.shape[1:], lambda b, l, _n=nd: (l,) + (0,) * (_n - 1))

    def full_spec(arr):
        nd = arr.ndim
        return pl.BlockSpec(arr.shape, lambda b, l, _n=nd: (0,) * _n)

    arrays_specs = [
        (x, batch_spec(x)), (mem, batch_spec(mem)),
        (trg_kb, batch_spec(trg_kb)), (src_kb, batch_spec(src_kb)),
        (packed['a1_wqkv'], layer_spec(packed['a1_wqkv'])),
        (packed['a1_bqkv'], layer_spec(packed['a1_bqkv'])),
        (packed['a1_wo'], layer_spec(packed['a1_wo'])),
        (packed['a1_bo'], layer_spec(packed['a1_bo'])),
        (packed['a2_wq'], layer_spec(packed['a2_wq'])),
        (packed['a2_bq'], layer_spec(packed['a2_bq'])),
        (packed['a2_wkv'], layer_spec(packed['a2_wkv'])),
        (packed['a2_bkv'], layer_spec(packed['a2_bkv'])),
        (packed['a2_wo'], layer_spec(packed['a2_wo'])),
        (packed['a2_bo'], layer_spec(packed['a2_bo'])),
        (packed['ff1_w'], layer_spec(packed['ff1_w'])),
        (packed['ff1_b'], layer_spec(packed['ff1_b'])),
        (packed['ff2_w'], layer_spec(packed['ff2_w'])),
        (packed['ff2_b'], layer_spec(packed['ff2_b'])),
        (packed['ln1_g'], layer_spec(packed['ln1_g'])),
        (packed['ln1_b'], layer_spec(packed['ln1_b'])),
        (packed['ln2_g'], layer_spec(packed['ln2_g'])),
        (packed['ln2_b'], layer_spec(packed['ln2_b'])),
        (packed['ln3_g'], layer_spec(packed['ln3_g'])),
        (packed['ln3_b'], layer_spec(packed['ln3_b'])),
        (packed['nf_g'], full_spec(packed['nf_g'])),
        (packed['nf_b'], full_spec(packed['nf_b'])),
        (packed['out_w'], full_spec(packed['out_w'])),
        (packed['out_b'], full_spec(packed['out_b'])),
    ]
    arrays = [a for a, _ in arrays_specs]
    in_specs = [s for _, s in arrays_specs]

    logits = pl.pallas_call(
        functools.partial(_decoder_layer_kernel,
                          num_layers=L, num_heads=H, d_head=dk, eps=1e-5),
        out_shape=jax.ShapeDtypeStruct((B, S, Vp), jnp.float32),
        grid=(B, L),
        in_specs=in_specs,
        out_specs=pl.BlockSpec((1, S, Vp), lambda b, l: (b, 0, 0)),
        scratch_shapes=[pltpu.VMEM((S, D), jnp.float32)],     # residual stream across layer axis
        compiler_params=pltpu.CompilerParams(
            dimension_semantics=("parallel", "arbitrary")),
    )(*arrays)
    return logits[:, :, :V]


# ------------------------- pure-JAX reference (for verification) -------------------------

def _ref_ln(x, g, b, eps=1e-5):
    mean = jnp.mean(x, axis=-1, keepdims=True)
    var = jnp.mean((x - mean) ** 2, axis=-1, keepdims=True)
    return (x - mean) * jax.lax.rsqrt(var + eps) * g + b


def _ref_mha(p, q_in, k_in, v_in, mask_bool, H):
    B, Sq, D = q_in.shape
    Sk = k_in.shape[1]
    dk = D // H
    q = (q_in @ p['q']['w'] + p['q']['b']).reshape(B, Sq, H, dk).transpose(0, 2, 1, 3)
    k = (k_in @ p['k']['w'] + p['k']['b']).reshape(B, Sk, H, dk).transpose(0, 2, 1, 3)
    v = (v_in @ p['v']['w'] + p['v']['b']).reshape(B, Sk, H, dk).transpose(0, 2, 1, 3)
    s = jnp.einsum('bhqd,bhkd->bhqk', q, k) / math.sqrt(dk)
    s = jnp.where(mask_bool, -jnp.inf, s)
    a = jax.nn.softmax(s, axis=-1)
    x = jnp.einsum('bhqk,bhkd->bhqd', a, v).transpose(0, 2, 1, 3).reshape(B, Sq, D)
    return x @ p['o']['w'] + p['o']['b']


def ref_decoder_forward(params, cfg, memory, src_mask, trg, trg_pad_mask):
    B, S = trg.shape
    Ssrc = memory.shape[1]
    H = cfg['h']
    causal = jnp.triu(jnp.ones((S, S), dtype=jnp.bool_), k=1).reshape(1, 1, S, S)
    trg_mask = jnp.logical_or(trg_pad_mask, causal)
    src_mask_b = jnp.broadcast_to(src_mask, (B, 1, S, Ssrc))
    x = jnp.take(params['tok_embed'], trg, axis=0) + params['pos_embed'][:, :S, :]
    for p in params['blocks']:
        n = _ref_ln(x, p['ln1']['g'], p['ln1']['b'])
        x = x + _ref_mha(p['attn1'], n, n, n, trg_mask, H)
        n = _ref_ln(x, p['ln2']['g'], p['ln2']['b'])
        x = x + _ref_mha(p['attn2'], n, memory, memory, src_mask_b, H)
        n = _ref_ln(x, p['ln3']['g'], p['ln3']['b'])
        h = jnp.maximum(n @ p['ff1']['w'] + p['ff1']['b'], 0.0)
        x = x + (h @ p['ff2']['w'] + p['ff2']['b'])
    x = _ref_ln(x, params['norm']['g'], params['norm']['b'])
    return x @ params['out']['w'] + params['out']['b']


# ------------------------- deterministic parameter init -------------------------

def init_params(key, cfg):
    D, Dff = cfg['d_embed'], cfg['d_ff']
    V, L, Smax = cfg['decoder_vocab_size'], cfg['N_decoder'], cfg['max_seq_len']
    keys = iter(jax.random.split(key, 256))

    def nrm(shape, scale):
        return jax.random.normal(next(keys), shape, jnp.float32) * scale

    def dense(din, dout):
        return {'w': nrm((din, dout), 1.0 / math.sqrt(din)), 'b': nrm((dout,), 0.01)}

    def mha_p():
        return {'q': dense(D, D), 'k': dense(D, D), 'v': dense(D, D), 'o': dense(D, D)}

    def ln_p():
        return {'g': jnp.ones((D,), jnp.float32), 'b': jnp.zeros((D,), jnp.float32)}

    blocks = []
    for _ in range(L):
        blocks.append({
            'attn1': mha_p(), 'attn2': mha_p(),
            'ff1': dense(D, Dff), 'ff2': dense(Dff, D),
            'ln1': ln_p(), 'ln2': ln_p(), 'ln3': ln_p(),
        })
    return {
        'tok_embed': nrm((V, D), 0.1),
        'pos_embed': nrm((1, Smax, D), 0.1),
        'blocks': blocks,
        'norm': ln_p(),
        'out': dense(D, V),
    }


# ------------------------- main -------------------------

if __name__ == "__main__":
    cfg = dict(d_embed=32, h=4, d_ff=64, decoder_vocab_size=64,
               N_decoder=2, max_seq_len=16, dropout=0.1)
    B, S_trg, S_src = 2, 8, 8

    key = jax.random.PRNGKey(0)
    kp, km, kt = jax.random.split(key, 3)
    params = init_params(kp, cfg)
    packed = pack_decoder_params(params, cfg)

    memory = jax.random.normal(km, (B, S_src, cfg['d_embed']), jnp.float32)   # encoder output
    trg = jax.random.randint(kt, (B, S_trg), 0, cfg['decoder_vocab_size'])
    # pad masks: True == padded (masked). Batch 1 has its last src / trg token padded.
    trg_pad_mask = jnp.zeros((B, 1, 1, S_trg), jnp.bool_).at[1, 0, 0, S_trg - 1].set(True)
    src_mask = jnp.zeros((B, 1, 1, S_src), jnp.bool_).at[1, 0, 0, S_src - 1].set(True)

    logits = decoder_forward(packed, cfg, memory, src_mask, trg, trg_pad_mask)
    logits = jax.block_until_ready(logits)

    # High-precision pure-JAX ground truth; kernel runs bf16 operands on the MXU (f32 accumulate),
    # hence the loose tolerance.
    with jax.default_matmul_precision("highest"):
        ref = ref_decoder_forward(params, cfg, memory, src_mask, trg, trg_pad_mask)
        ref = jax.block_until_ready(ref)

    assert logits.shape == (B, S_trg, cfg['decoder_vocab_size']), logits.shape
    assert bool(jnp.all(jnp.isfinite(logits)))
    max_err = float(jnp.max(jnp.abs(logits - ref)))
    assert bool(jnp.allclose(logits, ref, atol=7e-2, rtol=7e-2)), max_err
    print("KERNEL_OK")
</pallas_src>

<mosaic_0001>
module attributes {stable_mosaic.version = 11 : i64} {
  func.func @_decoder_layer_kernel(%arg0: i32, %arg1: i32, %arg2: memref<1x8x32xf32, #tpu.memory_space<vmem>>, %arg3: memref<1x8x32xf32, #tpu.memory_space<vmem>>, %arg4: memref<1x1x8xf32, #tpu.memory_space<vmem>>, %arg5: memref<1x1x8xf32, #tpu.memory_space<vmem>>, %arg6: memref<1x32x96xbf16, #tpu.memory_space<vmem>>, %arg7: memref<1x1x96xf32, #tpu.memory_space<vmem>>, %arg8: memref<1x32x32xbf16, #tpu.memory_space<vmem>>, %arg9: memref<1x1x32xf32, #tpu.memory_space<vmem>>, %arg10: memref<1x32x32xbf16, #tpu.memory_space<vmem>>, %arg11: memref<1x1x32xf32, #tpu.memory_space<vmem>>, %arg12: memref<1x32x64xbf16, #tpu.memory_space<vmem>>, %arg13: memref<1x1x64xf32, #tpu.memory_space<vmem>>, %arg14: memref<1x32x32xbf16, #tpu.memory_space<vmem>>, %arg15: memref<1x1x32xf32, #tpu.memory_space<vmem>>, %arg16: memref<1x32x64xbf16, #tpu.memory_space<vmem>>, %arg17: memref<1x1x64xf32, #tpu.memory_space<vmem>>, %arg18: memref<1x64x32xbf16, #tpu.memory_space<vmem>>, %arg19: memref<1x1x32xf32, #tpu.memory_space<vmem>>, %arg20: memref<1x1x32xf32, #tpu.memory_space<vmem>>, %arg21: memref<1x1x32xf32, #tpu.memory_space<vmem>>, %arg22: memref<1x1x32xf32, #tpu.memory_space<vmem>>, %arg23: memref<1x1x32xf32, #tpu.memory_space<vmem>>, %arg24: memref<1x1x32xf32, #tpu.memory_space<vmem>>, %arg25: memref<1x1x32xf32, #tpu.memory_space<vmem>>, %arg26: memref<1x32xf32, #tpu.memory_space<vmem>>, %arg27: memref<1x32xf32, #tpu.memory_space<vmem>>, %arg28: memref<32x128xbf16, #tpu.memory_space<vmem>>, %arg29: memref<1x128xf32, #tpu.memory_space<vmem>>, %arg30: memref<1x8x128xf32, #tpu.memory_space<vmem>>, %arg31: memref<8x32xf32, #tpu.memory_space<vmem>>) attributes {dimension_semantics = [#tpu.dimension_semantics<parallel>, #tpu.dimension_semantics<arbitrary>], iteration_bounds = array<i64: 2, 2>, scalar_prefetch = 0 : i64, scratch_operands = 1 : i64, tpu.core_type = #tpu.core_type<tc>, window_params = [{transform_indices = @transform_0, window_bounds = array<i64: 1, 8, 32>}, {transform_indices = @transform_1, window_bounds = array<i64: 1, 8, 32>}, {transform_indices = @transform_2, window_bounds = array<i64: 1, 1, 8>}, {transform_indices = @transform_3, window_bounds = array<i64: 1, 1, 8>}, {transform_indices = @transform_4, window_bounds = array<i64: 1, 32, 96>}, {transform_indices = @transform_5, window_bounds = array<i64: 1, 1, 96>}, {transform_indices = @transform_6, window_bounds = array<i64: 1, 32, 32>}, {transform_indices = @transform_7, window_bounds = array<i64: 1, 1, 32>}, {transform_indices = @transform_8, window_bounds = array<i64: 1, 32, 32>}, {transform_indices = @transform_9, window_bounds = array<i64: 1, 1, 32>}, {transform_indices = @transform_10, window_bounds = array<i64: 1, 32, 64>}, {transform_indices = @transform_11, window_bounds = array<i64: 1, 1, 64>}, {transform_indices = @transform_12, window_bounds = array<i64: 1, 32, 32>}, {transform_indices = @transform_13, window_bounds = array<i64: 1, 1, 32>}, {transform_indices = @transform_14, window_bounds = array<i64: 1, 32, 64>}, {transform_indices = @transform_15, window_bounds = array<i64: 1, 1, 64>}, {transform_indices = @transform_16, window_bounds = array<i64: 1, 64, 32>}, {transform_indices = @transform_17, window_bounds = array<i64: 1, 1, 32>}, {transform_indices = @transform_18, window_bounds = array<i64: 1, 1, 32>}, {transform_indices = @transform_19, window_bounds = array<i64: 1, 1, 32>}, {transform_indices = @transform_20, window_bounds = array<i64: 1, 1, 32>}, {transform_indices = @transform_21, window_bounds = array<i64: 1, 1, 32>}, {transform_indices = @transform_22, window_bounds = array<i64: 1, 1, 32>}, {transform_indices = @transform_23, window_bounds = array<i64: 1, 1, 32>}, {pipeline_mode = #tpu.pipeline_mode<synchronous>, transform_indices = @transform_24, window_bounds = array<i64: 1, 32>}, {pipeline_mode = #tpu.pipeline_mode<synchronous>, transform_indices = @transform_25, window_bounds = array<i64: 1, 32>}, {pipeline_mode = #tpu.pipeline_mode<synchronous>, transform_indices = @transform_26, window_bounds = array<i64: 32, 128>}, {pipeline_mode = #tpu.pipeline_mode<synchronous>, transform_indices = @transform_27, window_bounds = array<i64: 1, 128>}, {transform_indices = @transform_28, window_bounds = array<i64: 1, 8, 128>}]} {
    %c0_i32 = arith.constant 0 : i32
    %0 = arith.cmpi eq, %arg1, %c0_i32 : i32
    %1 = arith.extui %0 : i1 to i32
    %c0_i32_0 = arith.constant 0 : i32
    %2 = arith.cmpi ne, %1, %c0_i32_0 : i32
    scf.if %2 {
      %c0_130 = arith.constant 0 : index
      %c0_131 = arith.constant 0 : index
      %c0_132 = arith.constant 0 : index
      %314 = vector.load %arg2[%c0_130, %c0_131, %c0_132] : memref<1x8x32xf32, #tpu.memory_space<vmem>>, vector<1x8x32xf32>
      %315 = vector.shape_cast %314 : vector<1x8x32xf32> to vector<8x32xf32>
      %c0_133 = arith.constant 0 : index
      %c0_134 = arith.constant 0 : index
      %316 = vector.load %arg31[%c0_133, %c0_134] : memref<8x32xf32, #tpu.memory_space<vmem>>, vector<8x32xf32>
      tpu.vector_store %arg31[%c0_133, %c0_134], %315 {strides = array<i32>} : memref<8x32xf32, #tpu.memory_space<vmem>>, vector<8x32xf32>,
    } else {
    }
    %3 = tpu.iota {dimensions = array<i32: 0>} : vector<8x8xi32>
    %4 = tpu.iota {dimensions = array<i32: 1>} : vector<8x8xi32>
    %5 = arith.cmpi sgt, %4, %3 : vector<8x8xi32>
    %cst = arith.constant -1.000000e+30 : f32
    %cst_1 = arith.constant 0.000000e+00 : f32
    %6 = vector.broadcast %cst : f32 to vector<8x8xf32>
    %7 = vector.broadcast %cst_1 : f32 to vector<8x8xf32>
    %8 = arith.select %5, %6, %7 : vector<8x8xi1>, vector<8x8xf32>
    %c0 = arith.constant 0 : index
    %c0_2 = arith.constant 0 : index
    %c0_3 = arith.constant 0 : index
    %9 = vector.load %arg4[%c0, %c0_2, %c0_3] : memref<1x1x8xf32, #tpu.memory_space<vmem>>, vector<1x1x8xf32>
    %10 = vector.shape_cast %9 : vector<1x1x8xf32> to vector<1x8xf32>
    %11 = vector.broadcast %10 : vector<1x8xf32> to vector<8x8xf32>
    %12 = arith.addf %8, %11 : vector<8x8xf32>
    %c0_4 = arith.constant 0 : index
    %c0_5 = arith.constant 0 : index
    %c0_6 = arith.constant 0 : index
    %13 = vector.load %arg5[%c0_4, %c0_5, %c0_6] : memref<1x1x8xf32, #tpu.memory_space<vmem>>, vector<1x1x8xf32>
    %14 = vector.shape_cast %13 : vector<1x1x8xf32> to vector<1x8xf32>
    %c0_7 = arith.constant 0 : index
    %c0_8 = arith.constant 0 : index
    %15 = vector.load %arg31[%c0_7, %c0_8] : memref<8x32xf32, #tpu.memory_space<vmem>>, vector<8x32xf32>
    %c0_9 = arith.constant 0 : index
    %c0_10 = arith.constant 0 : index
    %c0_11 = arith.constant 0 : index
    %16 = vector.load %arg3[%c0_9, %c0_10, %c0_11] : memref<1x8x32xf32, #tpu.memory_space<vmem>>, vector<1x8x32xf32>
    %17 = vector.shape_cast %16 : vector<1x8x32xf32> to vector<8x32xf32>
    %c0_12 = arith.constant 0 : index
    %c0_13 = arith.constant 0 : index
    %c0_14 = arith.constant 0 : index
    %18 = vector.load %arg20[%c0_12, %c0_13, %c0_14] : memref<1x1x32xf32, #tpu.memory_space<vmem>>, vector<1x1x32xf32>
    %19 = vector.shape_cast %18 : vector<1x1x32xf32> to vector<1x32xf32>
    %c0_15 = arith.constant 0 : index
    %c0_16 = arith.constant 0 : index
    %c0_17 = arith.constant 0 : index
    %20 = vector.load %arg21[%c0_15, %c0_16, %c0_17] : memref<1x1x32xf32, #tpu.memory_space<vmem>>, vector<1x1x32xf32>
    %21 = vector.shape_cast %20 : vector<1x1x32xf32> to vector<1x32xf32>
    %cst_18 = arith.constant dense<0.000000e+00> : vector<8xf32>
    %22 = vector.multi_reduction <add>, %15, %cst_18 [1] : vector<8x32xf32> to vector<8xf32>
    %23 = vector.shape_cast %22 : vector<8xf32> to vector<8x1xf32>
    %cst_19 = arith.constant 3.200000e+01 : f32
    %24 = vector.broadcast %cst_19 : f32 to vector<8x1xf32>
    %25 = arith.divf %23, %24 : vector<8x1xf32>
    %26 = arith.mulf %15, %15 : vector<8x32xf32>
    %cst_20 = arith.constant dense<0.000000e+00> : vector<8xf32>
    %27 = vector.multi_reduction <add>, %26, %cst_20 [1] : vector<8x32xf32> to vector<8xf32>
    %28 = vector.shape_cast %27 : vector<8xf32> to vector<8x1xf32>
    %cst_21 = arith.constant 3.200000e+01 : f32
    %29 = vector.broadcast %cst_21 : f32 to vector<8x1xf32>
    %30 = arith.divf %28, %29 : vector<8x1xf32>
    %31 = arith.mulf %25, %25 : vector<8x1xf32>
    %32 = arith.subf %30, %31 : vector<8x1xf32>
    %33 = vector.broadcast %25 : vector<8x1xf32> to vector<8x32xf32>
    %34 = arith.subf %15, %33 : vector<8x32xf32>
    %cst_22 = arith.constant 9.99999974E-6 : f32
    %35 = vector.broadcast %cst_22 : f32 to vector<8x1xf32>
    %36 = arith.addf %32, %35 : vector<8x1xf32>
    %37 = math.rsqrt %36 : vector<8x1xf32>
    %38 = vector.broadcast %37 : vector<8x1xf32> to vector<8x32xf32>
    %39 = arith.mulf %34, %38 : vector<8x32xf32>
    %40 = vector.broadcast %19 : vector<1x32xf32> to vector<8x32xf32>
    %41 = arith.mulf %39, %40 : vector<8x32xf32>
    %42 = vector.broadcast %21 : vector<1x32xf32> to vector<8x32xf32>
    %43 = arith.addf %41, %42 : vector<8x32xf32>
    %44 = arith.truncf %43 : vector<8x32xf32> to vector<8x32xbf16>
    %c0_23 = arith.constant 0 : index
    %c0_24 = arith.constant 0 : index
    %c0_25 = arith.constant 0 : index
    %45 = vector.load %arg6[%c0_23, %c0_24, %c0_25] : memref<1x32x96xbf16, #tpu.memory_space<vmem>>, vector<1x32x96xbf16>
    %46 = vector.shape_cast %45 : vector<1x32x96xbf16> to vector<32x96xbf16>
    %cst_26 = arith.constant dense<0.000000e+00> : vector<8x96xf32>
    %47 = tpu.matmul %44, %46, %cst_26 {dimension_numbers = #tpu.dot_dimension_numbers<[1], [0], [0], [1], [0, 0, 1, 1], [], []>} : vector<8x32xbf16>, vector<32x96xbf16>, vector<8x96xf32> -> vector<8x96xf32>
    %c0_27 = arith.constant 0 : index
    %c0_28 = arith.constant 0 : index
    %c0_29 = arith.constant 0 : index
    %48 = vector.load %arg7[%c0_27, %c0_28, %c0_29] : memref<1x1x96xf32, #tpu.memory_space<vmem>>, vector<1x1x96xf32>
    %49 = vector.shape_cast %48 : vector<1x1x96xf32> to vector<1x96xf32>
    %50 = vector.broadcast %49 : vector<1x96xf32> to vector<8x96xf32>
    %51 = arith.addf %47, %50 : vector<8x96xf32>
    %52 = vector.extract_strided_slice %51 {offsets = [0, 0], sizes = [8, 32], strides = [1, 1]} : vector<8x96xf32> to vector<8x32xf32>
    %53 = vector.extract_strided_slice %51 {offsets = [0, 32], sizes = [8, 32], strides = [1, 1]} : vector<8x96xf32> to vector<8x32xf32>
    %54 = vector.extract_strided_slice %51 {offsets = [0, 64], sizes = [8, 32], strides = [1, 1]} : vector<8x96xf32> to vector<8x32xf32>
    %c0_30 = arith.constant 0 : index
    %c0_31 = arith.constant 0 : index
    %c0_32 = arith.constant 0 : index
    %55 = vector.load %arg8[%c0_30, %c0_31, %c0_32] : memref<1x32x32xbf16, #tpu.memory_space<vmem>>, vector<1x32x32xbf16>
    %56 = vector.shape_cast %55 : vector<1x32x32xbf16> to vector<32x32xbf16>
    %c0_33 = arith.constant 0 : index
    %c0_34 = arith.constant 0 : index
    %c0_35 = arith.constant 0 : index
    %57 = vector.load %arg9[%c0_33, %c0_34, %c0_35] : memref<1x1x32xf32, #tpu.memory_space<vmem>>, vector<1x1x32xf32>
    %58 = vector.shape_cast %57 : vector<1x1x32xf32> to vector<1x32xf32>
    %59 = arith.truncf %52 : vector<8x32xf32> to vector<8x32xbf16>
    %60 = arith.truncf %53 : vector<8x32xf32> to vector<8x32xbf16>
    %61 = arith.truncf %54 : vector<8x32xf32> to vector<8x32xbf16>
    %62 = vector.extract_strided_slice %59 {offsets = [0, 0], sizes = [8, 8], strides = [1, 1]} : vector<8x32xbf16> to vector<8x8xbf16>
    %63 = vector.extract_strided_slice %60 {offsets = [0, 0], sizes = [8, 8], strides = [1, 1]} : vector<8x32xbf16> to vector<8x8xbf16>
    %cst_36 = arith.constant dense<0.000000e+00> : vector<8x8xf32>
    %64 = tpu.matmul %62, %63, %cst_36 {dimension_numbers = #tpu.dot_dimension_numbers<[1], [1], [0], [0], [0, 0, 1, 0], [], []>} : vector<8x8xbf16>, vector<8x8xbf16>, vector<8x8xf32> -> vector<8x8xf32>
    %65 = arith.addf %64, %12 : vector<8x8xf32>
    %cst_37 = arith.constant dense<0xFF800000> : vector<8xf32>
    %66 = vector.multi_reduction <maximumf>, %65, %cst_37 [1] : vector<8x8xf32> to vector<8xf32>
    %67 = vector.shape_cast %66 : vector<8xf32> to vector<8x1xf32>
    %68 = vector.broadcast %67 : vector<8x1xf32> to vector<8x8xf32>
    %69 = arith.subf %65, %68 : vector<8x8xf32>
    %70 = math.exp %69 : vector<8x8xf32>
    %cst_38 = arith.constant dense<0.000000e+00> : vector<8xf32>
    %71 = vector.multi_reduction <add>, %70, %cst_38 [1] : vector<8x8xf32> to vector<8xf32>
    %72 = vector.shape_cast %71 : vector<8xf32> to vector<8x1xf32>
    %73 = tpu.reciprocal %72 {approx = true} : vector<8x1xf32> -> vector<8x1xf32>
    %74 = vector.broadcast %73 : vector<8x1xf32> to vector<8x8xf32>
    %75 = arith.mulf %70, %74 : vector<8x8xf32>
    %76 = arith.truncf %75 : vector<8x8xf32> to vector<8x8xbf16>
    %77 = vector.extract_strided_slice %61 {offsets = [0, 0], sizes = [8, 8], strides = [1, 1]} : vector<8x32xbf16> to vector<8x8xbf16>
    %cst_39 = arith.constant dense<0.000000e+00> : vector<8x8xf32>
    %78 = tpu.matmul %76, %77, %cst_39 {dimension_numbers = #tpu.dot_dimension_numbers<[1], [0], [0], [1], [0, 0, 1, 1], [], []>} : vector<8x8xbf16>, vector<8x8xbf16>, vector<8x8xf32> -> vector<8x8xf32>
    %79 = vector.extract_strided_slice %59 {offsets = [0, 8], sizes = [8, 8], strides = [1, 1]} : vector<8x32xbf16> to vector<8x8xbf16>
    %80 = vector.extract_strided_slice %60 {offsets = [0, 8], sizes = [8, 8], strides = [1, 1]} : vector<8x32xbf16> to vector<8x8xbf16>
    %cst_40 = arith.constant dense<0.000000e+00> : vector<8x8xf32>
    %81 = tpu.matmul %79, %80, %cst_40 {dimension_numbers = #tpu.dot_dimension_numbers<[1], [1], [0], [0], [0, 0, 1, 0], [], []>} : vector<8x8xbf16>, vector<8x8xbf16>, vector<8x8xf32> -> vector<8x8xf32>
    %82 = arith.addf %81, %12 : vector<8x8xf32>
    %cst_41 = arith.constant dense<0xFF800000> : vector<8xf32>
    %83 = vector.multi_reduction <maximumf>, %82, %cst_41 [1] : vector<8x8xf32> to vector<8xf32>
    %84 = vector.shape_cast %83 : vector<8xf32> to vector<8x1xf32>
    %85 = vector.broadcast %84 : vector<8x1xf32> to vector<8x8xf32>
    %86 = arith.subf %82, %85 : vector<8x8xf32>
    %87 = math.exp %86 : vector<8x8xf32>
    %cst_42 = arith.constant dense<0.000000e+00> : vector<8xf32>
    %88 = vector.multi_reduction <add>, %87, %cst_42 [1] : vector<8x8xf32> to vector<8xf32>
    %89 = vector.shape_cast %88 : vector<8xf32> to vector<8x1xf32>
    %90 = tpu.reciprocal %89 {approx = true} : vector<8x1xf32> -> vector<8x1xf32>
    %91 = vector.broadcast %90 : vector<8x1xf32> to vector<8x8xf32>
    %92 = arith.mulf %87, %91 : vector<8x8xf32>
    %93 = arith.truncf %92 : vector<8x8xf32> to vector<8x8xbf16>
    %94 = vector.extract_strided_slice %61 {offsets = [0, 8], sizes = [8, 8], strides = [1, 1]} : vector<8x32xbf16> to vector<8x8xbf16>
    %cst_43 = arith.constant dense<0.000000e+00> : vector<8x8xf32>
    %95 = tpu.matmul %93, %94, %cst_43 {dimension_numbers = #tpu.dot_dimension_numbers<[1], [0], [0], [1], [0, 0, 1, 1], [], []>} : vector<8x8xbf16>, vector<8x8xbf16>, vector<8x8xf32> -> vector<8x8xf32>
    %96 = vector.extract_strided_slice %59 {offsets = [0, 16], sizes = [8, 8], strides = [1, 1]} : vector<8x32xbf16> to vector<8x8xbf16>
    %97 = vector.extract_strided_slice %60 {offsets = [0, 16], sizes = [8, 8], strides = [1, 1]} : vector<8x32xbf16> to vector<8x8xbf16>
    %cst_44 = arith.constant dense<0.000000e+00> : vector<8x8xf32>
    %98 = tpu.matmul %96, %97, %cst_44 {dimension_numbers = #tpu.dot_dimension_numbers<[1], [1], [0], [0], [0, 0, 1, 0], [], []>} : vector<8x8xbf16>, vector<8x8xbf16>, vector<8x8xf32> -> vector<8x8xf32>
    %99 = arith.addf %98, %12 : vector<8x8xf32>
    %cst_45 = arith.constant dense<0xFF800000> : vector<8xf32>
    %100 = vector.multi_reduction <maximumf>, %99, %cst_45 [1] : vector<8x8xf32> to vector<8xf32>
    %101 = vector.shape_cast %100 : vector<8xf32> to vector<8x1xf32>
    %102 = vector.broadcast %101 : vector<8x1xf32> to vector<8x8xf32>
    %103 = arith.subf %99, %102 : vector<8x8xf32>
    %104 = math.exp %103 : vector<8x8xf32>
    %cst_46 = arith.constant dense<0.000000e+00> : vector<8xf32>
    %105 = vector.multi_reduction <add>, %104, %cst_46 [1] : vector<8x8xf32> to vector<8xf32>
    %106 = vector.shape_cast %105 : vector<8xf32> to vector<8x1xf32>
    %107 = tpu.reciprocal %106 {approx = true} : vector<8x1xf32> -> vector<8x1xf32>
    %108 = vector.broadcast %107 : vector<8x1xf32> to vector<8x8xf32>
    %109 = arith.mulf %104, %108 : vector<8x8xf32>
    %110 = arith.truncf %109 : vector<8x8xf32> to vector<8x8xbf16>
    %111 = vector.extract_strided_slice %61 {offsets = [0, 16], sizes = [8, 8], strides = [1, 1]} : vector<8x32xbf16> to vector<8x8xbf16>
    %cst_47 = arith.constant dense<0.000000e+00> : vector<8x8xf32>
    %112 = tpu.matmul %110, %111, %cst_47 {dimension_numbers = #tpu.dot_dimension_numbers<[1], [0], [0], [1], [0, 0, 1, 1], [], []>} : vector<8x8xbf16>, vector<8x8xbf16>, vector<8x8xf32> -> vector<8x8xf32>
    %113 = vector.extract_strided_slice %59 {offsets = [0, 24], sizes = [8, 8], strides = [1, 1]} : vector<8x32xbf16> to vector<8x8xbf16>
    %114 = vector.extract_strided_slice %60 {offsets = [0, 24], sizes = [8, 8], strides = [1, 1]} : vector<8x32xbf16> to vector<8x8xbf16>
    %cst_48 = arith.constant dense<0.000000e+00> : vector<8x8xf32>
    %115 = tpu.matmul %113, %114, %cst_48 {dimension_numbers = #tpu.dot_dimension_numbers<[1], [1], [0], [0], [0, 0, 1, 0], [], []>} : vector<8x8xbf16>, vector<8x8xbf16>, vector<8x8xf32> -> vector<8x8xf32>
    %116 = arith.addf %115, %12 : vector<8x8xf32>
    %cst_49 = arith.constant dense<0xFF800000> : vector<8xf32>
    %117 = vector.multi_reduction <maximumf>, %116, %cst_49 [1] : vector<8x8xf32> to vector<8xf32>
    %118 = vector.shape_cast %117 : vector<8xf32> to vector<8x1xf32>
    %119 = vector.broadcast %118 : vector<8x1xf32> to vector<8x8xf32>
    %120 = arith.subf %116, %119 : vector<8x8xf32>
    %121 = math.exp %120 : vector<8x8xf32>
    %cst_50 = arith.constant dense<0.000000e+00> : vector<8xf32>
    %122 = vector.multi_reduction <add>, %121, %cst_50 [1] : vector<8x8xf32> to vector<8xf32>
    %123 = vector.shape_cast %122 : vector<8xf32> to vector<8x1xf32>
    %124 = tpu.reciprocal %123 {approx = true} : vector<8x1xf32> -> vector<8x1xf32>
    %125 = vector.broadcast %124 : vector<8x1xf32> to vector<8x8xf32>
    %126 = arith.mulf %121, %125 : vector<8x8xf32>
    %127 = arith.truncf %126 : vector<8x8xf32> to vector<8x8xbf16>
    %128 = vector.extract_strided_slice %61 {offsets = [0, 24], sizes = [8, 8], strides = [1, 1]} : vector<8x32xbf16> to vector<8x8xbf16>
    %cst_51 = arith.constant dense<0.000000e+00> : vector<8x8xf32>
    %129 = tpu.matmul %127, %128, %cst_51 {dimension_numbers = #tpu.dot_dimension_numbers<[1], [0], [0], [1], [0, 0, 1, 1], [], []>} : vector<8x8xbf16>, vector<8x8xbf16>, vector<8x8xf32> -> vector<8x8xf32>
    %130 = tpu.concatenate %78, %95, %112, %129 in 1 : vector<8x8xf32>, vector<8x8xf32>, vector<8x8xf32>, vector<8x8xf32> -> vector<8x32xf32>
    %131 = arith.truncf %130 : vector<8x32xf32> to vector<8x32xbf16>
    %cst_52 = arith.constant dense<0.000000e+00> : vector<8x32xf32>
    %132 = tpu.matmul %131, %56, %cst_52 {dimension_numbers = #tpu.dot_dimension_numbers<[1], [0], [0], [1], [0, 0, 1, 1], [], []>} : vector<8x32xbf16>, vector<32x32xbf16>, vector<8x32xf32> -> vector<8x32xf32>
    %133 = vector.broadcast %58 : vector<1x32xf32> to vector<8x32xf32>
    %134 = arith.addf %132, %133 : vector<8x32xf32>
    %135 = arith.addf %15, %134 : vector<8x32xf32>
    %c0_53 = arith.constant 0 : index
    %c0_54 = arith.constant 0 : index
    %c0_55 = arith.constant 0 : index
    %136 = vector.load %arg22[%c0_53, %c0_54, %c0_55] : memref<1x1x32xf32, #tpu.memory_space<vmem>>, vector<1x1x32xf32>
    %137 = vector.shape_cast %136 : vector<1x1x32xf32> to vector<1x32xf32>
    %c0_56 = arith.constant 0 : index
    %c0_57 = arith.constant 0 : index
    %c0_58 = arith.constant 0 : index
    %138 = vector.load %arg23[%c0_56, %c0_57, %c0_58] : memref<1x1x32xf32, #tpu.memory_space<vmem>>, vector<1x1x32xf32>
    %139 = vector.shape_cast %138 : vector<1x1x32xf32> to vector<1x32xf32>
    %cst_59 = arith.constant dense<0.000000e+00> : vector<8xf32>
    %140 = vector.multi_reduction <add>, %135, %cst_59 [1] : vector<8x32xf32> to vector<8xf32>
    %141 = vector.shape_cast %140 : vector<8xf32> to vector<8x1xf32>
    %cst_60 = arith.constant 3.200000e+01 : f32
    %142 = vector.broadcast %cst_60 : f32 to vector<8x1xf32>
    %143 = arith.divf %141, %142 : vector<8x1xf32>
    %144 = arith.mulf %135, %135 : vector<8x32xf32>
    %cst_61 = arith.constant dense<0.000000e+00> : vector<8xf32>
    %145 = vector.multi_reduction <add>, %144, %cst_61 [1] : vector<8x32xf32> to vector<8xf32>
    %146 = vector.shape_cast %145 : vector<8xf32> to vector<8x1xf32>
    %cst_62 = arith.constant 3.200000e+01 : f32
    %147 = vector.broadcast %cst_62 : f32 to vector<8x1xf32>
    %148 = arith.divf %146, %147 : vector<8x1xf32>
    %149 = arith.mulf %143, %143 : vector<8x1xf32>
    %150 = arith.subf %148, %149 : vector<8x1xf32>
    %151 = vector.broadcast %143 : vector<8x1xf32> to vector<8x32xf32>
    %152 = arith.subf %135, %151 : vector<8x32xf32>
    %cst_63 = arith.constant 9.99999974E-6 : f32
    %153 = vector.broadcast %cst_63 : f32 to vector<8x1xf32>
    %154 = arith.addf %150, %153 : vector<8x1xf32>
    %155 = math.rsqrt %154 : vector<8x1xf32>
    %156 = vector.broadcast %155 : vector<8x1xf32> to vector<8x32xf32>
    %157 = arith.mulf %152, %156 : vector<8x32xf32>
    %158 = vector.broadcast %137 : vector<1x32xf32> to vector<8x32xf32>
    %159 = arith.mulf %157, %158 : vector<8x32xf32>
    %160 = vector.broadcast %139 : vector<1x32xf32> to vector<8x32xf32>
    %161 = arith.addf %159, %160 : vector<8x32xf32>
    %162 = arith.truncf %161 : vector<8x32xf32> to vector<8x32xbf16>
    %c0_64 = arith.constant 0 : index
    %c0_65 = arith.constant 0 : index
    %c0_66 = arith.constant 0 : index
    %163 = vector.load %arg10[%c0_64, %c0_65, %c0_66] : memref<1x32x32xbf16, #tpu.memory_space<vmem>>, vector<1x32x32xbf16>
    %164 = vector.shape_cast %163 : vector<1x32x32xbf16> to vector<32x32xbf16>
    %cst_67 = arith.constant dense<0.000000e+00> : vector<8x32xf32>
    %165 = tpu.matmul %162, %164, %cst_67 {dimension_numbers = #tpu.dot_dimension_numbers<[1], [0], [0], [1], [0, 0, 1, 1], [], []>} : vector<8x32xbf16>, vector<32x32xbf16>, vector<8x32xf32> -> vector<8x32xf32>
    %c0_68 = arith.constant 0 : index
    %c0_69 = arith.constant 0 : index
    %c0_70 = arith.constant 0 : index
    %166 = vector.load %arg11[%c0_68, %c0_69, %c0_70] : memref<1x1x32xf32, #tpu.memory_space<vmem>>, vector<1x1x32xf32>
    %167 = vector.shape_cast %166 : vector<1x1x32xf32> to vector<1x32xf32>
    %168 = vector.broadcast %167 : vector<1x32xf32> to vector<8x32xf32>
    %169 = arith.addf %165, %168 : vector<8x32xf32>
    %170 = arith.truncf %17 : vector<8x32xf32> to vector<8x32xbf16>
    %c0_71 = arith.constant 0 : index
    %c0_72 = arith.constant 0 : index
    %c0_73 = arith.constant 0 : index
    %171 = vector.load %arg12[%c0_71, %c0_72, %c0_73] : memref<1x32x64xbf16, #tpu.memory_space<vmem>>, vector<1x32x64xbf16>
    %172 = vector.shape_cast %171 : vector<1x32x64xbf16> to vector<32x64xbf16>
    %cst_74 = arith.constant dense<0.000000e+00> : vector<8x64xf32>
    %173 = tpu.matmul %170, %172, %cst_74 {dimension_numbers = #tpu.dot_dimension_numbers<[1], [0], [0], [1], [0, 0, 1, 1], [], []>} : vector<8x32xbf16>, vector<32x64xbf16>, vector<8x64xf32> -> vector<8x64xf32>
    %c0_75 = arith.constant 0 : index
    %c0_76 = arith.constant 0 : index
    %c0_77 = arith.constant 0 : index
    %174 = vector.load %arg13[%c0_75, %c0_76, %c0_77] : memref<1x1x64xf32, #tpu.memory_space<vmem>>, vector<1x1x64xf32>
    %175 = vector.shape_cast %174 : vector<1x1x64xf32> to vector<1x64xf32>
    %176 = vector.broadcast %175 : vector<1x64xf32> to vector<8x64xf32>
    %177 = arith.addf %173, %176 : vector<8x64xf32>
    %178 = vector.extract_strided_slice %177 {offsets = [0, 0], sizes = [8, 32], strides = [1, 1]} : vector<8x64xf32> to vector<8x32xf32>
    %179 = vector.extract_strided_slice %177 {offsets = [0, 32], sizes = [8, 32], strides = [1, 1]} : vector<8x64xf32> to vector<8x32xf32>
    %c0_78 = arith.constant 0 : index
    %c0_79 = arith.constant 0 : index
    %c0_80 = arith.constant 0 : index
    %180 = vector.load %arg14[%c0_78, %c0_79, %c0_80] : memref<1x32x32xbf16, #tpu.memory_space<vmem>>, vector<1x32x32xbf16>
    %181 = vector.shape_cast %180 : vector<1x32x32xbf16> to vector<32x32xbf16>
    %c0_81 = arith.constant 0 : index
    %c0_82 = arith.constant 0 : index
    %c0_83 = arith.constant 0 : index
    %182 = vector.load %arg15[%c0_81, %c0_82, %c0_83] : memref<1x1x32xf32, #tpu.memory_space<vmem>>, vector<1x1x32xf32>
    %183 = vector.shape_cast %182 : vector<1x1x32xf32> to vector<1x32xf32>
    %184 = arith.truncf %169 : vector<8x32xf32> to vector<8x32xbf16>
    %185 = arith.truncf %178 : vector<8x32xf32> to vector<8x32xbf16>
    %186 = arith.truncf %179 : vector<8x32xf32> to vector<8x32xbf16>
    %187 = vector.extract_strided_slice %184 {offsets = [0, 0], sizes = [8, 8], strides = [1, 1]} : vector<8x32xbf16> to vector<8x8xbf16>
    %188 = vector.extract_strided_slice %185 {offsets = [0, 0], sizes = [8, 8], strides = [1, 1]} : vector<8x32xbf16> to vector<8x8xbf16>
    %cst_84 = arith.constant dense<0.000000e+00> : vector<8x8xf32>
    %189 = tpu.matmul %187, %188, %cst_84 {dimension_numbers = #tpu.dot_dimension_numbers<[1], [1], [0], [0], [0, 0, 1, 0], [], []>} : vector<8x8xbf16>, vector<8x8xbf16>, vector<8x8xf32> -> vector<8x8xf32>
    %190 = vector.broadcast %14 : vector<1x8xf32> to vector<8x8xf32>
    %191 = arith.addf %189, %190 : vector<8x8xf32>
    %cst_85 = arith.constant dense<0xFF800000> : vector<8xf32>
    %192 = vector.multi_reduction <maximumf>, %191, %cst_85 [1] : vector<8x8xf32> to vector<8xf32>
    %193 = vector.shape_cast %192 : vector<8xf32> to vector<8x1xf32>
    %194 = vector.broadcast %193 : vector<8x1xf32> to vector<8x8xf32>
    %195 = arith.subf %191, %194 : vector<8x8xf32>
    %196 = math.exp %195 : vector<8x8xf32>
    %cst_86 = arith.constant dense<0.000000e+00> : vector<8xf32>
    %197 = vector.multi_reduction <add>, %196, %cst_86 [1] : vector<8x8xf32> to vector<8xf32>
    %198 = vector.shape_cast %197 : vector<8xf32> to vector<8x1xf32>
    %199 = tpu.reciprocal %198 {approx = true} : vector<8x1xf32> -> vector<8x1xf32>
    %200 = vector.broadcast %199 : vector<8x1xf32> to vector<8x8xf32>
    %201 = arith.mulf %196, %200 : vector<8x8xf32>
    %202 = arith.truncf %201 : vector<8x8xf32> to vector<8x8xbf16>
    %203 = vector.extract_strided_slice %186 {offsets = [0, 0], sizes = [8, 8], strides = [1, 1]} : vector<8x32xbf16> to vector<8x8xbf16>
    %cst_87 = arith.constant dense<0.000000e+00> : vector<8x8xf32>
    %204 = tpu.matmul %202, %203, %cst_87 {dimension_numbers = #tpu.dot_dimension_numbers<[1], [0], [0], [1], [0, 0, 1, 1], [], []>} : vector<8x8xbf16>, vector<8x8xbf16>, vector<8x8xf32> -> vector<8x8xf32>
    %205 = vector.extract_strided_slice %184 {offsets = [0, 8], sizes = [8, 8], strides = [1, 1]} : vector<8x32xbf16> to vector<8x8xbf16>
    %206 = vector.extract_strided_slice %185 {offsets = [0, 8], sizes = [8, 8], strides = [1, 1]} : vector<8x32xbf16> to vector<8x8xbf16>
    %cst_88 = arith.constant dense<0.000000e+00> : vector<8x8xf32>
    %207 = tpu.matmul %205, %206, %cst_88 {dimension_numbers = #tpu.dot_dimension_numbers<[1], [1], [0], [0], [0, 0, 1, 0], [], []>} : vector<8x8xbf16>, vector<8x8xbf16>, vector<8x8xf32> -> vector<8x8xf32>
    %208 = vector.broadcast %14 : vector<1x8xf32> to vector<8x8xf32>
    %209 = arith.addf %207, %208 : vector<8x8xf32>
    %cst_89 = arith.constant dense<0xFF800000> : vector<8xf32>
    %210 = vector.multi_reduction <maximumf>, %209, %cst_89 [1] : vector<8x8xf32> to vector<8xf32>
    %211 = vector.shape_cast %210 : vector<8xf32> to vector<8x1xf32>
    %212 = vector.broadcast %211 : vector<8x1xf32> to vector<8x8xf32>
    %213 = arith.subf %209, %212 : vector<8x8xf32>
    %214 = math.exp %213 : vector<8x8xf32>
    %cst_90 = arith.constant dense<0.000000e+00> : vector<8xf32>
    %215 = vector.multi_reduction <add>, %214, %cst_90 [1] : vector<8x8xf32> to vector<8xf32>
    %216 = vector.shape_cast %215 : vector<8xf32> to vector<8x1xf32>
    %217 = tpu.reciprocal %216 {approx = true} : vector<8x1xf32> -> vector<8x1xf32>
    %218 = vector.broadcast %217 : vector<8x1xf32> to vector<8x8xf32>
    %219 = arith.mulf %214, %218 : vector<8x8xf32>
    %220 = arith.truncf %219 : vector<8x8xf32> to vector<8x8xbf16>
    %221 = vector.extract_strided_slice %186 {offsets = [0, 8], sizes = [8, 8], strides = [1, 1]} : vector<8x32xbf16> to vector<8x8xbf16>
    %cst_91 = arith.constant dense<0.000000e+00> : vector<8x8xf32>
    %222 = tpu.matmul %220, %221, %cst_91 {dimension_numbers = #tpu.dot_dimension_numbers<[1], [0], [0], [1], [0, 0, 1, 1], [], []>} : vector<8x8xbf16>, vector<8x8xbf16>, vector<8x8xf32> -> vector<8x8xf32>
    %223 = vector.extract_strided_slice %184 {offsets = [0, 16], sizes = [8, 8], strides = [1, 1]} : vector<8x32xbf16> to vector<8x8xbf16>
    %224 = vector.extract_strided_slice %185 {offsets = [0, 16], sizes = [8, 8], strides = [1, 1]} : vector<8x32xbf16> to vector<8x8xbf16>
    %cst_92 = arith.constant dense<0.000000e+00> : vector<8x8xf32>
    %225 = tpu.matmul %223, %224, %cst_92 {dimension_numbers = #tpu.dot_dimension_numbers<[1], [1], [0], [0], [0, 0, 1, 0], [], []>} : vector<8x8xbf16>, vector<8x8xbf16>, vector<8x8xf32> -> vector<8x8xf32>
    %226 = vector.broadcast %14 : vector<1x8xf32> to vector<8x8xf32>
    %227 = arith.addf %225, %226 : vector<8x8xf32>
    %cst_93 = arith.constant dense<0xFF800000> : vector<8xf32>
    %228 = vector.multi_reduction <maximumf>, %227, %cst_93 [1] : vector<8x8xf32> to vector<8xf32>
    %229 = vector.shape_cast %228 : vector<8xf32> to vector<8x1xf32>
    %230 = vector.broadcast %229 : vector<8x1xf32> to vector<8x8xf32>
    %231 = arith.subf %227, %230 : vector<8x8xf32>
    %232 = math.exp %231 : vector<8x8xf32>
    %cst_94 = arith.constant dense<0.000000e+00> : vector<8xf32>
    %233 = vector.multi_reduction <add>, %232, %cst_94 [1] : vector<8x8xf32> to vector<8xf32>
    %234 = vector.shape_cast %233 : vector<8xf32> to vector<8x1xf32>
    %235 = tpu.reciprocal %234 {approx = true} : vector<8x1xf32> -> vector<8x1xf32>
    %236 = vector.broadcast %235 : vector<8x1xf32> to vector<8x8xf32>
    %237 = arith.mulf %232, %236 : vector<8x8xf32>
    %238 = arith.truncf %237 : vector<8x8xf32> to vector<8x8xbf16>
    %239 = vector.extract_strided_slice %186 {offsets = [0, 16], sizes = [8, 8], strides = [1, 1]} : vector<8x32xbf16> to vector<8x8xbf16>
    %cst_95 = arith.constant dense<0.000000e+00> : vector<8x8xf32>
    %240 = tpu.matmul %238, %239, %cst_95 {dimension_numbers = #tpu.dot_dimension_numbers<[1], [0], [0], [1], [0, 0, 1, 1], [], []>} : vector<8x8xbf16>, vector<8x8xbf16>, vector<8x8xf32> -> vector<8x8xf32>
    %241 = vector.extract_strided_slice %184 {offsets = [0, 24], sizes = [8, 8], strides = [1, 1]} : vector<8x32xbf16> to vector<8x8xbf16>
    %242 = vector.extract_strided_slice %185 {offsets = [0, 24], sizes = [8, 8], strides = [1, 1]} : vector<8x32xbf16> to vector<8x8xbf16>
    %cst_96 = arith.constant dense<0.000000e+00> : vector<8x8xf32>
    %243 = tpu.matmul %241, %242, %cst_96 {dimension_numbers = #tpu.dot_dimension_numbers<[1], [1], [0], [0], [0, 0, 1, 0], [], []>} : vector<8x8xbf16>, vector<8x8xbf16>, vector<8x8xf32> -> vector<8x8xf32>
    %244 = vector.broadcast %14 : vector<1x8xf32> to vector<8x8xf32>
    %245 = arith.addf %243, %244 : vector<8x8xf32>
    %cst_97 = arith.constant dense<0xFF800000> : vector<8xf32>
    %246 = vector.multi_reduction <maximumf>, %245, %cst_97 [1] : vector<8x8xf32> to vector<8xf32>
    %247 = vector.shape_cast %246 : vector<8xf32> to vector<8x1xf32>
    %248 = vector.broadcast %247 : vector<8x1xf32> to vector<8x8xf32>
    %249 = arith.subf %245, %248 : vector<8x8xf32>
    %250 = math.exp %249 : vector<8x8xf32>
    %cst_98 = arith.constant dense<0.000000e+00> : vector<8xf32>
    %251 = vector.multi_reduction <add>, %250, %cst_98 [1] : vector<8x8xf32> to vector<8xf32>
    %252 = vector.shape_cast %251 : vector<8xf32> to vector<8x1xf32>
    %253 = tpu.reciprocal %252 {approx = true} : vector<8x1xf32> -> vector<8x1xf32>
    %254 = vector.broadcast %253 : vector<8x1xf32> to vector<8x8xf32>
    %255 = arith.mulf %250, %254 : vector<8x8xf32>
    %256 = arith.truncf %255 : vector<8x8xf32> to vector<8x8xbf16>
    %257 = vector.extract_strided_slice %186 {offsets = [0, 24], sizes = [8, 8], strides = [1, 1]} : vector<8x32xbf16> to vector<8x8xbf16>
    %cst_99 = arith.constant dense<0.000000e+00> : vector<8x8xf32>
    %258 = tpu.matmul %256, %257, %cst_99 {dimension_numbers = #tpu.dot_dimension_numbers<[1], [0], [0], [1], [0, 0, 1, 1], [], []>} : vector<8x8xbf16>, vector<8x8xbf16>, vector<8x8xf32> -> vector<8x8xf32>
    %259 = tpu.concatenate %204, %222, %240, %258 in 1 : vector<8x8xf32>, vector<8x8xf32>, vector<8x8xf32>, vector<8x8xf32> -> vector<8x32xf32>
    %260 = arith.truncf %259 : vector<8x32xf32> to vector<8x32xbf16>
    %cst_100 = arith.constant dense<0.000000e+00> : vector<8x32xf32>
    %261 = tpu.matmul %260, %181, %cst_100 {dimension_numbers = #tpu.dot_dimension_numbers<[1], [0], [0], [1], [0, 0, 1, 1], [], []>} : vector<8x32xbf16>, vector<32x32xbf16>, vector<8x32xf32> -> vector<8x32xf32>
    %262 = vector.broadcast %183 : vector<1x32xf32> to vector<8x32xf32>
    %263 = arith.addf %261, %262 : vector<8x32xf32>
    %264 = arith.addf %135, %263 : vector<8x32xf32>
    %c0_101 = arith.constant 0 : index
    %c0_102 = arith.constant 0 : index
    %c0_103 = arith.constant 0 : index
    %265 = vector.load %arg24[%c0_101, %c0_102, %c0_103] : memref<1x1x32xf32, #tpu.memory_space<vmem>>, vector<1x1x32xf32>
    %266 = vector.shape_cast %265 : vector<1x1x32xf32> to vector<1x32xf32>
    %c0_104 = arith.constant 0 : index
    %c0_105 = arith.constant 0 : index
    %c0_106 = arith.constant 0 : index
    %267 = vector.load %arg25[%c0_104, %c0_105, %c0_106] : memref<1x1x32xf32, #tpu.memory_space<vmem>>, vector<1x1x32xf32>
    %268 = vector.shape_cast %267 : vector<1x1x32xf32> to vector<1x32xf32>
    %cst_107 = arith.constant dense<0.000000e+00> : vector<8xf32>
    %269 = vector.multi_reduction <add>, %264, %cst_107 [1] : vector<8x32xf32> to vector<8xf32>
    %270 = vector.shape_cast %269 : vector<8xf32> to vector<8x1xf32>
    %cst_108 = arith.constant 3.200000e+01 : f32
    %271 = vector.broadcast %cst_108 : f32 to vector<8x1xf32>
    %272 = arith.divf %270, %271 : vector<8x1xf32>
    %273 = arith.mulf %264, %264 : vector<8x32xf32>
    %cst_109 = arith.constant dense<0.000000e+00> : vector<8xf32>
    %274 = vector.multi_reduction <add>, %273, %cst_109 [1] : vector<8x32xf32> to vector<8xf32>
    %275 = vector.shape_cast %274 : vector<8xf32> to vector<8x1xf32>
    %cst_110 = arith.constant 3.200000e+01 : f32
    %276 = vector.broadcast %cst_110 : f32 to vector<8x1xf32>
    %277 = arith.divf %275, %276 : vector<8x1xf32>
    %278 = arith.mulf %272, %272 : vector<8x1xf32>
    %279 = arith.subf %277, %278 : vector<8x1xf32>
    %280 = vector.broadcast %272 : vector<8x1xf32> to vector<8x32xf32>
    %281 = arith.subf %264, %280 : vector<8x32xf32>
    %cst_111 = arith.constant 9.99999974E-6 : f32
    %282 = vector.broadcast %cst_111 : f32 to vector<8x1xf32>
    %283 = arith.addf %279, %282 : vector<8x1xf32>
    %284 = math.rsqrt %283 : vector<8x1xf32>
    %285 = vector.broadcast %284 : vector<8x1xf32> to vector<8x32xf32>
    %286 = arith.mulf %281, %285 : vector<8x32xf32>
    %287 = vector.broadcast %266 : vector<1x32xf32> to vector<8x32xf32>
    %288 = arith.mulf %286, %287 : vector<8x32xf32>
    %289 = vector.broadcast %268 : vector<1x32xf32> to vector<8x32xf32>
    %290 = arith.addf %288, %289 : vector<8x32xf32>
    %291 = arith.truncf %290 : vector<8x32xf32> to vector<8x32xbf16>
    %c0_112 = arith.constant 0 : index
    %c0_113 = arith.constant 0 : index
    %c0_114 = arith.constant 0 : index
    %292 = vector.load %arg16[%c0_112, %c0_113, %c0_114] : memref<1x32x64xbf16, #tpu.memory_space<vmem>>, vector<1x32x64xbf16>
    %293 = vector.shape_cast %292 : vector<1x32x64xbf16> to vector<32x64xbf16>
    %cst_115 = arith.constant dense<0.000000e+00> : vector<8x64xf32>
    %294 = tpu.matmul %291, %293, %cst_115 {dimension_numbers = #tpu.dot_dimension_numbers<[1], [0], [0], [1], [0, 0, 1, 1], [], []>} : vector<8x32xbf16>, vector<32x64xbf16>, vector<8x64xf32> -> vector<8x64xf32>
    %c0_116 = arith.constant 0 : index
    %c0_117 = arith.constant 0 : index
    %c0_118 = arith.constant 0 : index
    %295 = vector.load %arg17[%c0_116, %c0_117, %c0_118] : memref<1x1x64xf32, #tpu.memory_space<vmem>>, vector<1x1x64xf32>
    %296 = vector.shape_cast %295 : vector<1x1x64xf32> to vector<1x64xf32>
    %297 = vector.broadcast %296 : vector<1x64xf32> to vector<8x64xf32>
    %298 = arith.addf %294, %297 : vector<8x64xf32>
    %cst_119 = arith.constant 0.000000e+00 : f32
    %299 = vector.broadcast %cst_119 : f32 to vector<8x64xf32>
    %300 = arith.maximumf %298, %299 : vector<8x64xf32>
    %301 = arith.truncf %300 : vector<8x64xf32> to vector<8x64xbf16>
    %c0_120 = arith.constant 0 : index
    %c0_121 = arith.constant 0 : index
    %c0_122 = arith.constant 0 : index
    %302 = vector.load %arg18[%c0_120, %c0_121, %c0_122] : memref<1x64x32xbf16, #tpu.memory_space<vmem>>, vector<1x64x32xbf16>
    %303 = vector.shape_cast %302 : vector<1x64x32xbf16> to vector<64x32xbf16>
    %cst_123 = arith.constant dense<0.000000e+00> : vector<8x32xf32>
    %304 = tpu.matmul %301, %303, %cst_123 {dimension_numbers = #tpu.dot_dimension_numbers<[1], [0], [0], [1], [0, 0, 1, 1], [], []>} : vector<8x64xbf16>, vector<64x32xbf16>, vector<8x32xf32> -> vector<8x32xf32>
    %305 = arith.addf %264, %304 : vector<8x32xf32>
    %c0_124 = arith.constant 0 : index
    %c0_125 = arith.constant 0 : index
    %c0_126 = arith.constant 0 : index
    %306 = vector.load %arg19[%c0_124, %c0_125, %c0_126] : memref<1x1x32xf32, #tpu.memory_space<vmem>>, vector<1x1x32xf32>
    %307 = vector.shape_cast %306 : vector<1x1x32xf32> to vector<1x32xf32>
    %308 = vector.broadcast %307 : vector<1x32xf32> to vector<8x32xf32>
    %309 = arith.addf %305, %308 : vector<8x32xf32>
    %c0_127 = arith.constant 0 : index
    %c0_128 = arith.constant 0 : index
    %310 = vector.load %arg31[%c0_127, %c0_128] : memref<8x32xf32, #tpu.memory_space<vmem>>, vector<8x32xf32>
    tpu.vector_store %arg31[%c0_127, %c0_128], %309 {strides = array<i32>} : memref<8x32xf32, #tpu.memory_space<vmem>>, vector<8x32xf32>,
    %c1_i32 = arith.constant 1 : i32
    %311 = arith.cmpi eq, %arg1, %c1_i32 : i32
    %312 = arith.extui %311 : i1 to i32
    %c0_i32_129 = arith.constant 0 : i32
    %313 = arith.cmpi ne, %312, %c0_i32_129 : i32
    scf.if %313 {
      %c0_130 = arith.constant 0 : index
      %c0_131 = arith.constant 0 : index
      %314 = vector.load %arg26[%c0_130, %c0_131] : memref<1x32xf32, #tpu.memory_space<vmem>>, vector<1x32xf32>
      %c0_132 = arith.constant 0 : index
      %c0_133 = arith.constant 0 : index
      %315 = vector.load %arg27[%c0_132, %c0_133] : memref<1x32xf32, #tpu.memory_space<vmem>>, vector<1x32xf32>
      %cst_134 = arith.constant dense<0.000000e+00> : vector<8xf32>
      %316 = vector.multi_reduction <add>, %309, %cst_134 [1] : vector<8x32xf32> to vector<8xf32>
      %317 = vector.shape_cast %316 : vector<8xf32> to vector<8x1xf32>
      %cst_135 = arith.constant 3.200000e+01 : f32
      %318 = vector.broadcast %cst_135 : f32 to vector<8x1xf32>
      %319 = arith.divf %317, %318 : vector<8x1xf32>
      %320 = arith.mulf %309, %309 : vector<8x32xf32>
      %cst_136 = arith.constant dense<0.000000e+00> : vector<8xf32>
      %321 = vector.multi_reduction <add>, %320, %cst_136 [1] : vector<8x32xf32> to vector<8xf32>
      %322 = vector.shape_cast %321 : vector<8xf32> to vector<8x1xf32>
      %cst_137 = arith.constant 3.200000e+01 : f32
      %323 = vector.broadcast %cst_137 : f32 to vector<8x1xf32>
      %324 = arith.divf %322, %323 : vector<8x1xf32>
      %325 = arith.mulf %319, %319 : vector<8x1xf32>
      %326 = arith.subf %324, %325 : vector<8x1xf32>
      %327 = vector.broadcast %319 : vector<8x1xf32> to vector<8x32xf32>
      %328 = arith.subf %309, %327 : vector<8x32xf32>
      %cst_138 = arith.constant 9.99999974E-6 : f32
      %329 = vector.broadcast %cst_138 : f32 to vector<8x1xf32>
      %330 = arith.addf %326, %329 : vector<8x1xf32>
      %331 = math.rsqrt %330 : vector<8x1xf32>
      %332 = vector.broadcast %331 : vector<8x1xf32> to vector<8x32xf32>
      %333 = arith.mulf %328, %332 : vector<8x32xf32>
      %334 = vector.broadcast %314 : vector<1x32xf32> to vector<8x32xf32>
      %335 = arith.mulf %333, %334 : vector<8x32xf32>
      %336 = vector.broadcast %315 : vector<1x32xf32> to vector<8x32xf32>
      %337 = arith.addf %335, %336 : vector<8x32xf32>
      %338 = arith.truncf %337 : vector<8x32xf32> to vector<8x32xbf16>
      %c0_139 = arith.constant 0 : index
      %c0_140 = arith.constant 0 : index
      %339 = vector.load %arg28[%c0_139, %c0_140] : memref<32x128xbf16, #tpu.memory_space<vmem>>, vector<32x128xbf16>
      %cst_141 = arith.constant dense<0.000000e+00> : vector<8x128xf32>
      %340 = tpu.matmul %338, %339, %cst_141 {dimension_numbers = #tpu.dot_dimension_numbers<[1], [0], [0], [1], [0, 0, 1, 1], [], []>} : vector<8x32xbf16>, vector<32x128xbf16>, vector<8x128xf32> -> vector<8x128xf32>
      %c0_142 = arith.constant 0 : index
      %c0_143 = arith.constant 0 : index
      %341 = vector.load %arg29[%c0_142, %c0_143] : memref<1x128xf32, #tpu.memory_space<vmem>>, vector<1x128xf32>
      %342 = vector.broadcast %341 : vector<1x128xf32> to vector<8x128xf32>
      %343 = arith.addf %340, %342 : vector<8x128xf32>
      %c0_144 = arith.constant 0 : index
      %c0_145 = arith.constant 0 : index
      %c0_146 = arith.constant 0 : index
      %344 = vector.load %arg30[%c0_144, %c0_145, %c0_146] : memref<1x8x128xf32, #tpu.memory_space<vmem>>, vector<1x8x128xf32>
      %345 = vector.shape_cast %344 : vector<1x8x128xf32> to vector<8x128xf32>
      %346 = vector.shape_cast %343 : vector<8x128xf32> to vector<1x8x128xf32>
      tpu.vector_store %arg30[%c0_144, %c0_145, %c0_146], %346 {strides = array<i32>} : memref<1x8x128xf32, #tpu.memory_space<vmem>>, vector<1x8x128xf32>,
    } else {
    }
    return
  }
  func.func @transform_0(%arg0: i32, %arg1: i32) -> (i32, i32, i32) {
    %c0_i32 = arith.constant 0 : i32
    %c0_i32_0 = arith.constant 0 : i32
    %c0_i32_1 = arith.constant 0 : i32
    return %arg0, %c0_i32, %c0_i32_0 : i32, i32, i32
  }
  func.func @transform_1(%arg0: i32, %arg1: i32) -> (i32, i32, i32) {
    %c0_i32 = arith.constant 0 : i32
    %c0_i32_0 = arith.constant 0 : i32
    %c0_i32_1 = arith.constant 0 : i32
    return %arg0, %c0_i32, %c0_i32_0 : i32, i32, i32
  }
  func.func @transform_2(%arg0: i32, %arg1: i32) -> (i32, i32, i32) {
    %c0_i32 = arith.constant 0 : i32
    %c0_i32_0 = arith.constant 0 : i32
    %c0_i32_1 = arith.constant 0 : i32
    return %arg0, %c0_i32, %c0_i32_0 : i32, i32, i32
  }
  func.func @transform_3(%arg0: i32, %arg1: i32) -> (i32, i32, i32) {
    %c0_i32 = arith.constant 0 : i32
    %c0_i32_0 = arith.constant 0 : i32
    %c0_i32_1 = arith.constant 0 : i32
    return %arg0, %c0_i32, %c0_i32_0 : i32, i32, i32
  }
  func.func @transform_4(%arg0: i32, %arg1: i32) -> (i32, i32, i32) {
    %c0_i32 = arith.constant 0 : i32
    %c0_i32_0 = arith.constant 0 : i32
    %c0_i32_1 = arith.constant 0 : i32
    return %arg1, %c0_i32, %c0_i32_0 : i32, i32, i32
  }
  func.func @transform_5(%arg0: i32, %arg1: i32) -> (i32, i32, i32) {
    %c0_i32 = arith.constant 0 : i32
    %c0_i32_0 = arith.constant 0 : i32
    %c0_i32_1 = arith.constant 0 : i32
    return %arg1, %c0_i32, %c0_i32_0 : i32, i32, i32
  }
  func.func @transform_6(%arg0: i32, %arg1: i32) -> (i32, i32, i32) {
    %c0_i32 = arith.constant 0 : i32
    %c0_i32_0 = arith.constant 0 : i32
    %c0_i32_1 = arith.constant 0 : i32
    return %arg1, %c0_i32, %c0_i32_0 : i32, i32, i32
  }
  func.func @transform_7(%arg0: i32, %arg1: i32) -> (i32, i32, i32) {
    %c0_i32 = arith.constant 0 : i32
    %c0_i32_0 = arith.constant 0 : i32
    %c0_i32_1 = arith.constant 0 : i32
    return %arg1, %c0_i32, %c0_i32_0 : i32, i32, i32
  }
  func.func @transform_8(%arg0: i32, %arg1: i32) -> (i32, i32, i32) {
    %c0_i32 = arith.constant 0 : i32
    %c0_i32_0 = arith.constant 0 : i32
    %c0_i32_1 = arith.constant 0 : i32
    return %arg1, %c0_i32, %c0_i32_0 : i32, i32, i32
  }
  func.func @transform_9(%arg0: i32, %arg1: i32) -> (i32, i32, i32) {
    %c0_i32 = arith.constant 0 : i32
    %c0_i32_0 = arith.constant 0 : i32
    %c0_i32_1 = arith.constant 0 : i32
    return %arg1, %c0_i32, %c0_i32_0 : i32, i32, i32
  }
  func.func @transform_10(%arg0: i32, %arg1: i32) -> (i32, i32, i32) {
    %c0_i32 = arith.constant 0 : i32
    %c0_i32_0 = arith.constant 0 : i32
    %c0_i32_1 = arith.constant 0 : i32
    return %arg1, %c0_i32, %c0_i32_0 : i32, i32, i32
  }
  func.func @transform_11(%arg0: i32, %arg1: i32) -> (i32, i32, i32) {
    %c0_i32 = arith.constant 0 : i32
    %c0_i32_0 = arith.constant 0 : i32
    %c0_i32_1 = arith.constant 0 : i32
    return %arg1, %c0_i32, %c0_i32_0 : i32, i32, i32
  }
  func.func @transform_12(%arg0: i32, %arg1: i32) -> (i32, i32, i32) {
    %c0_i32 = arith.constant 0 : i32
    %c0_i32_0 = arith.constant 0 : i32
    %c0_i32_1 = arith.constant 0 : i32
    return %arg1, %c0_i32, %c0_i32_0 : i32, i32, i32
  }
  func.func @transform_13(%arg0: i32, %arg1: i32) -> (i32, i32, i32) {
    %c0_i32 = arith.constant 0 : i32
    %c0_i32_0 = arith.constant 0 : i32
    %c0_i32_1 = arith.constant 0 : i32
    return %arg1, %c0_i32, %c0_i32_0 : i32, i32, i32
  }
  func.func @transform_14(%arg0: i32, %arg1: i32) -> (i32, i32, i32) {
    %c0_i32 = arith.constant 0 : i32
    %c0_i32_0 = arith.constant 0 : i32
    %c0_i32_1 = arith.constant 0 : i32
    return %arg1, %c0_i32, %c0_i32_0 : i32, i32, i32
  }
  func.func @transform_15(%arg0: i32, %arg1: i32) -> (i32, i32, i32) {
    %c0_i32 = arith.constant 0 : i32
    %c0_i32_0 = arith.constant 0 : i32
    %c0_i32_1 = arith.constant 0 : i32
    return %arg1, %c0_i32, %c0_i32_0 : i32, i32, i32
  }
  func.func @transform_16(%arg0: i32, %arg1: i32) -> (i32, i32, i32) {
    %c0_i32 = arith.constant 0 : i32
    %c0_i32_0 = arith.constant 0 : i32
    %c0_i32_1 = arith.constant 0 : i32
    return %arg1, %c0_i32, %c0_i32_0 : i32, i32, i32
  }
  func.func @transform_17(%arg0: i32, %arg1: i32) -> (i32, i32, i32) {
    %c0_i32 = arith.constant 0 : i32
    %c0_i32_0 = arith.constant 0 : i32
    %c0_i32_1 = arith.constant 0 : i32
    return %arg1, %c0_i32, %c0_i32_0 : i32, i32, i32
  }
  func.func @transform_18(%arg0: i32, %arg1: i32) -> (i32, i32, i32) {
    %c0_i32 = arith.constant 0 : i32
    %c0_i32_0 = arith.constant 0 : i32
    %c0_i32_1 = arith.constant 0 : i32
    return %arg1, %c0_i32, %c0_i32_0 : i32, i32, i32
  }
  func.func @transform_19(%arg0: i32, %arg1: i32) -> (i32, i32, i32) {
    %c0_i32 = arith.constant 0 : i32
    %c0_i32_0 = arith.constant 0 : i32
    %c0_i32_1 = arith.constant 0 : i32
    return %arg1, %c0_i32, %c0_i32_0 : i32, i32, i32
  }
  func.func @transform_20(%arg0: i32, %arg1: i32) -> (i32, i32, i32) {
    %c0_i32 = arith.constant 0 : i32
    %c0_i32_0 = arith.constant 0 : i32
    %c0_i32_1 = arith.constant 0 : i32
    return %arg1, %c0_i32, %c0_i32_0 : i32, i32, i32
  }
  func.func @transform_21(%arg0: i32, %arg1: i32) -> (i32, i32, i32) {
    %c0_i32 = arith.constant 0 : i32
    %c0_i32_0 = arith.constant 0 : i32
    %c0_i32_1 = arith.constant 0 : i32
    return %arg1, %c0_i32, %c0_i32_0 : i32, i32, i32
  }
  func.func @transform_22(%arg0: i32, %arg1: i32) -> (i32, i32, i32) {
    %c0_i32 = arith.constant 0 : i32
    %c0_i32_0 = arith.constant 0 : i32
    %c0_i32_1 = arith.constant 0 : i32
    return %arg1, %c0_i32, %c0_i32_0 : i32, i32, i32
  }
  func.func @transform_23(%arg0: i32, %arg1: i32) -> (i32, i32, i32) {
    %c0_i32 = arith.constant 0 : i32
    %c0_i32_0 = arith.constant 0 : i32
    %c0_i32_1 = arith.constant 0 : i32
    return %arg1, %c0_i32, %c0_i32_0 : i32, i32, i32
  }
  func.func @transform_24(%arg0: i32, %arg1: i32) -> (i32, i32) {
    %c0_i32 = arith.constant 0 : i32
    %c0_i32_0 = arith.constant 0 : i32
    %c0_i32_1 = arith.constant 0 : i32
    return %c0_i32, %c0_i32_0 : i32, i32
  }
  func.func @transform_25(%arg0: i32, %arg1: i32) -> (i32, i32) {
    %c0_i32 = arith.constant 0 : i32
    %c0_i32_0 = arith.constant 0 : i32
    %c0_i32_1 = arith.constant 0 : i32
    return %c0_i32, %c0_i32_0 : i32, i32
  }
  func.func @transform_26(%arg0: i32, %arg1: i32) -> (i32, i32) {
    %c0_i32 = arith.constant 0 : i32
    %c0_i32_0 = arith.constant 0 : i32
    %c0_i32_1 = arith.constant 0 : i32
    return %c0_i32, %c0_i32_0 : i32, i32
  }
  func.func @transform_27(%arg0: i32, %arg1: i32) -> (i32, i32) {
    %c0_i32 = arith.constant 0 : i32
    %c0_i32_0 = arith.constant 0 : i32
    %c0_i32_1 = arith.constant 0 : i32
    return %c0_i32, %c0_i32_0 : i32, i32
  }
  func.func @transform_28(%arg0: i32, %arg1: i32) -> (i32, i32, i32) {
    %c0_i32 = arith.constant 0 : i32
    %c0_i32_0 = arith.constant 0 : i32
    %c0_i32_1 = arith.constant 0 : i32
    return %arg0, %c0_i32, %c0_i32_0 : i32, i32, i32
  }
}

</mosaic_0001>

<llo_original>
// kernel: tpu_custom_call.1
$region0: #{tpu_custom_call.1}
  #allocation0 [shape = 'u32[]', space=smem, size = 0x4, offset = 0x4, fixed_abs, tag = 'smem constant byte address 0x4 - core index']
  #allocation1 [shape = 'u32[144,128]{1,0:T(1,128)}', space=vmem, size = 0x12000, scoped, tag = 'internal scratch']
  #allocation2 [shape = 'f32[8,32]{1,0:T(8,128)}', space=vmem, size = 0x1000, scoped, tag = 'scratch operand']
  %s0 = inlined_call_operand.hbm [shape: f32[2,8,32], index: 0, kind: input, shape index: {}]
  %s1 = inlined_call_operand.hbm [shape: f32[2,8,32], index: 1, kind: input, shape index: {}]
  %s2 = inlined_call_operand.vmem [shape: f32[2,1,8], index: 2, kind: input, shape index: {}]
  %s3 = inlined_call_operand.hbm [shape: f32[2,1,8], index: 3, kind: input, shape index: {}]
  %s4 = inlined_call_operand.vmem [shape: bf16[2,32,96], index: 4, kind: input, shape index: {}]
  %s5 = inlined_call_operand.hbm [shape: f32[2,1,96], index: 5, kind: input, shape index: {}]
  %s6 = inlined_call_operand.vmem [shape: bf16[2,32,32], index: 6, kind: input, shape index: {}]
  %s7 = inlined_call_operand.vmem [shape: f32[2,1,32], index: 7, kind: input, shape index: {}]
  %s8 = inlined_call_operand.vmem [shape: bf16[2,32,32], index: 8, kind: input, shape index: {}]
  %s9 = inlined_call_operand.vmem [shape: f32[2,1,32], index: 9, kind: input, shape index: {}]
  %s10 = inlined_call_operand.hbm [shape: bf16[2,32,64], index: 10, kind: input, shape index: {}]
  %s11 = inlined_call_operand.vmem [shape: f32[2,1,64], index: 11, kind: input, shape index: {}]
  %s12 = inlined_call_operand.hbm [shape: bf16[2,32,32], index: 12, kind: input, shape index: {}]
  %s13 = inlined_call_operand.vmem [shape: f32[2,1,32], index: 13, kind: input, shape index: {}]
  %s14 = inlined_call_operand.hbm [shape: bf16[2,32,64], index: 14, kind: input, shape index: {}]
  %s15 = inlined_call_operand.vmem [shape: f32[2,1,64], index: 15, kind: input, shape index: {}]
  %s16 = inlined_call_operand.vmem [shape: bf16[2,64,32], index: 16, kind: input, shape index: {}]
  %s17 = inlined_call_operand.vmem [shape: f32[2,1,32], index: 17, kind: input, shape index: {}]
  %s18 = inlined_call_operand.vmem [shape: f32[2,1,32], index: 18, kind: input, shape index: {}]
  %s19 = inlined_call_operand.vmem [shape: f32[2,1,32], index: 19, kind: input, shape index: {}]
  %s20 = inlined_call_operand.vmem [shape: f32[2,1,32], index: 20, kind: input, shape index: {}]
  %s21 = inlined_call_operand.vmem [shape: f32[2,1,32], index: 21, kind: input, shape index: {}]
  %s22 = inlined_call_operand.vmem [shape: f32[2,1,32], index: 22, kind: input, shape index: {}]
  %s23 = inlined_call_operand.vmem [shape: f32[2,1,32], index: 23, kind: input, shape index: {}]
  %s24 = inlined_call_operand.vmem [shape: f32[1,32], index: 24, kind: input, shape index: {}]
  %s25 = inlined_call_operand.vmem [shape: f32[1,32], index: 25, kind: input, shape index: {}]
  %s26 = inlined_call_operand.vmem [shape: bf16[32,128], index: 26, kind: input, shape index: {}]
  %s27 = inlined_call_operand.vmem [shape: f32[1,128], index: 27, kind: input, shape index: {}]
  %s28 = inlined_call_operand.hbm [shape: f32[2,8,128], index: 28, kind: output, shape index: {}]
  %s29 = sld [smem:[#allocation0]]
  $region181: #{tpu_custom_call.1} parent=0
    _
  %s31 = ssub.s32 1, %s29
  %s32 = scalar_select 0, %s31, %s29
  $region1: #{tpu_custom_call.1} parent=0
    #allocation3 [shape = 'u8[8192]{0}', space=vmem, size = 0x2000, scoped, tag = 'input window, operand 0']
    #allocation4 [shape = 's32[2]{0}', space=sflag, size = 0x8, scoped, tag = 'scoped memory for tpu_custom_call.1']
    #allocation5 [shape = 's32[2]{0}', space=sflag, size = 0x8, scoped, tag = 'scoped memory for tpu_custom_call.1']
    #allocation6 [shape = 'u8[8192]{0}', space=vmem, size = 0x2000, scoped, tag = 'input window, operand 1']
    #allocation7 [shape = 's32[2]{0}', space=sflag, size = 0x8, scoped, tag = 'scoped memory for tpu_custom_call.1']
    #allocation8 [shape = 'u8[1024]{0}', space=vmem, size = 0x400, scoped, tag = 'input window, operand 3']
    #allocation9 [shape = 'u8[1024]{0}', space=vmem, size = 0x400, scoped, tag = 'input window, operand 5']
    #allocation10 [shape = 's32[2]{0}', space=sflag, size = 0x8, scoped, tag = 'scoped memory for tpu_custom_call.1']
    #allocation11 [shape = 'u8[16384]{0}', space=vmem, size = 0x4000, scoped, tag = 'input window, operand 10']
    #allocation12 [shape = 'u8[16384]{0}', space=vmem, size = 0x4000, scoped, tag = 'input window, operand 12']
    #allocation13 [shape = 's32[2]{0}', space=sflag, size = 0x8, scoped, tag = 'scoped memory for tpu_custom_call.1']
    #allocation14 [shape = 'u8[16384]{0}', space=vmem, size = 0x4000, scoped, tag = 'input window, operand 14']
    #allocation15 [shape = 'u8[8192]{0}', space=vmem, size = 0x2000, scoped, tag = 'output window, operand 0']
    %33 = vsyncpa [#allocation4], 0
    %s34 = scalar_lea.sflag [#allocation4], 1
    %35 = vsyncpa %s34, 0
    %36 = vsyncpa [#allocation7], 0
    %s37 = scalar_lea.sflag [#allocation7], 1
    %38 = vsyncpa %s37, 0
    %39 = vsyncpa [#allocation10], 0
    %s40 = scalar_lea.sflag [#allocation10], 1
    %41 = vsyncpa %s40, 0
    %42 = vsyncpa [#allocation13], 0
    %s43 = scalar_lea.sflag [#allocation13], 1
    %44 = vsyncpa %s43, 0
    %45 = vsyncpa [#allocation5], 0
    %s46 = scalar_lea.sflag [#allocation5], 1
    %47 = vsyncpa %s46, 0
    loop: start=0, step=1, limit=6
    $region2: #{tpu_custom_call.1} parent=1 // loop_pre_header
      _
    $region3: #{tpu_custom_call.1} parent=1 // loop_header
      %s49 = sphi 0, %s53
      %p50 = scmp.ge.s32.totalorder %s49, 6
      %s56 = sphi 0, %s68
      %s57 = sphi 0, %s64
      %s58 = sphi 0, %s56
      %s59 = sphi 0, %s57
      %s60 = sphi 0, %s58
      %s61 = sphi 0, %s59
      %s71 = sphi 0, %s73
      %s74 = sphi 0, %s71
      %s75 = sphi 0, %s74
      %s91 = sphi 0, %s75
      %s97 = sphi 0, %s99
      %s100 = sphi 0, %s97
      %s101 = sphi 0, %s100
      %s117 = sphi 0, %s101
      %s123 = sphi 0, %s125
      %s126 = sphi 0, %s123
      %s127 = sphi 0, %s126
      %s143 = sphi 0, %s127
      %s149 = sphi 0, %s151
      %s152 = sphi 0, %s149
      %s153 = sphi 0, %s152
      %s169 = sphi 0, %s153
      %s175 = sphi 0, %s177
      %s178 = sphi 0, %s175
      %s179 = sphi 0, %s178
      %s195 = sphi 0, %s179
      %s201 = sphi 0, %s203
      %s204 = sphi 0, %s201
      %s205 = sphi 0, %s204
      %s221 = sphi 0, %s205
      %s227 = sphi 0, %s229
      %s230 = sphi 0, %s227
      %s231 = sphi 0, %s230
      %s247 = sphi 0, %s231
      %s253 = sphi 0, %s255
      %s256 = sphi 0, %s253
      %s257 = sphi 0, %s256
      %s273 = sphi 0, %s257
      %s279 = sphi 0, %s281
      %s282 = sphi 0, %s279
      %s283 = sphi 0, %s282
      %s299 = sphi 0, %s283
      %s305 = sphi 0, %s307
      %s308 = sphi 0, %s305
      %s309 = sphi 0, %s308
      %s325 = sphi 0, %s309
      %s331 = sphi 0, %s333
      %s334 = sphi 0, %s331
      %s335 = sphi 0, %s334
      %s351 = sphi 0, %s335
      %s357 = sphi 0, %s359
      %s360 = sphi 0, %s357
      %s361 = sphi 0, %s360
      %s377 = sphi 0, %s361
      %s383 = sphi 0, %s385
      %s386 = sphi 0, %s383
      %s387 = sphi 0, %s386
      %s403 = sphi 0, %s387
      %s409 = sphi 0, %s411
      %s412 = sphi 0, %s409
      %s413 = sphi 0, %s412
      %s429 = sphi 0, %s413
      %s435 = sphi 0, %s437
      %s438 = sphi 0, %s435
      %s439 = sphi 0, %s438
      %s455 = sphi 0, %s439
      %s461 = sphi 0, %s463
      %s464 = sphi 0, %s461
      %s465 = sphi 0, %s464
      %s481 = sphi 0, %s465
      %s487 = sphi 0, %s489
      %s490 = sphi 0, %s487
      %s491 = sphi 0, %s490
      %s507 = sphi 0, %s491
      %s513 = sphi 0, %s515
      %s516 = sphi 0, %s513
      %s517 = sphi 0, %s516
      %s533 = sphi 0, %s517
      %s539 = sphi 0, %s541
      %s542 = sphi 0, %s539
      %s543 = sphi 0, %s542
      %s559 = sphi 0, %s543
      %s565 = sphi 0, %s567
      %s568 = sphi 0, %s565
      %s569 = sphi 0, %s568
      %s585 = sphi 0, %s569
      %s591 = sphi 0, %s593
      %s594 = sphi 0, %s591
      %s595 = sphi 0, %s594
      %s611 = sphi 0, %s595
      %s617 = sphi 0, %s619
      %s620 = sphi 0, %s617
      %s621 = sphi 0, %s620
      %s637 = sphi 0, %s621
      %s643 = sphi 0, %s645
      %s646 = sphi 0, %s643
      %s647 = sphi 0, %s646
      %s663 = sphi 0, %s647
      %s669 = sphi 0, %s671
      %s672 = sphi 0, %s669
      %s673 = sphi 0, %s672
      %s689 = sphi 0, %s673
      %s693 = sphi 0, %s693
      %s695 = sphi 0, %s693
      %s696 = sphi 0, %s695
      %s710 = sphi 0, %s696
      %s714 = sphi 0, %s714
      %s716 = sphi 0, %s714
      %s717 = sphi 0, %s716
      %s731 = sphi 0, %s717
      %s735 = sphi 0, %s735
      %s737 = sphi 0, %s735
      %s738 = sphi 0, %s737
      %s752 = sphi 0, %s738
      %s756 = sphi 0, %s756
      %s758 = sphi 0, %s756
      %s759 = sphi 0, %s758
      %s773 = sphi 0, %s759
      %s779 = sphi 0, %s781
      %s782 = sphi 0, %s779
      %s783 = sphi 0, %s782
      %s799 = sphi 0, %s783
    $region4: #{tpu_custom_call.1} parent=1 // loop_header_branch
      %52 = sbr.rel (%p50) target = $region8
    $region5: #{tpu_custom_call.1} parent=1 // loop_body
      %s54 = ssub.s32 %s49, 1
      %s55 = ssub.s32 %s49, 2
      %s62 = sadd.s32 1, %s57
      %p63 = scmp.ge.s32.totalorder %s62, 2
      %s64 = scalar_select %p63, 0, %s62
      %s65 = sadd.s32 1, %s56
      %s66 = scalar_select %p63, %s65, %s56
      %p67 = scmp.ge.s32.totalorder %s66, 2
      %s68 = scalar_select %p67, 0, %s66
      %s69 = ssub.s32 %s56, %s68
      %p70 = scmp.eq.s32.totalorder %s69, 0
      %s72 = sadd.s32 %s71, 1
      %s73 = scalar_select %p70, %s71, %s72
      %p76 = pneg %p70
      %p77 = scmp.eq.s32.totalorder %s49, 3
      %p78 = por %p76, %p77
      %p79 = scmp.ne.s32.totalorder %s71, %s74
      %p80 = scmp.eq.s32.totalorder %s49, 0
      %p81 = por %p79, %p80
      %p82 = scmp.ne.s32.totalorder %s71, %s74
      %p83 = scmp.eq.s32.totalorder %s54, 3
      %p84 = por %p82, %p83
      %p85 = scmp.ne.s32.totalorder %s74, %s75
      %p86 = scmp.eq.s32.totalorder %s54, 0
      %p87 = por %p85, %p86
      %p88 = scmp.ne.s32.totalorder %s74, %s75
      %p89 = scmp.eq.s32.totalorder %s55, 3
      %p90 = por %p88, %p89
      %p92 = scmp.ne.s32.totalorder %s75, %s91
      %p93 = scmp.eq.s32.totalorder %s55, 0
      %p94 = por %p92, %p93
      %s95 = ssub.s32 %s56, %s68
      %p96 = scmp.eq.s32.totalorder %s95, 0
      %s98 = sadd.s32 %s97, 1
      %s99 = scalar_select %p96, %s97, %s98
      %p102 = pneg %p96
      %p103 = scmp.eq.s32.totalorder %s49, 3
      %p104 = por %p102, %p103
      %p105 = scmp.ne.s32.totalorder %s97, %s100
      %p106 = scmp.eq.s32.totalorder %s49, 0
      %p107 = por %p105, %p106
      %p108 = scmp.ne.s32.totalorder %s97, %s100
      %p109 = scmp.eq.s32.totalorder %s54, 3
      %p110 = por %p108, %p109
      %p111 = scmp.ne.s32.totalorder %s100, %s101
      %p112 = scmp.eq.s32.totalorder %s54, 0
      %p113 = por %p111, %p112
      %p114 = scmp.ne.s32.totalorder %s100, %s101
      %p115 = scmp.eq.s32.totalorder %s55, 3
      %p116 = por %p114, %p115
      %p118 = scmp.ne.s32.totalorder %s101, %s117
      %p119 = scmp.eq.s32.totalorder %s55, 0
      %p120 = por %p118, %p119
      %s121 = ssub.s32 %s56, %s68
      %p122 = scmp.eq.s32.totalorder %s121, 0
      %s124 = sadd.s32 %s123, 1
      %s125 = scalar_select %p122, %s123, %s124
      %p128 = pneg %p122
      %p129 = scmp.eq.s32.totalorder %s49, 3
      %p130 = por %p128, %p129
      %p131 = scmp.ne.s32.totalorder %s123, %s126
      %p132 = scmp.eq.s32.totalorder %s49, 0
      %p133 = por %p131, %p132
      %p134 = scmp.ne.s32.totalorder %s123, %s126
      %p135 = scmp.eq.s32.totalorder %s54, 3
      %p136 = por %p134, %p135
      %p137 = scmp.ne.s32.totalorder %s126, %s127
      %p138 = scmp.eq.s32.totalorder %s54, 0
      %p139 = por %p137, %p138
      %p140 = scmp.ne.s32.totalorder %s126, %s127
      %p141 = scmp.eq.s32.totalorder %s55, 3
      %p142 = por %p140, %p141
      %p144 = scmp.ne.s32.totalorder %s127, %s143
      %p145 = scmp.eq.s32.totalorder %s55, 0
      %p146 = por %p144, %p145
      %s147 = ssub.s32 %s56, %s68
      %p148 = scmp.eq.s32.totalorder %s147, 0
      %s150 = sadd.s32 %s149, 1
      %s151 = scalar_select %p148, %s149, %s150
      %p154 = pneg %p148
      %p155 = scmp.eq.s32.totalorder %s49, 3
      %p156 = por %p154, %p155
      %p157 = scmp.ne.s32.totalorder %s149, %s152
      %p158 = scmp.eq.s32.totalorder %s49, 0
      %p159 = por %p157, %p158
      %p160 = scmp.ne.s32.totalorder %s149, %s152
      %p161 = scmp.eq.s32.totalorder %s54, 3
      %p162 = por %p160, %p161
      %p163 = scmp.ne.s32.totalorder %s152, %s153
      %p164 = scmp.eq.s32.totalorder %s54, 0
      %p165 = por %p163, %p164
      %p166 = scmp.ne.s32.totalorder %s152, %s153
      %p167 = scmp.eq.s32.totalorder %s55, 3
      %p168 = por %p166, %p167
      %p170 = scmp.ne.s32.totalorder %s153, %s169
      %p171 = scmp.eq.s32.totalorder %s55, 0
      %p172 = por %p170, %p171
      %s173 = ssub.s32 %s57, %s64
      %p174 = scmp.eq.s32.totalorder %s173, 0
      %s176 = sadd.s32 %s175, 1
      %s177 = scalar_select %p174, %s175, %s176
      %p180 = pneg %p174
      %p181 = scmp.eq.s32.totalorder %s49, 3
      %p182 = por %p180, %p181
      %p183 = scmp.ne.s32.totalorder %s175, %s178
      %p184 = scmp.eq.s32.totalorder %s49, 0
      %p185 = por %p183, %p184
      %p186 = scmp.ne.s32.totalorder %s175, %s178
      %p187 = scmp.eq.s32.totalorder %s54, 3
      %p188 = por %p186, %p187
      %p189 = scmp.ne.s32.totalorder %s178, %s179
      %p190 = scmp.eq.s32.totalorder %s54, 0
      %p191 = por %p189, %p190
      %p192 = scmp.ne.s32.totalorder %s178, %s179
      %p193 = scmp.eq.s32.totalorder %s55, 3
      %p194 = por %p192, %p193
      %p196 = scmp.ne.s32.totalorder %s179, %s195
      %p197 = scmp.eq.s32.totalorder %s55, 0
      %p198 = por %p196, %p197
      %s199 = ssub.s32 %s57, %s64
      %p200 = scmp.eq.s32.totalorder %s199, 0
      %s202 = sadd.s32 %s201, 1
      %s203 = scalar_select %p200, %s201, %s202
      %p206 = pneg %p200
      %p207 = scmp.eq.s32.totalorder %s49, 3
      %p208 = por %p206, %p207
      %p209 = scmp.ne.s32.totalorder %s201, %s204
      %p210 = scmp.eq.s32.totalorder %s49, 0
      %p211 = por %p209, %p210
      %p212 = scmp.ne.s32.totalorder %s201, %s204
      %p213 = scmp.eq.s32.totalorder %s54, 3
      %p214 = por %p212, %p213
      %p215 = scmp.ne.s32.totalorder %s204, %s205
      %p216 = scmp.eq.s32.totalorder %s54, 0
      %p217 = por %p215, %p216
      %p218 = scmp.ne.s32.totalorder %s204, %s205
      %p219 = scmp.eq.s32.totalorder %s55, 3
      %p220 = por %p218, %p219
      %p222 = scmp.ne.s32.totalorder %s205, %s221
      %p223 = scmp.eq.s32.totalorder %s55, 0
      %p224 = por %p222, %p223
      %s225 = ssub.s32 %s57, %s64
      %p226 = scmp.eq.s32.totalorder %s225, 0
      %s228 = sadd.s32 %s227, 1
      %s229 = scalar_select %p226, %s227, %s228
      %p232 = pneg %p226
      %p233 = scmp.eq.s32.totalorder %s49, 3
      %p234 = por %p232, %p233
      %p235 = scmp.ne.s32.totalorder %s227, %s230
      %p236 = scmp.eq.s32.totalorder %s49, 0
      %p237 = por %p235, %p236
      %p238 = scmp.ne.s32.totalorder %s227, %s230
      %p239 = scmp.eq.s32.totalorder %s54, 3
      %p240 = por %p238, %p239
      %p241 = scmp.ne.s32.totalorder %s230, %s231
      %p242 = scmp.eq.s32.totalorder %s54, 0
      %p243 = por %p241, %p242
      %p244 = scmp.ne.s32.totalorder %s230, %s231
      %p245 = scmp.eq.s32.totalorder %s55, 3
      %p246 = por %p244, %p245
      %p248 = scmp.ne.s32.totalorder %s231, %s247
      %p249 = scmp.eq.s32.totalorder %s55, 0
      %p250 = por %p248, %p249
      %s251 = ssub.s32 %s57, %s64
      %p252 = scmp.eq.s32.totalorder %s251, 0
      %s254 = sadd.s32 %s253, 1
      %s255 = scalar_select %p252, %s253, %s254
      %p258 = pneg %p252
      %p259 = scmp.eq.s32.totalorder %s49, 3
      %p260 = por %p258, %p259
      %p261 = scmp.ne.s32.totalorder %s253, %s256
      %p262 = scmp.eq.s32.totalorder %s49, 0
      %p263 = por %p261, %p262
      %p264 = scmp.ne.s32.totalorder %s253, %s256
      %p265 = scmp.eq.s32.totalorder %s54, 3
      %p266 = por %p264, %p265
      %p267 = scmp.ne.s32.totalorder %s256, %s257
      %p268 = scmp.eq.s32.totalorder %s54, 0
      %p269 = por %p267, %p268
      %p270 = scmp.ne.s32.totalorder %s256, %s257
      %p271 = scmp.eq.s32.totalorder %s55, 3
      %p272 = por %p270, %p271
      %p274 = scmp.ne.s32.totalorder %s257, %s273
      %p275 = scmp.eq.s32.totalorder %s55, 0
      %p276 = por %p274, %p275
      %s277 = ssub.s32 %s57, %s64
      %p278 = scmp.eq.s32.totalorder %s277, 0
      %s280 = sadd.s32 %s279, 1
      %s281 = scalar_select %p278, %s279, %s280
      %p284 = pneg %p278
      %p285 = scmp.eq.s32.totalorder %s49, 3
      %p286 = por %p284, %p285
      %p287 = scmp.ne.s32.totalorder %s279, %s282
      %p288 = scmp.eq.s32.totalorder %s49, 0
      %p289 = por %p287, %p288
      %p290 = scmp.ne.s32.totalorder %s279, %s282
      %p291 = scmp.eq.s32.totalorder %s54, 3
      %p292 = por %p290, %p291
      %p293 = scmp.ne.s32.totalorder %s282, %s283
      %p294 = scmp.eq.s32.totalorder %s54, 0
      %p295 = por %p293, %p294
      %p296 = scmp.ne.s32.totalorder %s282, %s283
      %p297 = scmp.eq.s32.totalorder %s55, 3
      %p298 = por %p296, %p297
      %p300 = scmp.ne.s32.totalorder %s283, %s299
      %p301 = scmp.eq.s32.totalorder %s55, 0
      %p302 = por %p300, %p301
      %s303 = ssub.s32 %s57, %s64
      %p304 = scmp.eq.s32.totalorder %s303, 0
      %s306 = sadd.s32 %s305, 1
      %s307 = scalar_select %p304, %s305, %s306
      %p310 = pneg %p304
      %p311 = scmp.eq.s32.totalorder %s49, 3
      %p312 = por %p310, %p311
      %p313 = scmp.ne.s32.totalorder %s305, %s308
      %p314 = scmp.eq.s32.totalorder %s49, 0
      %p315 = por %p313, %p314
      %p316 = scmp.ne.s32.totalorder %s305, %s308
      %p317 = scmp.eq.s32.totalorder %s54, 3
      %p318 = por %p316, %p317
      %p319 = scmp.ne.s32.totalorder %s308, %s309
      %p320 = scmp.eq.s32.totalorder %s54, 0
      %p321 = por %p319, %p320
      %p322 = scmp.ne.s32.totalorder %s308, %s309
      %p323 = scmp.eq.s32.totalorder %s55, 3
      %p324 = por %p322, %p323
      %p326 = scmp.ne.s32.totalorder %s309, %s325
      %p327 = scmp.eq.s32.totalorder %s55, 0
      %p328 = por %p326, %p327
      %s329 = ssub.s32 %s57, %s64
      %p330 = scmp.eq.s32.totalorder %s329, 0
      %s332 = sadd.s32 %s331, 1
      %s333 = scalar_select %p330, %s331, %s332
      %p336 = pneg %p330
      %p337 = scmp.eq.s32.totalorder %s49, 3
      %p338 = por %p336, %p337
      %p339 = scmp.ne.s32.totalorder %s331, %s334
      %p340 = scmp.eq.s32.totalorder %s49, 0
      %p341 = por %p339, %p340
      %p342 = scmp.ne.s32.totalorder %s331, %s334
      %p343 = scmp.eq.s32.totalorder %s54, 3
      %p344 = por %p342, %p343
      %p345 = scmp.ne.s32.totalorder %s334, %s335
      %p346 = scmp.eq.s32.totalorder %s54, 0
      %p347 = por %p345, %p346
      %p348 = scmp.ne.s32.totalorder %s334, %s335
      %p349 = scmp.eq.s32.totalorder %s55, 3
      %p350 = por %p348, %p349
      %p352 = scmp.ne.s32.totalorder %s335, %s351
      %p353 = scmp.eq.s32.totalorder %s55, 0
      %p354 = por %p352, %p353
      %s355 = ssub.s32 %s57, %s64
      %p356 = scmp.eq.s32.totalorder %s355, 0
      %s358 = sadd.s32 %s357, 1
      %s359 = scalar_select %p356, %s357, %s358
      %p362 = pneg %p356
      %p363 = scmp.eq.s32.totalorder %s49, 3
      %p364 = por %p362, %p363
      %p365 = scmp.ne.s32.totalorder %s357, %s360
      %p366 = scmp.eq.s32.totalorder %s49, 0
      %p367 = por %p365, %p366
      %p368 = scmp.ne.s32.totalorder %s357, %s360
      %p369 = scmp.eq.s32.totalorder %s54, 3
      %p370 = por %p368, %p369
      %p371 = scmp.ne.s32.totalorder %s360, %s361
      %p372 = scmp.eq.s32.totalorder %s54, 0
      %p373 = por %p371, %p372
      %p374 = scmp.ne.s32.totalorder %s360, %s361
      %p375 = scmp.eq.s32.totalorder %s55, 3
      %p376 = por %p374, %p375
      %p378 = scmp.ne.s32.totalorder %s361, %s377
      %p379 = scmp.eq.s32.totalorder %s55, 0
      %p380 = por %p378, %p379
      %s381 = ssub.s32 %s57, %s64
      %p382 = scmp.eq.s32.totalorder %s381, 0
      %s384 = sadd.s32 %s383, 1
      %s385 = scalar_select %p382, %s383, %s384
      %p388 = pneg %p382
      %p389 = scmp.eq.s32.totalorder %s49, 3
      %p390 = por %p388, %p389
      %p391 = scmp.ne.s32.totalorder %s383, %s386
      %p392 = scmp.eq.s32.totalorder %s49, 0
      %p393 = por %p391, %p392
      %p394 = scmp.ne.s32.totalorder %s383, %s386
      %p395 = scmp.eq.s32.totalorder %s54, 3
      %p396 = por %p394, %p395
      %p397 = scmp.ne.s32.totalorder %s386, %s387
      %p398 = scmp.eq.s32.totalorder %s54, 0
      %p399 = por %p397, %p398
      %p400 = scmp.ne.s32.totalorder %s386, %s387
      %p401 = scmp.eq.s32.totalorder %s55, 3
      %p402 = por %p400, %p401
      %p404 = scmp.ne.s32.totalorder %s387, %s403
      %p405 = scmp.eq.s32.totalorder %s55, 0
      %p406 = por %p404, %p405
      %s407 = ssub.s32 %s57, %s64
      %p408 = scmp.eq.s32.totalorder %s407, 0
      %s410 = sadd.s32 %s409, 1
      %s411 = scalar_select %p408, %s409, %s410
      %p414 = pneg %p408
      %p415 = scmp.eq.s32.totalorder %s49, 3
      %p416 = por %p414, %p415
      %p417 = scmp.ne.s32.totalorder %s409, %s412
      %p418 = scmp.eq.s32.totalorder %s49, 0
      %p419 = por %p417, %p418
      %p420 = scmp.ne.s32.totalorder %s409, %s412
      %p421 = scmp.eq.s32.totalorder %s54, 3
      %p422 = por %p420, %p421
      %p423 = scmp.ne.s32.totalorder %s412, %s413
      %p424 = scmp.eq.s32.totalorder %s54, 0
      %p425 = por %p423, %p424
      %p426 = scmp.ne.s32.totalorder %s412, %s413
      %p427 = scmp.eq.s32.totalorder %s55, 3
      %p428 = por %p426, %p427
      %p430 = scmp.ne.s32.totalorder %s413, %s429
      %p431 = scmp.eq.s32.totalorder %s55, 0
      %p432 = por %p430, %p431
      %s433 = ssub.s32 %s57, %s64
      %p434 = scmp.eq.s32.totalorder %s433, 0
      %s436 = sadd.s32 %s435, 1
      %s437 = scalar_select %p434, %s435, %s436
      %p440 = pneg %p434
      %p441 = scmp.eq.s32.totalorder %s49, 3
      %p442 = por %p440, %p441
      %p443 = scmp.ne.s32.totalorder %s435, %s438
      %p444 = scmp.eq.s32.totalorder %s49, 0
      %p445 = por %p443, %p444
      %p446 = scmp.ne.s32.totalorder %s435, %s438
      %p447 = scmp.eq.s32.totalorder %s54, 3
      %p448 = por %p446, %p447
      %p449 = scmp.ne.s32.totalorder %s438, %s439
      %p450 = scmp.eq.s32.totalorder %s54, 0
      %p451 = por %p449, %p450
      %p452 = scmp.ne.s32.totalorder %s438, %s439
      %p453 = scmp.eq.s32.totalorder %s55, 3
      %p454 = por %p452, %p453
      %p456 = scmp.ne.s32.totalorder %s439, %s455
      %p457 = scmp.eq.s32.totalorder %s55, 0
      %p458 = por %p456, %p457
      %s459 = ssub.s32 %s57, %s64
      %p460 = scmp.eq.s32.totalorder %s459, 0
      %s462 = sadd.s32 %s461, 1
      %s463 = scalar_select %p460, %s461, %s462
      %p466 = pneg %p460
      %p467 = scmp.eq.s32.totalorder %s49, 3
      %p468 = por %p466, %p467
      %p469 = scmp.ne.s32.totalorder %s461, %s464
      %p470 = scmp.eq.s32.totalorder %s49, 0
      %p471 = por %p469, %p470
      %p472 = scmp.ne.s32.totalorder %s461, %s464
      %p473 = scmp.eq.s32.totalorder %s54, 3
      %p474 = por %p472, %p473
      %p475 = scmp.ne.s32.totalorder %s464, %s465
      %p476 = scmp.eq.s32.totalorder %s54, 0
      %p477 = por %p475, %p476
      %p478 = scmp.ne.s32.totalorder %s464, %s465
      %p479 = scmp.eq.s32.totalorder %s55, 3
      %p480 = por %p478, %p479
      %p482 = scmp.ne.s32.totalorder %s465, %s481
      %p483 = scmp.eq.s32.totalorder %s55, 0
      %p484 = por %p482, %p483
      %s485 = ssub.s32 %s57, %s64
      %p486 = scmp.eq.s32.totalorder %s485, 0
      %s488 = sadd.s32 %s487, 1
      %s489 = scalar_select %p486, %s487, %s488
      %p492 = pneg %p486
      %p493 = scmp.eq.s32.totalorder %s49, 3
      %p494 = por %p492, %p493
      %p495 = scmp.ne.s32.totalorder %s487, %s490
      %p496 = scmp.eq.s32.totalorder %s49, 0
      %p497 = por %p495, %p496
      %p498 = scmp.ne.s32.totalorder %s487, %s490
      %p499 = scmp.eq.s32.totalorder %s54, 3
      %p500 = por %p498, %p499
      %p501 = scmp.ne.s32.totalorder %s490, %s491
      %p502 = scmp.eq.s32.totalorder %s54, 0
      %p503 = por %p501, %p502
      %p504 = scmp.ne.s32.totalorder %s490, %s491
      %p505 = scmp.eq.s32.totalorder %s55, 3
      %p506 = por %p504, %p505
      %p508 = scmp.ne.s32.totalorder %s491, %s507
      %p509 = scmp.eq.s32.totalorder %s55, 0
      %p510 = por %p508, %p509
      %s511 = ssub.s32 %s57, %s64
      %p512 = scmp.eq.s32.totalorder %s511, 0
      %s514 = sadd.s32 %s513, 1
      %s515 = scalar_select %p512, %s513, %s514
      %p518 = pneg %p512
      %p519 = scmp.eq.s32.totalorder %s49, 3
      %p520 = por %p518, %p519
      %p521 = scmp.ne.s32.totalorder %s513, %s516
      %p522 = scmp.eq.s32.totalorder %s49, 0
      %p523 = por %p521, %p522
      %p524 = scmp.ne.s32.totalorder %s513, %s516
      %p525 = scmp.eq.s32.totalorder %s54, 3
      %p526 = por %p524, %p525
      %p527 = scmp.ne.s32.totalorder %s516, %s517
      %p528 = scmp.eq.s32.totalorder %s54, 0
      %p529 = por %p527, %p528
      %p530 = scmp.ne.s32.totalorder %s516, %s517
      %p531 = scmp.eq.s32.totalorder %s55, 3
      %p532 = por %p530, %p531
      %p534 = scmp.ne.s32.totalorder %s517, %s533
      %p535 = scmp.eq.s32.totalorder %s55, 0
      %p536 = por %p534, %p535
      %s537 = ssub.s32 %s57, %s64
      %p538 = scmp.eq.s32.totalorder %s537, 0
      %s540 = sadd.s32 %s539, 1
      %s541 = scalar_select %p538, %s539, %s540
      %p544 = pneg %p538
      %p545 = scmp.eq.s32.totalorder %s49, 3
      %p546 = por %p544, %p545
      %p547 = scmp.ne.s32.totalorder %s539, %s542
      %p548 = scmp.eq.s32.totalorder %s49, 0
      %p549 = por %p547, %p548
      %p550 = scmp.ne.s32.totalorder %s539, %s542
      %p551 = scmp.eq.s32.totalorder %s54, 3
      %p552 = por %p550, %p551
      %p553 = scmp.ne.s32.totalorder %s542, %s543
      %p554 = scmp.eq.s32.totalorder %s54, 0
      %p555 = por %p553, %p554
      %p556 = scmp.ne.s32.totalorder %s542, %s543
      %p557 = scmp.eq.s32.totalorder %s55, 3
      %p558 = por %p556, %p557
      %p560 = scmp.ne.s32.totalorder %s543, %s559
      %p561 = scmp.eq.s32.totalorder %s55, 0
      %p562 = por %p560, %p561
      %s563 = ssub.s32 %s57, %s64
      %p564 = scmp.eq.s32.totalorder %s563, 0
      %s566 = sadd.s32 %s565, 1
      %s567 = scalar_select %p564, %s565, %s566
      %p570 = pneg %p564
      %p571 = scmp.eq.s32.totalorder %s49, 3
      %p572 = por %p570, %p571
      %p573 = scmp.ne.s32.totalorder %s565, %s568
      %p574 = scmp.eq.s32.totalorder %s49, 0
      %p575 = por %p573, %p574
      %p576 = scmp.ne.s32.totalorder %s565, %s568
      %p577 = scmp.eq.s32.totalorder %s54, 3
      %p578 = por %p576, %p577
      %p579 = scmp.ne.s32.totalorder %s568, %s569
      %p580 = scmp.eq.s32.totalorder %s54, 0
      %p581 = por %p579, %p580
      %p582 = scmp.ne.s32.totalorder %s568, %s569
      %p583 = scmp.eq.s32.totalorder %s55, 3
      %p584 = por %p582, %p583
      %p586 = scmp.ne.s32.totalorder %s569, %s585
      %p587 = scmp.eq.s32.totalorder %s55, 0
      %p588 = por %p586, %p587
      %s589 = ssub.s32 %s57, %s64
      %p590 = scmp.eq.s32.totalorder %s589, 0
      %s592 = sadd.s32 %s591, 1
      %s593 = scalar_select %p590, %s591, %s592
      %p596 = pneg %p590
      %p597 = scmp.eq.s32.totalorder %s49, 3
      %p598 = por %p596, %p597
      %p599 = scmp.ne.s32.totalorder %s591, %s594
      %p600 = scmp.eq.s32.totalorder %s49, 0
      %p601 = por %p599, %p600
      %p602 = scmp.ne.s32.totalorder %s591, %s594
      %p603 = scmp.eq.s32.totalorder %s54, 3
      %p604 = por %p602, %p603
      %p605 = scmp.ne.s32.totalorder %s594, %s595
      %p606 = scmp.eq.s32.totalorder %s54, 0
      %p607 = por %p605, %p606
      %p608 = scmp.ne.s32.totalorder %s594, %s595
      %p609 = scmp.eq.s32.totalorder %s55, 3
      %p610 = por %p608, %p609
      %p612 = scmp.ne.s32.totalorder %s595, %s611
      %p613 = scmp.eq.s32.totalorder %s55, 0
      %p614 = por %p612, %p613
      %s615 = ssub.s32 %s57, %s64
      %p616 = scmp.eq.s32.totalorder %s615, 0
      %s618 = sadd.s32 %s617, 1
      %s619 = scalar_select %p616, %s617, %s618
      %p622 = pneg %p616
      %p623 = scmp.eq.s32.totalorder %s49, 3
      %p624 = por %p622, %p623
      %p625 = scmp.ne.s32.totalorder %s617, %s620
      %p626 = scmp.eq.s32.totalorder %s49, 0
      %p627 = por %p625, %p626
      %p628 = scmp.ne.s32.totalorder %s617, %s620
      %p629 = scmp.eq.s32.totalorder %s54, 3
      %p630 = por %p628, %p629
      %p631 = scmp.ne.s32.totalorder %s620, %s621
      %p632 = scmp.eq.s32.totalorder %s54, 0
      %p633 = por %p631, %p632
      %p634 = scmp.ne.s32.totalorder %s620, %s621
      %p635 = scmp.eq.s32.totalorder %s55, 3
      %p636 = por %p634, %p635
      %p638 = scmp.ne.s32.totalorder %s621, %s637
      %p639 = scmp.eq.s32.totalorder %s55, 0
      %p640 = por %p638, %p639
      %s641 = ssub.s32 %s57, %s64
      %p642 = scmp.eq.s32.totalorder %s641, 0
      %s644 = sadd.s32 %s643, 1
      %s645 = scalar_select %p642, %s643, %s644
      %p648 = pneg %p642
      %p649 = scmp.eq.s32.totalorder %s49, 3
      %p650 = por %p648, %p649
      %p651 = scmp.ne.s32.totalorder %s643, %s646
      %p652 = scmp.eq.s32.totalorder %s49, 0
      %p653 = por %p651, %p652
      %p654 = scmp.ne.s32.totalorder %s643, %s646
      %p655 = scmp.eq.s32.totalorder %s54, 3
      %p656 = por %p654, %p655
      %p657 = scmp.ne.s32.totalorder %s646, %s647
      %p658 = scmp.eq.s32.totalorder %s54, 0
      %p659 = por %p657, %p658
      %p660 = scmp.ne.s32.totalorder %s646, %s647
      %p661 = scmp.eq.s32.totalorder %s55, 3
      %p662 = por %p660, %p661
      %p664 = scmp.ne.s32.totalorder %s647, %s663
      %p665 = scmp.eq.s32.totalorder %s55, 0
      %p666 = por %p664, %p665
      %s667 = ssub.s32 %s57, %s64
      %p668 = scmp.eq.s32.totalorder %s667, 0
      %s670 = sadd.s32 %s669, 1
      %s671 = scalar_select %p668, %s669, %s670
      %p674 = pneg %p668
      %p675 = scmp.eq.s32.totalorder %s49, 3
      %p676 = por %p674, %p675
      %p677 = scmp.ne.s32.totalorder %s669, %s672
      %p678 = scmp.eq.s32.totalorder %s49, 0
      %p679 = por %p677, %p678
      %p680 = scmp.ne.s32.totalorder %s669, %s672
      %p681 = scmp.eq.s32.totalorder %s54, 3
      %p682 = por %p680, %p681
      %p683 = scmp.ne.s32.totalorder %s672, %s673
      %p684 = scmp.eq.s32.totalorder %s54, 0
      %p685 = por %p683, %p684
      %p686 = scmp.ne.s32.totalorder %s672, %s673
      %p687 = scmp.eq.s32.totalorder %s55, 3
      %p688 = por %p686, %p687
      %p690 = scmp.ne.s32.totalorder %s673, %s689
      %p691 = scmp.eq.s32.totalorder %s55, 0
      %p692 = por %p690, %p691
      %s694 = sadd.s32 %s693, 1
      %p697 = scmp.eq.s32.totalorder %s49, 3
      %p698 = scmp.ne.s32.totalorder %s693, %s695
      %p699 = scmp.eq.s32.totalorder %s49, 0
      %p700 = por %p698, %p699
      %p701 = scmp.ne.s32.totalorder %s693, %s695
      %p702 = scmp.eq.s32.totalorder %s54, 3
      %p703 = por %p701, %p702
      %p704 = scmp.ne.s32.totalorder %s695, %s696
      %p705 = scmp.eq.s32.totalorder %s54, 0
      %p706 = por %p704, %p705
      %p707 = scmp.ne.s32.totalorder %s695, %s696
      %p708 = scmp.eq.s32.totalorder %s55, 3
      %p709 = por %p707, %p708
      %p711 = scmp.ne.s32.totalorder %s696, %s710
      %p712 = scmp.eq.s32.totalorder %s55, 0
      %p713 = por %p711, %p712
      %s715 = sadd.s32 %s714, 1
      %p718 = scmp.eq.s32.totalorder %s49, 3
      %p719 = scmp.ne.s32.totalorder %s714, %s716
      %p720 = scmp.eq.s32.totalorder %s49, 0
      %p721 = por %p719, %p720
      %p722 = scmp.ne.s32.totalorder %s714, %s716
      %p723 = scmp.eq.s32.totalorder %s54, 3
      %p724 = por %p722, %p723
      %p725 = scmp.ne.s32.totalorder %s716, %s717
      %p726 = scmp.eq.s32.totalorder %s54, 0
      %p727 = por %p725, %p726
      %p728 = scmp.ne.s32.totalorder %s716, %s717
      %p729 = scmp.eq.s32.totalorder %s55, 3
      %p730 = por %p728, %p729
      %p732 = scmp.ne.s32.totalorder %s717, %s731
      %p733 = scmp.eq.s32.totalorder %s55, 0
      %p734 = por %p732, %p733
      %s736 = sadd.s32 %s735, 1
      %p739 = scmp.eq.s32.totalorder %s49, 3
      %p740 = scmp.ne.s32.totalorder %s735, %s737
      %p741 = scmp.eq.s32.totalorder %s49, 0
      %p742 = por %p740, %p741
      %p743 = scmp.ne.s32.totalorder %s735, %s737
      %p744 = scmp.eq.s32.totalorder %s54, 3
      %p745 = por %p743, %p744
      %p746 = scmp.ne.s32.totalorder %s737, %s738
      %p747 = scmp.eq.s32.totalorder %s54, 0
      %p748 = por %p746, %p747
      %p749 = scmp.ne.s32.totalorder %s737, %s738
      %p750 = scmp.eq.s32.totalorder %s55, 3
      %p751 = por %p749, %p750
      %p753 = scmp.ne.s32.totalorder %s738, %s752
      %p754 = scmp.eq.s32.totalorder %s55, 0
      %p755 = por %p753, %p754
      %s757 = sadd.s32 %s756, 1
      %p760 = scmp.eq.s32.totalorder %s49, 3
      %p761 = scmp.ne.s32.totalorder %s756, %s758
      %p762 = scmp.eq.s32.totalorder %s49, 0
      %p763 = por %p761, %p762
      %p764 = scmp.ne.s32.totalorder %s756, %s758
      %p765 = scmp.eq.s32.totalorder %s54, 3
      %p766 = por %p764, %p765
      %p767 = scmp.ne.s32.totalorder %s758, %s759
      %p768 = scmp.eq.s32.totalorder %s54, 0
      %p769 = por %p767, %p768
      %p770 = scmp.ne.s32.totalorder %s758, %s759
      %p771 = scmp.eq.s32.totalorder %s55, 3
      %p772 = por %p770, %p771
      %p774 = scmp.ne.s32.totalorder %s759, %s773
      %p775 = scmp.eq.s32.totalorder %s55, 0
      %p776 = por %p774, %p775
      %s777 = ssub.s32 %s56, %s68
      %p778 = scmp.eq.s32.totalorder %s777, 0
      %s780 = sadd.s32 %s779, 1
      %s781 = scalar_select %p778, %s779, %s780
      %p784 = pneg %p778
      %p785 = scmp.eq.s32.totalorder %s49, 3
      %p786 = por %p784, %p785
      %p787 = scmp.ne.s32.totalorder %s779, %s782
      %p788 = scmp.eq.s32.totalorder %s49, 0
      %p789 = por %p787, %p788
      %p790 = scmp.ne.s32.totalorder %s779, %s782
      %p791 = scmp.eq.s32.totalorder %s54, 3
      %p792 = por %p790, %p791
      %p793 = scmp.ne.s32.totalorder %s782, %s783
      %p794 = scmp.eq.s32.totalorder %s54, 0
      %p795 = por %p793, %p794
      %p796 = scmp.ne.s32.totalorder %s782, %s783
      %p797 = scmp.eq.s32.totalorder %s55, 3
      %p798 = por %p796, %p797
      %p800 = scmp.ne.s32.totalorder %s783, %s799
      %p801 = scmp.eq.s32.totalorder %s55, 0
      %p802 = por %p800, %p801
      %p803 = scmp.le.s32.totalorder 1, %s49
      %p804 = scmp.lt.s32.totalorder %s49, 5
      %p805 = pnand %p803, %p804
      %p806 = pneg %p805
      // Predicated region
      $region9: #{tpu_custom_call.1} parent=5 // pred_check
        _
      $region10: #{tpu_custom_call.1} parent=5 // pred_check_branch
        %808 = sbr.rel (%p805) target = $region12
      $region11: #{tpu_custom_call.1} parent=5 // pred_region
        %s809 = ssub.s32 %s49, 1
        // Predicated region
        $region13: #{tpu_custom_call.1} parent=11 // pred_check
          %p810 = pneg %p706
        $region14: #{tpu_custom_call.1} parent=11 // pred_check_branch
          %812 = sbr.rel (%p810) target = $region16
        $region15: #{tpu_custom_call.1} parent=11 // pred_region
          _
        $region16: #{tpu_custom_call.1} parent=11 // pred_fallthru
          _
        // Predicated region
        $region17: #{tpu_custom_call.1} parent=11 // pred_check
          %p813 = pneg %p727
        $region18: #{tpu_custom_call.1} parent=11 // pred_check_branch
          %815 = sbr.rel (%p813) target = $region20
        $region19: #{tpu_custom_call.1} parent=11 // pred_region
          _
        $region20: #{tpu_custom_call.1} parent=11 // pred_fallthru
          _
        // Predicated region
        $region21: #{tpu_custom_call.1} parent=11 // pred_check
          %p816 = pneg %p748
        $region22: #{tpu_custom_call.1} parent=11 // pred_check_branch
          %818 = sbr.rel (%p816) target = $region24
        $region23: #{tpu_custom_call.1} parent=11 // pred_region
          _
        $region24: #{tpu_custom_call.1} parent=11 // pred_fallthru
          _
        // Predicated region
        $region25: #{tpu_custom_call.1} parent=11 // pred_check
          %p819 = pneg %p769
        $region26: #{tpu_custom_call.1} parent=11 // pred_check_branch
          %821 = sbr.rel (%p819) target = $region28
        $region27: #{tpu_custom_call.1} parent=11 // pred_region
          _
        $region28: #{tpu_custom_call.1} parent=11 // pred_fallthru
          _
      $region12: #{tpu_custom_call.1} parent=5 // pred_fallthru
        _
      %p822 = scmp.lt.s32.totalorder %s49, 4
      // Predicated region
      $region29: #{tpu_custom_call.1} parent=5 // pred_check
        %p823 = pneg %p822
      $region30: #{tpu_custom_call.1} parent=5 // pred_check_branch
        %825 = sbr.rel (%p823) target = $region32
      $region31: #{tpu_custom_call.1} parent=5 // pred_region
        // Predicated region
        $region33: #{tpu_custom_call.1} parent=31 // pred_check
          %p826 = pneg %p81
        $region34: #{tpu_custom_call.1} parent=31 // pred_check_branch
          %828 = sbr.rel (%p826) target = $region36
        $region35: #{tpu_custom_call.1} parent=31 // pred_region
          %s829 = sand.u32 %s71, 1
          %s830 = scalar_lea.sflag [#allocation4], %s829
          %s831 = sand.u32 %s71, 1
          %s832 = smul.addr %s831, 8
          %s833 = scalar_lea.vmem [#allocation3], %s832
          %s835 = ssub.s32 128, 128
          %836 = vsyncadd %s830, %s835
          %s837 = smul.addr %s56, 128
          %s838 = scalar_lea.hbm %s0, %s837
          %s840 = sshll.u32 %s833, 4
          %s841 = int_to_ptr.vmem [resolvable:$true] %s840
          %843 = dma.hbm_to_vmem [thread:$0]  %s838, 128, %s841, %s830
        $region36: #{tpu_custom_call.1} parent=31 // pred_fallthru
          _
        // Predicated region
        $region37: #{tpu_custom_call.1} parent=31 // pred_check
          %p844 = pneg %p107
        $region38: #{tpu_custom_call.1} parent=31 // pred_check_branch
          %846 = sbr.rel (%p844) target = $region40
        $region39: #{tpu_custom_call.1} parent=31 // pred_region
          %s847 = sand.u32 %s49, 1
          %s848 = scalar_lea.sflag [#allocation7], %s847
          %s849 = sand.u32 %s97, 1
          %s850 = smul.addr %s849, 8
          %s851 = scalar_lea.vmem [#allocation6], %s850
          %s853 = ssub.s32 128, 128
          %854 = vsyncadd %s848, %s853
          %s855 = smul.addr %s56, 128
          %s856 = scalar_lea.hbm %s1, %s855
          %s858 = sshll.u32 %s851, 4
          %s859 = int_to_ptr.vmem [resolvable:$true] %s858
          %861 = dma.hbm_to_vmem [thread:$0]  %s856, 128, %s859, %s848
        $region40: #{tpu_custom_call.1} parent=31 // pred_fallthru
          _
        // Predicated region
        $region41: #{tpu_custom_call.1} parent=31 // pred_check
          %p862 = pneg %p133
        $region42: #{tpu_custom_call.1} parent=31 // pred_check_branch
          %864 = sbr.rel (%p862) target = $region44
        $region43: #{tpu_custom_call.1} parent=31 // pred_region
          %p865 = scmp.lt.s32.totalorder %s56, 1
          %s866 = scalar_select %p865, %s56, 1
          %s867 = scalar_lea.vmem %s2, %s866
        $region44: #{tpu_custom_call.1} parent=31 // pred_fallthru
          _
        // Predicated region
        $region45: #{tpu_custom_call.1} parent=31 // pred_check
          %p868 = pneg %p159
        $region46: #{tpu_custom_call.1} parent=31 // pred_check_branch
          %870 = sbr.rel (%p868) target = $region48
        $region47: #{tpu_custom_call.1} parent=31 // pred_region
          %s871 = sand.u32 %s49, 1
          %s872 = scalar_lea.sflag [#allocation7], %s871
          %s873 = sand.u32 %s149, 1
          %s874 = scalar_lea.vmem [#allocation8], %s873
          %s876 = ssub.s32 16, 16
          %877 = vsyncadd %s872, %s876
          %s878 = smul.addr %s56, 16
          %s879 = scalar_lea.hbm %s3, %s878
          %s881 = sshll.u32 %s874, 4
          %s882 = int_to_ptr.vmem [resolvable:$true] %s881
          %884 = dma.hbm_to_vmem [thread:$0]  %s879, 16, %s882, %s872
        $region48: #{tpu_custom_call.1} parent=31 // pred_fallthru
          _
        // Predicated region
        $region49: #{tpu_custom_call.1} parent=31 // pred_check
          %p885 = pneg %p185
        $region50: #{tpu_custom_call.1} parent=31 // pred_check_branch
          %887 = sbr.rel (%p885) target = $region52
        $region51: #{tpu_custom_call.1} parent=31 // pred_region
          %p888 = scmp.lt.s32.totalorder %s57, 1
          %s889 = scalar_select %p888, %s57, 1
          %s890 = smul.addr %s889, 4
          %s891 = smul.addr %s890, 4
          %s892 = scalar_lea.vmem %s4, %s891
        $region52: #{tpu_custom_call.1} parent=31 // pred_fallthru
          _
        // Predicated region
        $region53: #{tpu_custom_call.1} parent=31 // pred_check
          %p893 = pneg %p211
        $region54: #{tpu_custom_call.1} parent=31 // pred_check_branch
          %895 = sbr.rel (%p893) target = $region56
        $region55: #{tpu_custom_call.1} parent=31 // pred_region
          %s896 = sand.u32 %s49, 1
          %s897 = scalar_lea.sflag [#allocation10], %s896
          %s898 = sand.u32 %s201, 1
          %s899 = scalar_lea.vmem [#allocation9], %s898
          %s901 = ssub.s32 16, 16
          %902 = vsyncadd %s897, %s901
          %s903 = smul.addr %s57, 16
          %s904 = scalar_lea.hbm %s5, %s903
          %s906 = sshll.u32 %s899, 4
          %s907 = int_to_ptr.vmem [resolvable:$true] %s906
          %909 = dma.hbm_to_vmem [thread:$0]  %s904, 16, %s907, %s897
        $region56: #{tpu_custom_call.1} parent=31 // pred_fallthru
          _
        // Predicated region
        $region57: #{tpu_custom_call.1} parent=31 // pred_check
          %p910 = pneg %p237
        $region58: #{tpu_custom_call.1} parent=31 // pred_check_branch
          %912 = sbr.rel (%p910) target = $region60
        $region59: #{tpu_custom_call.1} parent=31 // pred_region
          %p913 = scmp.lt.s32.totalorder %s57, 1
          %s914 = scalar_select %p913, %s57, 1
          %s915 = smul.addr %s914, 4
          %s916 = smul.addr %s915, 4
          %s917 = scalar_lea.vmem %s6, %s916
        $region60: #{tpu_custom_call.1} parent=31 // pred_fallthru
          _
        // Predicated region
        $region61: #{tpu_custom_call.1} parent=31 // pred_check
          %p918 = pneg %p263
        $region62: #{tpu_custom_call.1} parent=31 // pred_check_branch
          %920 = sbr.rel (%p918) target = $region64
        $region63: #{tpu_custom_call.1} parent=31 // pred_region
          %p921 = scmp.lt.s32.totalorder %s57, 1
          %s922 = scalar_select %p921, %s57, 1
          %s923 = scalar_lea.vmem %s7, %s922
        $region64: #{tpu_custom_call.1} parent=31 // pred_fallthru
          _
        // Predicated region
        $region65: #{tpu_custom_call.1} parent=31 // pred_check
          %p924 = pneg %p289
        $region66: #{tpu_custom_call.1} parent=31 // pred_check_branch
          %926 = sbr.rel (%p924) target = $region68
        $region67: #{tpu_custom_call.1} parent=31 // pred_region
          %p927 = scmp.lt.s32.totalorder %s57, 1
          %s928 = scalar_select %p927, %s57, 1
          %s929 = smul.addr %s928, 4
          %s930 = smul.addr %s929, 4
          %s931 = scalar_lea.vmem %s8, %s930
        $region68: #{tpu_custom_call.1} parent=31 // pred_fallthru
          _
        // Predicated region
        $region69: #{tpu_custom_call.1} parent=31 // pred_check
          %p932 = pneg %p315
        $region70: #{tpu_custom_call.1} parent=31 // pred_check_branch
          %934 = sbr.rel (%p932) target = $region72
        $region71: #{tpu_custom_call.1} parent=31 // pred_region
          %p935 = scmp.lt.s32.totalorder %s57, 1
          %s936 = scalar_select %p935, %s57, 1
          %s937 = scalar_lea.vmem %s9, %s936
        $region72: #{tpu_custom_call.1} parent=31 // pred_fallthru
          _
        // Predicated region
        $region73: #{tpu_custom_call.1} parent=31 // pred_check
          %p938 = pneg %p341
        $region74: #{tpu_custom_call.1} parent=31 // pred_check_branch
          %940 = sbr.rel (%p938) target = $region76
        $region75: #{tpu_custom_call.1} parent=31 // pred_region
          %s941 = sand.u32 %s49, 1
          %s942 = scalar_lea.sflag [#allocation10], %s941
          %s943 = sand.u32 %s331, 1
          %s944 = smul.addr %s943, 16
          %s945 = scalar_lea.vmem [#allocation11], %s944
          %s947 = ssub.s32 256, 256
          %948 = vsyncadd %s942, %s947
          %s949 = smul.addr %s57, 4
          %s950 = smul.addr %s949, 64
          %s951 = scalar_lea.hbm %s10, %s950
          %s952 = sshll.u32 %s945, 4
          %s953 = int_to_ptr.vmem [resolvable:$true] %s952
          %958 = dma.hbm_to_vmem [thread:$0]  %s951, 256, %s953, %s942, 64, 64, 4
        $region76: #{tpu_custom_call.1} parent=31 // pred_fallthru
          _
        // Predicated region
        $region77: #{tpu_custom_call.1} parent=31 // pred_check
          %p959 = pneg %p367
        $region78: #{tpu_custom_call.1} parent=31 // pred_check_branch
          %961 = sbr.rel (%p959) target = $region80
        $region79: #{tpu_custom_call.1} parent=31 // pred_region
          %p962 = scmp.lt.s32.totalorder %s57, 1
          %s963 = scalar_select %p962, %s57, 1
          %s964 = scalar_lea.vmem %s11, %s963
        $region80: #{tpu_custom_call.1} parent=31 // pred_fallthru
          _
        // Predicated region
        $region81: #{tpu_custom_call.1} parent=31 // pred_check
          %p965 = pneg %p393
        $region82: #{tpu_custom_call.1} parent=31 // pred_check_branch
          %967 = sbr.rel (%p965) target = $region84
        $region83: #{tpu_custom_call.1} parent=31 // pred_region
          %s968 = sand.u32 %s49, 1
          %s969 = scalar_lea.sflag [#allocation13], %s968
          %s970 = sand.u32 %s383, 1
          %s971 = smul.addr %s970, 16
          %s972 = scalar_lea.vmem [#allocation12], %s971
          %s974 = ssub.s32 256, 256
          %975 = vsyncadd %s969, %s974
          %s976 = smul.addr %s57, 4
          %s977 = smul.addr %s976, 64
          %s978 = scalar_lea.hbm %s12, %s977
          %s979 = sshll.u32 %s972, 4
          %s980 = int_to_ptr.vmem [resolvable:$true] %s979
          %985 = dma.hbm_to_vmem [thread:$0]  %s978, 256, %s980, %s969, 64, 64, 4
        $region84: #{tpu_custom_call.1} parent=31 // pred_fallthru
          _
        // Predicated region
        $region85: #{tpu_custom_call.1} parent=31 // pred_check
          %p986 = pneg %p419
        $region86: #{tpu_custom_call.1} parent=31 // pred_check_branch
          %988 = sbr.rel (%p986) target = $region88
        $region87: #{tpu_custom_call.1} parent=31 // pred_region
          %p989 = scmp.lt.s32.totalorder %s57, 1
          %s990 = scalar_select %p989, %s57, 1
          %s991 = scalar_lea.vmem %s13, %s990
        $region88: #{tpu_custom_call.1} parent=31 // pred_fallthru
          _
        // Predicated region
        $region89: #{tpu_custom_call.1} parent=31 // pred_check
          %p992 = pneg %p445
        $region90: #{tpu_custom_call.1} parent=31 // pred_check_branch
          %994 = sbr.rel (%p992) target = $region92
        $region91: #{tpu_custom_call.1} parent=31 // pred_region
          %s995 = sand.u32 %s49, 1
          %s996 = scalar_lea.sflag [#allocation13], %s995
          %s997 = sand.u32 %s435, 1
          %s998 = smul.addr %s997, 16
          %s999 = scalar_lea.vmem [#allocation14], %s998
          %s1001 = ssub.s32 256, 256
          %1002 = vsyncadd %s996, %s1001
          %s1003 = smul.addr %s57, 4
          %s1004 = smul.addr %s1003, 64
          %s1005 = scalar_lea.hbm %s14, %s1004
          %s1006 = sshll.u32 %s999, 4
          %s1007 = int_to_ptr.vmem [resolvable:$true] %s1006
          %1012 = dma.hbm_to_vmem [thread:$0]  %s1005, 256, %s1007, %s996, 64, 64, 4
        $region92: #{tpu_custom_call.1} parent=31 // pred_fallthru
          _
        // Predicated region
        $region93: #{tpu_custom_call.1} parent=31 // pred_check
          %p1013 = pneg %p471
        $region94: #{tpu_custom_call.1} parent=31 // pred_check_branch
          %1015 = sbr.rel (%p1013) target = $region96
        $region95: #{tpu_custom_call.1} parent=31 // pred_region
          %p1016 = scmp.lt.s32.totalorder %s57, 1
          %s1017 = scalar_select %p1016, %s57, 1
          %s1018 = scalar_lea.vmem %s15, %s1017
        $region96: #{tpu_custom_call.1} parent=31 // pred_fallthru
          _
        // Predicated region
        $region97: #{tpu_custom_call.1} parent=31 // pred_check
          %p1019 = pneg %p497
        $region98: #{tpu_custom_call.1} parent=31 // pred_check_branch
          %1021 = sbr.rel (%p1019) target = $region100
        $region99: #{tpu_custom_call.1} parent=31 // pred_region
          %p1022 = scmp.lt.s32.totalorder %s57, 1
          %s1023 = scalar_select %p1022, %s57, 1
          %s1024 = smul.addr %s1023, 8
          %s1025 = smul.addr %s1024, 4
          %s1026 = scalar_lea.vmem %s16, %s1025
        $region100: #{tpu_custom_call.1} parent=31 // pred_fallthru
          _
        // Predicated region
        $region101: #{tpu_custom_call.1} parent=31 // pred_check
          %p1027 = pneg %p523
        $region102: #{tpu_custom_call.1} parent=31 // pred_check_branch
          %1029 = sbr.rel (%p1027) target = $region104
        $region103: #{tpu_custom_call.1} parent=31 // pred_region
          %p1030 = scmp.lt.s32.totalorder %s57, 1
          %s1031 = scalar_select %p1030, %s57, 1
          %s1032 = scalar_lea.vmem %s17, %s1031
        $region104: #{tpu_custom_call.1} parent=31 // pred_fallthru
          _
        // Predicated region
        $region105: #{tpu_custom_call.1} parent=31 // pred_check
          %p1033 = pneg %p549
        $region106: #{tpu_custom_call.1} parent=31 // pred_check_branch
          %1035 = sbr.rel (%p1033) target = $region108
        $region107: #{tpu_custom_call.1} parent=31 // pred_region
          %p1036 = scmp.lt.s32.totalorder %s57, 1
          %s1037 = scalar_select %p1036, %s57, 1
          %s1038 = scalar_lea.vmem %s18, %s1037
        $region108: #{tpu_custom_call.1} parent=31 // pred_fallthru
          _
        // Predicated region
        $region109: #{tpu_custom_call.1} parent=31 // pred_check
          %p1039 = pneg %p575
        $region110: #{tpu_custom_call.1} parent=31 // pred_check_branch
          %1041 = sbr.rel (%p1039) target = $region112
        $region111: #{tpu_custom_call.1} parent=31 // pred_region
          %p1042 = scmp.lt.s32.totalorder %s57, 1
          %s1043 = scalar_select %p1042, %s57, 1
          %s1044 = scalar_lea.vmem %s19, %s1043
        $region112: #{tpu_custom_call.1} parent=31 // pred_fallthru
          _
        // Predicated region
        $region113: #{tpu_custom_call.1} parent=31 // pred_check
          %p1045 = pneg %p601
        $region114: #{tpu_custom_call.1} parent=31 // pred_check_branch
          %1047 = sbr.rel (%p1045) target = $region116
        $region115: #{tpu_custom_call.1} parent=31 // pred_region
          %p1048 = scmp.lt.s32.totalorder %s57, 1
          %s1049 = scalar_select %p1048, %s57, 1
          %s1050 = scalar_lea.vmem %s20, %s1049
        $region116: #{tpu_custom_call.1} parent=31 // pred_fallthru
          _
        // Predicated region
        $region117: #{tpu_custom_call.1} parent=31 // pred_check
          %p1051 = pneg %p627
        $region118: #{tpu_custom_call.1} parent=31 // pred_check_branch
          %1053 = sbr.rel (%p1051) target = $region120
        $region119: #{tpu_custom_call.1} parent=31 // pred_region
          %p1054 = scmp.lt.s32.totalorder %s57, 1
          %s1055 = scalar_select %p1054, %s57, 1
          %s1056 = scalar_lea.vmem %s21, %s1055
        $region120: #{tpu_custom_call.1} parent=31 // pred_fallthru
          _
        // Predicated region
        $region121: #{tpu_custom_call.1} parent=31 // pred_check
          %p1057 = pneg %p653
        $region122: #{tpu_custom_call.1} parent=31 // pred_check_branch
          %1059 = sbr.rel (%p1057) target = $region124
        $region123: #{tpu_custom_call.1} parent=31 // pred_region
          %p1060 = scmp.lt.s32.totalorder %s57, 1
          %s1061 = scalar_select %p1060, %s57, 1
          %s1062 = scalar_lea.vmem %s22, %s1061
        $region124: #{tpu_custom_call.1} parent=31 // pred_fallthru
          _
        // Predicated region
        $region125: #{tpu_custom_call.1} parent=31 // pred_check
          %p1063 = pneg %p679
        $region126: #{tpu_custom_call.1} parent=31 // pred_check_branch
          %1065 = sbr.rel (%p1063) target = $region128
        $region127: #{tpu_custom_call.1} parent=31 // pred_region
          %p1066 = scmp.lt.s32.totalorder %s57, 1
          %s1067 = scalar_select %p1066, %s57, 1
          %s1068 = scalar_lea.vmem %s23, %s1067
        $region128: #{tpu_custom_call.1} parent=31 // pred_fallthru
          _
      $region32: #{tpu_custom_call.1} parent=5 // pred_fallthru
        _
      %p1069 = scmp.le.s32.totalorder 1, %s49
      %p1070 = scmp.lt.s32.totalorder %s49, 5
      %p1071 = pnand %p1069, %p1070
      %p1072 = pneg %p1071
      // Predicated region
      $region129: #{tpu_custom_call.1} parent=5 // pred_check
        _
      $region130: #{tpu_custom_call.1} parent=5 // pred_check_branch
        %1074 = sbr.rel (%p1071) target = $region132
      $region131: #{tpu_custom_call.1} parent=5 // pred_region
        %s1075 = ssub.s32 %s49, 1
        %s1076 = sand.u32 %s74, 1
        %s1077 = scalar_lea.sflag [#allocation4], %s1076
        %s1078 = sand.u32 %s74, 1
        %s1079 = smul.addr %s1078, 8
        %s1080 = scalar_lea.vmem [#allocation3], %s1079
        // Predicated region
        $region133: #{tpu_custom_call.1} parent=131 // pred_check
          %p1081 = pneg %p87
        $region134: #{tpu_custom_call.1} parent=131 // pred_check_branch
          %1083 = sbr.rel (%p1081) target = $region136
        $region135: #{tpu_custom_call.1} parent=131 // pred_region
          %1084 = dma.done %s1077, 128
        $region136: #{tpu_custom_call.1} parent=131 // pred_fallthru
          _
        %s1085 = sand.u32 %s54, 1
        %s1086 = scalar_lea.sflag [#allocation7], %s1085
        %s1087 = sand.u32 %s100, 1
        %s1088 = smul.addr %s1087, 8
        %s1089 = scalar_lea.vmem [#allocation6], %s1088
        // Predicated region
        $region137: #{tpu_custom_call.1} parent=131 // pred_check
          %p1090 = pneg %p113
        $region138: #{tpu_custom_call.1} parent=131 // pred_check_branch
          %1092 = sbr.rel (%p1090) target = $region140
        $region139: #{tpu_custom_call.1} parent=131 // pred_region
          %1093 = dma.done %s1086, 128
        $region140: #{tpu_custom_call.1} parent=131 // pred_fallthru
          _
        %s1094 = sand.u32 %s54, 1
        %s1095 = scalar_lea.sflag [#allocation7], %s1094
        %s1096 = sand.u32 %s152, 1
        %s1097 = scalar_lea.vmem [#allocation8], %s1096
        // Predicated region
        $region141: #{tpu_custom_call.1} parent=131 // pred_check
          %p1098 = pneg %p165
        $region142: #{tpu_custom_call.1} parent=131 // pred_check_branch
          %1100 = sbr.rel (%p1098) target = $region144
        $region143: #{tpu_custom_call.1} parent=131 // pred_region
          %1101 = dma.done %s1095, 16
        $region144: #{tpu_custom_call.1} parent=131 // pred_fallthru
          _
        %s1102 = sand.u32 %s54, 1
        %s1103 = scalar_lea.sflag [#allocation10], %s1102
        %s1104 = sand.u32 %s204, 1
        %s1105 = scalar_lea.vmem [#allocation9], %s1104
        // Predicated region
        $region145: #{tpu_custom_call.1} parent=131 // pred_check
          %p1106 = pneg %p217
        $region146: #{tpu_custom_call.1} parent=131 // pred_check_branch
          %1108 = sbr.rel (%p1106) target = $region148
        $region147: #{tpu_custom_call.1} parent=131 // pred_region
          %1109 = dma.done %s1103, 16
        $region148: #{tpu_custom_call.1} parent=131 // pred_fallthru
          _
        %s1110 = sand.u32 %s54, 1
        %s1111 = scalar_lea.sflag [#allocation10], %s1110
        %s1112 = sand.u32 %s334, 1
        %s1113 = smul.addr %s1112, 16
        %s1114 = scalar_lea.vmem [#allocation11], %s1113
        // Predicated region
        $region149: #{tpu_custom_call.1} parent=131 // pred_check
          %p1115 = pneg %p347
        $region150: #{tpu_custom_call.1} parent=131 // pred_check_branch
          %1117 = sbr.rel (%p1115) target = $region152
        $region151: #{tpu_custom_call.1} parent=131 // pred_region
          %1118 = dma.done %s1111, 256
        $region152: #{tpu_custom_call.1} parent=131 // pred_fallthru
          _
        %s1119 = sand.u32 %s54, 1
        %s1120 = scalar_lea.sflag [#allocation13], %s1119
        %s1121 = sand.u32 %s386, 1
        %s1122 = smul.addr %s1121, 16
        %s1123 = scalar_lea.vmem [#allocation12], %s1122
        // Predicated region
        $region153: #{tpu_custom_call.1} parent=131 // pred_check
          %p1124 = pneg %p399
        $region154: #{tpu_custom_call.1} parent=131 // pred_check_branch
          %1126 = sbr.rel (%p1124) target = $region156
        $region155: #{tpu_custom_call.1} parent=131 // pred_region
          %1127 = dma.done %s1120, 256
        $region156: #{tpu_custom_call.1} parent=131 // pred_fallthru
          _
        %s1128 = sand.u32 %s54, 1
        %s1129 = scalar_lea.sflag [#allocation13], %s1128
        %s1130 = sand.u32 %s438, 1
        %s1131 = smul.addr %s1130, 16
        %s1132 = scalar_lea.vmem [#allocation14], %s1131
        // Predicated region
        $region157: #{tpu_custom_call.1} parent=131 // pred_check
          %p1133 = pneg %p451
        $region158: #{tpu_custom_call.1} parent=131 // pred_check_branch
          %1135 = sbr.rel (%p1133) target = $region160
        $region159: #{tpu_custom_call.1} parent=131 // pred_region
          %1136 = dma.done %s1129, 256
        $region160: #{tpu_custom_call.1} parent=131 // pred_fallthru
          _
        %s1137 = sand.u32 %s74, 1
        %s1138 = scalar_lea.sflag [#allocation4], %s1137
        %s1139 = sand.u32 %s74, 1
        %s1140 = smul.addr %s1139, 8
        %s1141 = scalar_lea.vmem [#allocation3], %s1140
        %p1142 = pneg %p87
        %p1143 = pneg %p84
        %s1144 = sand.u32 %s54, 1
        %s1145 = scalar_lea.sflag [#allocation7], %s1144
        %s1146 = sand.u32 %s100, 1
        %s1147 = smul.addr %s1146, 8
        %s1148 = scalar_lea.vmem [#allocation6], %s1147
        %p1149 = pneg %p113
        %p1150 = pneg %p110
        %p1151 = scmp.lt.s32.totalorder %s58, 1
        %s1152 = scalar_select %p1151, %s58, 1
        %s1153 = scalar_lea.vmem %s2, %s1152
        %p1154 = pneg %p139
        %p1155 = pneg %p136
        %s1156 = sand.u32 %s54, 1
        %s1157 = scalar_lea.sflag [#allocation7], %s1156
        %s1158 = sand.u32 %s152, 1
        %s1159 = scalar_lea.vmem [#allocation8], %s1158
        %p1160 = pneg %p165
        %p1161 = pneg %p162
        %p1162 = scmp.lt.s32.totalorder %s59, 1
        %s1163 = scalar_select %p1162, %s59, 1
        %s1164 = smul.addr %s1163, 4
        %s1165 = smul.addr %s1164, 4
        %s1166 = scalar_lea.vmem %s4, %s1165
        %p1167 = pneg %p191
        %p1168 = pneg %p188
        %s1169 = sand.u32 %s54, 1
        %s1170 = scalar_lea.sflag [#allocation10], %s1169
        %s1171 = sand.u32 %s204, 1
        %s1172 = scalar_lea.vmem [#allocation9], %s1171
        %p1173 = pneg %p217
        %p1174 = pneg %p214
        %p1175 = scmp.lt.s32.totalorder %s59, 1
        %s1176 = scalar_select %p1175, %s59, 1
        %s1177 = smul.addr %s1176, 4
        %s1178 = smul.addr %s1177, 4
        %s1179 = scalar_lea.vmem %s6, %s1178
        %p1180 = pneg %p243
        %p1181 = pneg %p240
        %p1182 = scmp.lt.s32.totalorder %s59, 1
        %s1183 = scalar_select %p1182, %s59, 1
        %s1184 = scalar_lea.vmem %s7, %s1183
        %p1185 = pneg %p269
        %p1186 = pneg %p266
        %p1187 = scmp.lt.s32.totalorder %s59, 1
        %s1188 = scalar_select %p1187, %s59, 1
        %s1189 = smul.addr %s1188, 4
        %s1190 = smul.addr %s1189, 4
        %s1191 = scalar_lea.vmem %s8, %s1190
        %p1192 = pneg %p295
        %p1193 = pneg %p292
        %p1194 = scmp.lt.s32.totalorder %s59, 1
        %s1195 = scalar_select %p1194, %s59, 1
        %s1196 = scalar_lea.vmem %s9, %s1195
        %p1197 = pneg %p321
        %p1198 = pneg %p318
        %s1199 = sand.u32 %s54, 1
        %s1200 = scalar_lea.sflag [#allocation10], %s1199
        %s1201 = sand.u32 %s334, 1
        %s1202 = smul.addr %s1201, 16
        %s1203 = scalar_lea.vmem [#allocation11], %s1202
        %p1204 = pneg %p347
        %p1205 = pneg %p344
        %p1206 = scmp.lt.s32.totalorder %s59, 1
        %s1207 = scalar_select %p1206, %s59, 1
        %s1208 = scalar_lea.vmem %s11, %s1207
        %p1209 = pneg %p373
        %p1210 = pneg %p370
        %s1211 = sand.u32 %s54, 1
        %s1212 = scalar_lea.sflag [#allocation13], %s1211
        %s1213 = sand.u32 %s386, 1
        %s1214 = smul.addr %s1213, 16
        %s1215 = scalar_lea.vmem [#allocation12], %s1214
        %p1216 = pneg %p399
        %p1217 = pneg %p396
        %p1218 = scmp.lt.s32.totalorder %s59, 1
        %s1219 = scalar_select %p1218, %s59, 1
        %s1220 = scalar_lea.vmem %s13, %s1219
        %p1221 = pneg %p425
        %p1222 = pneg %p422
        %s1223 = sand.u32 %s54, 1
        %s1224 = scalar_lea.sflag [#allocation13], %s1223
        %s1225 = sand.u32 %s438, 1
        %s1226 = smul.addr %s1225, 16
        %s1227 = scalar_lea.vmem [#allocation14], %s1226
        %p1228 = pneg %p451
        %p1229 = pneg %p448
        %p1230 = scmp.lt.s32.totalorder %s59, 1
        %s1231 = scalar_select %p1230, %s59, 1
        %s1232 = scalar_lea.vmem %s15, %s1231
        %p1233 = pneg %p477
        %p1234 = pneg %p474
        %p1235 = scmp.lt.s32.totalorder %s59, 1
        %s1236 = scalar_select %p1235, %s59, 1
        %s1237 = smul.addr %s1236, 8
        %s1238 = smul.addr %s1237, 4
        %s1239 = scalar_lea.vmem %s16, %s1238
        %p1240 = pneg %p503
        %p1241 = pneg %p500
        %p1242 = scmp.lt.s32.totalorder %s59, 1
        %s1243 = scalar_select %p1242, %s59, 1
        %s1244 = scalar_lea.vmem %s17, %s1243
        %p1245 = pneg %p529
        %p1246 = pneg %p526
        %p1247 = scmp.lt.s32.totalorder %s59, 1
        %s1248 = scalar_select %p1247, %s59, 1
        %s1249 = scalar_lea.vmem %s18, %s1248
        %p1250 = pneg %p555
        %p1251 = pneg %p552
        %p1252 = scmp.lt.s32.totalorder %s59, 1
        %s1253 = scalar_select %p1252, %s59, 1
        %s1254 = scalar_lea.vmem %s19, %s1253
        %p1255 = pneg %p581
        %p1256 = pneg %p578
        %p1257 = scmp.lt.s32.totalorder %s59, 1
        %s1258 = scalar_select %p1257, %s59, 1
        %s1259 = scalar_lea.vmem %s20, %s1258
        %p1260 = pneg %p607
        %p1261 = pneg %p604
        %p1262 = scmp.lt.s32.totalorder %s59, 1
        %s1263 = scalar_select %p1262, %s59, 1
        %s1264 = scalar_lea.vmem %s21, %s1263
        %p1265 = pneg %p633
        %p1266 = pneg %p630
        %p1267 = scmp.lt.s32.totalorder %s59, 1
        %s1268 = scalar_select %p1267, %s59, 1
        %s1269 = scalar_lea.vmem %s22, %s1268
        %p1270 = pneg %p659
        %p1271 = pneg %p656
        %p1272 = scmp.lt.s32.totalorder %s59, 1
        %s1273 = scalar_select %p1272, %s59, 1
        %s1274 = scalar_lea.vmem %s23, %s1273
        %p1275 = pneg %p685
        %p1276 = pneg %p682
        %p1277 = pneg %p706
        %p1278 = pneg %p703
        %p1279 = pneg %p727
        %p1280 = pneg %p724
        %p1281 = pneg %p748
        %p1282 = pneg %p745
        %p1283 = pneg %p769
        %p1284 = pneg %p766
        %p1285 = pneg %p795
        %p1286 = pneg %p792
        %s1287 = sand.u32 %s782, 1
        %s1288 = scalar_lea.sflag [#allocation5], %s1287
        %s1289 = sand.u32 %s782, 1
        %s1290 = smul.addr %s1289, 8
        %s1291 = scalar_lea.vmem [#allocation15], %s1290
        %p1292 = scmp.lt.s32.totalorder %s58, 1
        %s1293 = scalar_select %p1292, %s58, 1
        %s1294 = scalar_lea.vmem %s2, %s1293
        %p1295 = scmp.lt.s32.totalorder %s59, 1
        %s1296 = scalar_select %p1295, %s59, 1
        %s1297 = smul.addr %s1296, 4
        %s1298 = smul.addr %s1297, 4
        %s1299 = scalar_lea.vmem %s4, %s1298
        %p1300 = scmp.lt.s32.totalorder %s59, 1
        %s1301 = scalar_select %p1300, %s59, 1
        %s1302 = smul.addr %s1301, 4
        %s1303 = smul.addr %s1302, 4
        %s1304 = scalar_lea.vmem %s6, %s1303
        %p1305 = scmp.lt.s32.totalorder %s59, 1
        %s1306 = scalar_select %p1305, %s59, 1
        %s1307 = scalar_lea.vmem %s7, %s1306
        %p1308 = scmp.lt.s32.totalorder %s59, 1
        %s1309 = scalar_select %p1308, %s59, 1
        %s1310 = smul.addr %s1309, 4
        %s1311 = smul.addr %s1310, 4
        %s1312 = scalar_lea.vmem %s8, %s1311
        %p1313 = scmp.lt.s32.totalorder %s59, 1
        %s1314 = scalar_select %p1313, %s59, 1
        %s1315 = scalar_lea.vmem %s9, %s1314
        %p1316 = scmp.lt.s32.totalorder %s59, 1
        %s1317 = scalar_select %p1316, %s59, 1
        %s1318 = scalar_lea.vmem %s11, %s1317
        %p1319 = scmp.lt.s32.totalorder %s59, 1
        %s1320 = scalar_select %p1319, %s59, 1
        %s1321 = scalar_lea.vmem %s13, %s1320
        %p1322 = scmp.lt.s32.totalorder %s59, 1
        %s1323 = scalar_select %p1322, %s59, 1
        %s1324 = scalar_lea.vmem %s15, %s1323
        %p1325 = scmp.lt.s32.totalorder %s59, 1
        %s1326 = scalar_select %p1325, %s59, 1
        %s1327 = smul.addr %s1326, 8
        %s1328 = smul.addr %s1327, 4
        %s1329 = scalar_lea.vmem %s16, %s1328
        %p1330 = scmp.lt.s32.totalorder %s59, 1
        %s1331 = scalar_select %p1330, %s59, 1
        %s1332 = scalar_lea.vmem %s17, %s1331
        %p1333 = scmp.lt.s32.totalorder %s59, 1
        %s1334 = scalar_select %p1333, %s59, 1
        %s1335 = scalar_lea.vmem %s18, %s1334
        %p1336 = scmp.lt.s32.totalorder %s59, 1
        %s1337 = scalar_select %p1336, %s59, 1
        %s1338 = scalar_lea.vmem %s19, %s1337
        %p1339 = scmp.lt.s32.totalorder %s59, 1
        %s1340 = scalar_select %p1339, %s59, 1
        %s1341 = scalar_lea.vmem %s20, %s1340
        %p1342 = scmp.lt.s32.totalorder %s59, 1
        %s1343 = scalar_select %p1342, %s59, 1
        %s1344 = scalar_lea.vmem %s21, %s1343
        %p1345 = scmp.lt.s32.totalorder %s59, 1
        %s1346 = scalar_select %p1345, %s59, 1
        %s1347 = scalar_lea.vmem %s22, %s1346
        %p1348 = scmp.lt.s32.totalorder %s59, 1
        %s1349 = scalar_select %p1348, %s59, 1
        %s1350 = scalar_lea.vmem %s23, %s1349
        %p1352 = scmp.eq.s32.totalorder %s59, 0
        // Predicated region
        $region161: #{tpu_custom_call.1} parent=131 // pred_check
          %p1353 = pneg %p1352
        $region162: #{tpu_custom_call.1} parent=131 // pred_check_branch
          %1355 = sbr.rel (%p1353) target = $region164
        $region163: #{tpu_custom_call.1} parent=131 // pred_region
          %v1356 = vld [vmem:[%s1080] sm:$0xff]
          %vm1357 = vcmask 261120
          %1358 = vst.msk [vmem:[#allocation2] sm:$0xff] %vm1357, %v1356
        $region164: #{tpu_custom_call.1} parent=131 // pred_fallthru
          _
        %v1359 = vlaneseq
        %v1360 = vshrl.u32 %v1359, 7
        %v1361 = vlaneseq
        %v1362 = vand.u32 %v1361, 127
        %vm1363 = vcmp.gt.s32.totalorder %v1362, %v1360
        %v1364 = vsel %vm1363, -1e+30, 0.0
        %v1365 = vld [vmem:[%s1294] sm:$0x1]
        %v1367 = vlaneseq
        %v1368 = vshrl.u32 %v1367, 7
        %v1369 = vsub.s32 0, %v1368
        %v1370 = vrot.slane %v1365, %v1369
        %v1372 = vadd.f32 %v1364, %v1370
        %v1373 = vld [vmem:[%s1097] sm:$0x1]
        %v1374 = vld [vmem:[#allocation2] sm:$0xff]
        %v1375 = vld [vmem:[%s1089] sm:$0xff]
        %v1376 = vld [vmem:[%s1335] sm:$0x1]
        %v1377 = vld [vmem:[%s1338] sm:$0x1]
        %vm1378 = vcmask 261120
        %v1379 = vsel %vm1378, %v1374, 0.0
        %1380 = vadd.xlane.f32.xlu0 %v1379
        %v1381 = vpop.xlane.xlu0 %1380
        %v1382 = vrcp.pop 32.0
        %v1383 = vmul.f32 %v1381, %v1382
        %v1384 = vmul.f32 %v1374, %v1374
        %v1385 = vsel %vm1378, %v1384, 0.0
        %1386 = vadd.xlane.f32.xlu0 %v1385
        %v1387 = vpop.xlane.xlu0 %1386
        %v1388 = vmul.f32 %v1387, %v1382
        %v1389 = vmul.f32 %v1383, %v1383
        %v1390 = vsub.f32 %v1388, %v1389
        %v1391 = vsub.f32 %v1374, %v1383
        %v1392 = vadd.f32 %v1390, 1e-05
        %v1393 = vrsqrt.pop %v1392
        %v1394 = vmul.f32 %v1391, %v1393
        %v1396 = vlaneseq
        %v1397 = vshrl.u32 %v1396, 7
        %v1398 = vsub.s32 0, %v1397
        %v1399 = vrot.slane %v1376, %v1398
        %v1401 = vmul.f32 %v1394, %v1399
        %v1403 = vlaneseq
        %v1404 = vshrl.u32 %v1403, 7
        %v1405 = vsub.s32 0, %v1404
        %v1406 = vrot.slane %v1377, %v1405
        %v1408 = vadd.f32 %v1401, %v1406
        %v1409 = vpack.c.bf16 %v1408, %v1408
        %v1410 = vld [vmem:[%s1299] sm:$0xf]
        %v1411 = vld [vmem:[%s1299 + $0x4] sm:$0xf]
        %v1412 = vld [vmem:[%s1299 + $0x8] sm:$0xf]
        %v1413 = vld [vmem:[%s1299 + $0xc] sm:$0xf]
        %v1414 = vld [vmem:[%s1105] sm:$0x1]
        %v1416 = vlaneseq
        %v1417 = vshrl.u32 %v1416, 7
        %v1418 = vsub.s32 0, %v1417
        %v1419 = vrot.slane %v1414, %v1418
        %v1425 = vunpack.c.l.b16 %v1410
        %v1426 = vunpack.c.l.b16 %v1411
        %v1427 = vunpack.c.l.b16 %v1412
        %v1428 = vunpack.c.l.b16 %v1413
        %v1429 = vpack.c.b16 %v1426, %v1425
        %v1430 = vpack.c.b16 %v1428, %v1427
        %v1434 = vsel %vm1378, %v1409, 0
        %1436 = vmatprep.subr.bf16.mxu0 0
        %1437 = vmatpush1.bf16.msra.mxu0 %v1429
        %1438 = vmatprep.subr.bf16.mxu0 0
        %1439 = vmatpush1.bf16.msra.mxu0 %v1430
        %1440 = vmatprep.subr.bf16.mxu0 0
        %1441 = vmatpush1.bf16.msra.mxu0 0
        %1442 = vmatprep.subr.bf16.mxu0 0
        %1443 = vmatpush1.bf16.msra.mxu0 0
        %1444 = vmatprep.subr.bf16.mxu0 0
        %1445 = vmatpush1.bf16.msra.mxu0 0
        %1446 = vmatprep.subr.bf16.mxu0 0
        %1447 = vmatpush1.bf16.msra.mxu0 0
        %1448 = vmatprep.subr.bf16.mxu0 0
        %1449 = vmatpush1.bf16.msra.mxu0 0
        %1450 = vmatprep.subr.bf16.mxu0 0
        %1451 = vmatpush1.bf16.msra.mxu0 0
        %1452 = vmatprep.subr.bf16.mxu0 0
        %1453 = vmatpush1.bf16.msra.mxu0 0
        %1454 = vmatprep.subr.bf16.mxu0 0
        %1455 = vmatpush1.bf16.msra.mxu0 0
        %1456 = vmatprep.subr.bf16.mxu0 0
        %1457 = vmatpush1.bf16.msra.mxu0 0
        %1458 = vmatprep.subr.bf16.mxu0 0
        %1459 = vmatpush1.bf16.msra.mxu0 0
        %1460 = vmatprep.subr.bf16.mxu0 0
        %1461 = vmatpush1.bf16.msra.mxu0 0
        %1462 = vmatprep.subr.bf16.mxu0 0
        %1463 = vmatpush1.bf16.msra.mxu0 0
        %1464 = vmatprep.subr.bf16.mxu0 0
        %1465 = vmatpush1.bf16.msra.mxu0 0
        %1466 = vmatprep.subr.bf16.mxu0 0
        %1467 = vmatpush1.bf16.msra.mxu0 0
        %1468 = vmatprep.mubr.bf16.mxu0 0
        %1469 = vmatmul.mubr.bf16.gmra.mrb[0].mxu0 %v1434
        %v1470 = vpop.f32.mrb[0].mxu0
        %v1471 = vadd.f32 %v1419, %v1470
        %v1472 = vpop.f32.mrb[0].mxu0
        %v1473 = vpop.f32.mrb[0].mxu0
        %v1474 = vpop.f32.mrb[0].mxu0
        %1475 = vdwg.mxu0
        %v1476 = vld [vmem:[%s1304] sm:$0xf]
        %v1477 = vld [vmem:[%s1304 + $0x4] sm:$0xf]
        %v1478 = vld [vmem:[%s1304 + $0x8] sm:$0xf]
        %v1479 = vld [vmem:[%s1304 + $0xc] sm:$0xf]
        %v1480 = vld [vmem:[%s1307] sm:$0x1]
        %v1481 = vpack.c.bf16 %v1471, %v1471
        %1483 = vrot.lane.b32.xlu0 %v1481, 96
        %v1484 = vpop.permute.xlu0 %1483
        %vm1485 = vcmask 64512
        %v1487 = vsel %vm1485, %v1481, 0
        %v1490 = vsel %vm1485, %v1484, 0
        %1492 = vmatprep.subr.bf16.mxu0 0
        %1493 = vmatpush1.bf16.xpose.msra.mxu0 %v1490
        %1494 = vmatprep.subr.bf16.mxu0 0
        %1495 = vmatpush1.bf16.xpose.msra.mxu0 0
        %1496 = vmatprep.subr.bf16.mxu0 0
        %1497 = vmatpush1.bf16.xpose.msra.mxu0 0
        %1498 = vmatprep.subr.bf16.mxu0 0
        %1499 = vmatpush1.bf16.xpose.msra.mxu0 0
        %1500 = vmatprep.subr.bf16.mxu0 0
        %1501 = vmatpush1.bf16.xpose.msra.mxu0 0
        %1502 = vmatprep.subr.bf16.mxu0 0
        %1503 = vmatpush1.bf16.xpose.msra.mxu0 0
        %1504 = vmatprep.subr.bf16.mxu0 0
        %1505 = vmatpush1.bf16.xpose.msra.mxu0 0
        %1506 = vmatprep.subr.bf16.mxu0 0
        %1507 = vmatpush1.bf16.xpose.msra.mxu0 0
        %1508 = vmatprep.subr.bf16.mxu0 0
        %1509 = vmatpush1.bf16.xpose.msra.mxu0 0
        %1510 = vmatprep.subr.bf16.mxu0 0
        %1511 = vmatpush1.bf16.xpose.msra.mxu0 0
        %1512 = vmatprep.subr.bf16.mxu0 0
        %1513 = vmatpush1.bf16.xpose.msra.mxu0 0
        %1514 = vmatprep.subr.bf16.mxu0 0
        %1515 = vmatpush1.bf16.xpose.msra.mxu0 0
        %1516 = vmatprep.subr.bf16.mxu0 0
        %1517 = vmatpush1.bf16.xpose.msra.mxu0 0
        %1518 = vmatprep.subr.bf16.mxu0 0
        %1519 = vmatpush1.bf16.xpose.msra.mxu0 0
        %1520 = vmatprep.subr.bf16.mxu0 0
        %1521 = vmatpush1.bf16.xpose.msra.mxu0 0
        %1522 = vmatprep.subr.bf16.mxu0 0
        %1523 = vmatpush1.bf16.xpose.msra.mxu0 0
        %1524 = vmatprep.mubr.bf16.mxu0 0
        %1525 = vmatmul.mubr.bf16.gmra.mrb[0].mxu0 %v1487
        %v1526 = vpop.f32.mrb[0].mxu0
        %v1527 = vadd.f32 %v1372, %v1526
        %v1528 = vpop.f32.mrb[0].mxu0
        %v1529 = vpop.f32.mrb[0].mxu0
        %v1530 = vpop.f32.mrb[0].mxu0
        %1531 = vdwg.mxu0
        %v1532 = vsel %vm1485, %v1527, -inf
        %1533 = vmax.xlane.f32.xlu0 %v1532
        %v1534 = vpop.xlane.xlu0 %1533
        %v1535 = vsub.f32 %v1527, %v1534
        %v1536 = vmul.f32 %v1535, 1.442695
        %v1537 = vpow.pop %v1536
        %v1538 = vsel %vm1485, %v1537, 0.0
        %1539 = vadd.xlane.f32.xlu0 %v1538
        %v1540 = vpop.xlane.xlu0 %1539
        %v1541 = vrcp.pop %v1540
        %v1542 = vmul.f32 %v1537, %v1541
        %v1543 = vpack.c.bf16 %v1542, %v1542
        %1544 = vrot.lane.b32.xlu0 %v1481, 64
        %v1545 = vpop.permute.xlu0 %1544
        %v1547 = vsel %vm1485, %v1543, 0
        %vm1549 = vcmask 1043456
        %v1551 = vsel %vm1549, %v1545, 0
        %1553 = vmatprep.subr.bf16.mxu0 0
        %1554 = vmatpush1.bf16.msra.mxu0 %v1551
        %1555 = vmatprep.subr.bf16.mxu0 0
        %1556 = vmatpush1.bf16.msra.mxu0 0
        %1557 = vmatprep.subr.bf16.mxu0 0
        %1558 = vmatpush1.bf16.msra.mxu0 0
        %1559 = vmatprep.subr.bf16.mxu0 0
        %1560 = vmatpush1.bf16.msra.mxu0 0
        %1561 = vmatprep.subr.bf16.mxu0 0
        %1562 = vmatpush1.bf16.msra.mxu0 0
        %1563 = vmatprep.subr.bf16.mxu0 0
        %1564 = vmatpush1.bf16.msra.mxu0 0
        %1565 = vmatprep.subr.bf16.mxu0 0
        %1566 = vmatpush1.bf16.msra.mxu0 0
        %1567 = vmatprep.subr.bf16.mxu0 0
        %1568 = vmatpush1.bf16.msra.mxu0 0
        %1569 = vmatprep.subr.bf16.mxu0 0
        %1570 = vmatpush1.bf16.msra.mxu0 0
        %1571 = vmatprep.subr.bf16.mxu0 0
        %1572 = vmatpush1.bf16.msra.mxu0 0
        %1573 = vmatprep.subr.bf16.mxu0 0
        %1574 = vmatpush1.bf16.msra.mxu0 0
        %1575 = vmatprep.subr.bf16.mxu0 0
        %1576 = vmatpush1.bf16.msra.mxu0 0
        %1577 = vmatprep.subr.bf16.mxu0 0
        %1578 = vmatpush1.bf16.msra.mxu0 0
        %1579 = vmatprep.subr.bf16.mxu0 0
        %1580 = vmatpush1.bf16.msra.mxu0 0
        %1581 = vmatprep.subr.bf16.mxu0 0
        %1582 = vmatpush1.bf16.msra.mxu0 0
        %1583 = vmatprep.subr.bf16.mxu0 0
        %1584 = vmatpush1.bf16.msra.mxu0 0
        %1585 = vmatprep.mubr.bf16.mxu0 0
        %1586 = vmatmul.mubr.bf16.gmra.mrb[0].mxu0 %v1547
        %v1587 = vpop.f32.mrb[0].mxu0
        %v1588 = vadd.f32 0.0, %v1587
        %v1589 = vpop.f32.mrb[0].mxu0
        %v1590 = vpop.f32.mrb[0].mxu0
        %v1591 = vpop.f32.mrb[0].mxu0
        %1592 = vdwg.mxu0
        %1593 = vrot.lane.b32.xlu0 %v1481, 120
        %v1594 = vpop.permute.xlu0 %1593
        %1595 = vrot.lane.b32.xlu0 %v1481, 88
        %v1596 = vpop.permute.xlu0 %1595
        %v1598 = vsel %vm1485, %v1594, 0
        %v1601 = vsel %vm1485, %v1596, 0
        %1603 = vmatprep.subr.bf16.mxu0 0
        %1604 = vmatpush1.bf16.xpose.msra.mxu0 %v1601
        %1605 = vmatprep.subr.bf16.mxu0 0
        %1606 = vmatpush1.bf16.xpose.msra.mxu0 0
        %1607 = vmatprep.subr.bf16.mxu0 0
        %1608 = vmatpush1.bf16.xpose.msra.mxu0 0
        %1609 = vmatprep.subr.bf16.mxu0 0
        %1610 = vmatpush1.bf16.xpose.msra.mxu0 0
        %1611 = vmatprep.subr.bf16.mxu0 0
        %1612 = vmatpush1.bf16.xpose.msra.mxu0 0
        %1613 = vmatprep.subr.bf16.mxu0 0
        %1614 = vmatpush1.bf16.xpose.msra.mxu0 0
        %1615 = vmatprep.subr.bf16.mxu0 0
        %1616 = vmatpush1.bf16.xpose.msra.mxu0 0
        %1617 = vmatprep.subr.bf16.mxu0 0
        %1618 = vmatpush1.bf16.xpose.msra.mxu0 0
        %1619 = vmatprep.subr.bf16.mxu0 0
        %1620 = vmatpush1.bf16.xpose.msra.mxu0 0
        %1621 = vmatprep.subr.bf16.mxu0 0
        %1622 = vmatpush1.bf16.xpose.msra.mxu0 0
        %1623 = vmatprep.subr.bf16.mxu0 0
        %1624 = vmatpush1.bf16.xpose.msra.mxu0 0
        %1625 = vmatprep.subr.bf16.mxu0 0
        %1626 = vmatpush1.bf16.xpose.msra.mxu0 0
        %1627 = vmatprep.subr.bf16.mxu0 0
        %1628 = vmatpush1.bf16.xpose.msra.mxu0 0
        %1629 = vmatprep.subr.bf16.mxu0 0
        %1630 = vmatpush1.bf16.xpose.msra.mxu0 0
        %1631 = vmatprep.subr.bf16.mxu0 0
        %1632 = vmatpush1.bf16.xpose.msra.mxu0 0
        %1633 = vmatprep.subr.bf16.mxu0 0
        %1634 = vmatpush1.bf16.xpose.msra.mxu0 0
        %1635 = vmatprep.mubr.bf16.mxu0 0
        %1636 = vmatmul.mubr.bf16.gmra.mrb[0].mxu0 %v1598
        %v1637 = vpop.f32.mrb[0].mxu0
        %v1638 = vadd.f32 %v1372, %v1637
        %v1639 = vpop.f32.mrb[0].mxu0
        %v1640 = vpop.f32.mrb[0].mxu0
        %v1641 = vpop.f32.mrb[0].mxu0
        %1642 = vdwg.mxu0
        %v1643 = vsel %vm1485, %v1638, -inf
        %1644 = vmax.xlane.f32.xlu0 %v1643
        %v1645 = vpop.xlane.xlu0 %1644
        %v1646 = vsub.f32 %v1638, %v1645
        %v1647 = vmul.f32 %v1646, 1.442695
        %v1648 = vpow.pop %v1647
        %v1649 = vsel %vm1485, %v1648, 0.0
        %1650 = vadd.xlane.f32.xlu0 %v1649
        %v1651 = vpop.xlane.xlu0 %1650
        %v1652 = vrcp.pop %v1651
        %v1653 = vmul.f32 %v1648, %v1652
        %v1654 = vpack.c.bf16 %v1653, %v1653
        %1655 = vrot.lane.b32.xlu0 %v1481, 56
        %v1656 = vpop.permute.xlu0 %1655
        %v1658 = vsel %vm1485, %v1654, 0
        %v1661 = vsel %vm1549, %v1656, 0
        %1663 = vmatprep.subr.bf16.mxu0 0
        %1664 = vmatpush1.bf16.msra.mxu0 %v1661
        %1665 = vmatprep.subr.bf16.mxu0 0
        %1666 = vmatpush1.bf16.msra.mxu0 0
        %1667 = vmatprep.subr.bf16.mxu0 0
        %1668 = vmatpush1.bf16.msra.mxu0 0
        %1669 = vmatprep.subr.bf16.mxu0 0
        %1670 = vmatpush1.bf16.msra.mxu0 0
        %1671 = vmatprep.subr.bf16.mxu0 0
        %1672 = vmatpush1.bf16.msra.mxu0 0
        %1673 = vmatprep.subr.bf16.mxu0 0
        %1674 = vmatpush1.bf16.msra.mxu0 0
        %1675 = vmatprep.subr.bf16.mxu0 0
        %1676 = vmatpush1.bf16.msra.mxu0 0
        %1677 = vmatprep.subr.bf16.mxu0 0
        %1678 = vmatpush1.bf16.msra.mxu0 0
        %1679 = vmatprep.subr.bf16.mxu0 0
        %1680 = vmatpush1.bf16.msra.mxu0 0
        %1681 = vmatprep.subr.bf16.mxu0 0
        %1682 = vmatpush1.bf16.msra.mxu0 0
        %1683 = vmatprep.subr.bf16.mxu0 0
        %1684 = vmatpush1.bf16.msra.mxu0 0
        %1685 = vmatprep.subr.bf16.mxu0 0
        %1686 = vmatpush1.bf16.msra.mxu0 0
        %1687 = vmatprep.subr.bf16.mxu0 0
        %1688 = vmatpush1.bf16.msra.mxu0 0
        %1689 = vmatprep.subr.bf16.mxu0 0
        %1690 = vmatpush1.bf16.msra.mxu0 0
        %1691 = vmatprep.subr.bf16.mxu0 0
        %1692 = vmatpush1.bf16.msra.mxu0 0
        %1693 = vmatprep.subr.bf16.mxu0 0
        %1694 = vmatpush1.bf16.msra.mxu0 0
        %1695 = vmatprep.mubr.bf16.mxu0 0
        %1696 = vmatmul.mubr.bf16.gmra.mrb[0].mxu0 %v1658
        %v1697 = vpop.f32.mrb[0].mxu0
        %v1698 = vadd.f32 0.0, %v1697
        %v1699 = vpop.f32.mrb[0].mxu0
        %v1700 = vpop.f32.mrb[0].mxu0
        %v1701 = vpop.f32.mrb[0].mxu0
        %1702 = vdwg.mxu0
        %1703 = vrot.lane.b32.xlu0 %v1481, 112
        %v1704 = vpop.permute.xlu0 %1703
        %1705 = vrot.lane.b32.xlu0 %v1481, 80
        %v1706 = vpop.permute.xlu0 %1705
        %v1708 = vsel %vm1485, %v1704, 0
        %v1711 = vsel %vm1485, %v1706, 0
        %1713 = vmatprep.subr.bf16.mxu0 0
        %1714 = vmatpush1.bf16.xpose.msra.mxu0 %v1711
        %1715 = vmatprep.subr.bf16.mxu0 0
        %1716 = vmatpush1.bf16.xpose.msra.mxu0 0
        %1717 = vmatprep.subr.bf16.mxu0 0
        %1718 = vmatpush1.bf16.xpose.msra.mxu0 0
        %1719 = vmatprep.subr.bf16.mxu0 0
        %1720 = vmatpush1.bf16.xpose.msra.mxu0 0
        %1721 = vmatprep.subr.bf16.mxu0 0
        %1722 = vmatpush1.bf16.xpose.msra.mxu0 0
        %1723 = vmatprep.subr.bf16.mxu0 0
        %1724 = vmatpush1.bf16.xpose.msra.mxu0 0
        %1725 = vmatprep.subr.bf16.mxu0 0
        %1726 = vmatpush1.bf16.xpose.msra.mxu0 0
        %1727 = vmatprep.subr.bf16.mxu0 0
        %1728 = vmatpush1.bf16.xpose.msra.mxu0 0
        %1729 = vmatprep.subr.bf16.mxu0 0
        %1730 = vmatpush1.bf16.xpose.msra.mxu0 0
        %1731 = vmatprep.subr.bf16.mxu0 0
        %1732 = vmatpush1.bf16.xpose.msra.mxu0 0
        %1733 = vmatprep.subr.bf16.mxu0 0
        %1734 = vmatpush1.bf16.xpose.msra.mxu0 0
        %1735 = vmatprep.subr.bf16.mxu0 0
        %1736 = vmatpush1.bf16.xpose.msra.mxu0 0
        %1737 = vmatprep.subr.bf16.mxu0 0
        %1738 = vmatpush1.bf16.xpose.msra.mxu0 0
        %1739 = vmatprep.subr.bf16.mxu0 0
        %1740 = vmatpush1.bf16.xpose.msra.mxu0 0
        %1741 = vmatprep.subr.bf16.mxu0 0
        %1742 = vmatpush1.bf16.xpose.msra.mxu0 0
        %1743 = vmatprep.subr.bf16.mxu0 0
        %1744 = vmatpush1.bf16.xpose.msra.mxu0 0
        %1745 = vmatprep.mubr.bf16.mxu0 0
        %1746 = vmatmul.mubr.bf16.gmra.mrb[0].mxu0 %v1708
        %v1747 = vpop.f32.mrb[0].mxu0
        %v1748 = vadd.f32 %v1372, %v1747
        %v1749 = vpop.f32.mrb[0].mxu0
        %v1750 = vpop.f32.mrb[0].mxu0
        %v1751 = vpop.f32.mrb[0].mxu0
        %1752 = vdwg.mxu0
        %v1753 = vsel %vm1485, %v1748, -inf
        %1754 = vmax.xlane.f32.xlu0 %v1753
        %v1755 = vpop.xlane.xlu0 %1754
        %v1756 = vsub.f32 %v1748, %v1755
        %v1757 = vmul.f32 %v1756, 1.442695
        %v1758 = vpow.pop %v1757
        %v1759 = vsel %vm1485, %v1758, 0.0
        %1760 = vadd.xlane.f32.xlu0 %v1759
        %v1761 = vpop.xlane.xlu0 %1760
        %v1762 = vrcp.pop %v1761
        %v1763 = vmul.f32 %v1758, %v1762
        %v1764 = vpack.c.bf16 %v1763, %v1763
        %1765 = vrot.lane.b32.xlu0 %v1481, 48
        %v1766 = vpop.permute.xlu0 %1765
        %v1768 = vsel %vm1485, %v1764, 0
        %v1771 = vsel %vm1549, %v1766, 0
        %1773 = vmatprep.subr.bf16.mxu0 0
        %1774 = vmatpush1.bf16.msra.mxu0 %v1771
        %1775 = vmatprep.subr.bf16.mxu0 0
        %1776 = vmatpush1.bf16.msra.mxu0 0
        %1777 = vmatprep.subr.bf16.mxu0 0
        %1778 = vmatpush1.bf16.msra.mxu0 0
        %1779 = vmatprep.subr.bf16.mxu0 0
        %1780 = vmatpush1.bf16.msra.mxu0 0
        %1781 = vmatprep.subr.bf16.mxu0 0
        %1782 = vmatpush1.bf16.msra.mxu0 0
        %1783 = vmatprep.subr.bf16.mxu0 0
        %1784 = vmatpush1.bf16.msra.mxu0 0
        %1785 = vmatprep.subr.bf16.mxu0 0
        %1786 = vmatpush1.bf16.msra.mxu0 0
        %1787 = vmatprep.subr.bf16.mxu0 0
        %1788 = vmatpush1.bf16.msra.mxu0 0
        %1789 = vmatprep.subr.bf16.mxu0 0
        %1790 = vmatpush1.bf16.msra.mxu0 0
        %1791 = vmatprep.subr.bf16.mxu0 0
        %1792 = vmatpush1.bf16.msra.mxu0 0
        %1793 = vmatprep.subr.bf16.mxu0 0
        %1794 = vmatpush1.bf16.msra.mxu0 0
        %1795 = vmatprep.subr.bf16.mxu0 0
        %1796 = vmatpush1.bf16.msra.mxu0 0
        %1797 = vmatprep.subr.bf16.mxu0 0
        %1798 = vmatpush1.bf16.msra.mxu0 0
        %1799 = vmatprep.subr.bf16.mxu0 0
        %1800 = vmatpush1.bf16.msra.mxu0 0
        %1801 = vmatprep.subr.bf16.mxu0 0
        %1802 = vmatpush1.bf16.msra.mxu0 0
        %1803 = vmatprep.subr.bf16.mxu0 0
        %1804 = vmatpush1.bf16.msra.mxu0 0
        %1805 = vmatprep.mubr.bf16.mxu0 0
        %1806 = vmatmul.mubr.bf16.gmra.mrb[0].mxu0 %v1768
        %v1807 = vpop.f32.mrb[0].mxu0
        %v1808 = vadd.f32 0.0, %v1807
        %v1809 = vpop.f32.mrb[0].mxu0
        %v1810 = vpop.f32.mrb[0].mxu0
        %v1811 = vpop.f32.mrb[0].mxu0
        %1812 = vdwg.mxu0
        %1813 = vrot.lane.b32.xlu0 %v1481, 104
        %v1814 = vpop.permute.xlu0 %1813
        %1815 = vrot.lane.b32.xlu0 %v1481, 72
        %v1816 = vpop.permute.xlu0 %1815
        %v1818 = vsel %vm1485, %v1814, 0
        %v1821 = vsel %vm1485, %v1816, 0
        %1823 = vmatprep.subr.bf16.mxu0 0
        %1824 = vmatpush1.bf16.xpose.msra.mxu0 %v1821
        %1825 = vmatprep.subr.bf16.mxu0 0
        %1826 = vmatpush1.bf16.xpose.msra.mxu0 0
        %1827 = vmatprep.subr.bf16.mxu0 0
        %1828 = vmatpush1.bf16.xpose.msra.mxu0 0
        %1829 = vmatprep.subr.bf16.mxu0 0
        %1830 = vmatpush1.bf16.xpose.msra.mxu0 0
        %1831 = vmatprep.subr.bf16.mxu0 0
        %1832 = vmatpush1.bf16.xpose.msra.mxu0 0
        %1833 = vmatprep.subr.bf16.mxu0 0
        %1834 = vmatpush1.bf16.xpose.msra.mxu0 0
        %1835 = vmatprep.subr.bf16.mxu0 0
        %1836 = vmatpush1.bf16.xpose.msra.mxu0 0
        %1837 = vmatprep.subr.bf16.mxu0 0
        %1838 = vmatpush1.bf16.xpose.msra.mxu0 0
        %1839 = vmatprep.subr.bf16.mxu0 0
        %1840 = vmatpush1.bf16.xpose.msra.mxu0 0
        %1841 = vmatprep.subr.bf16.mxu0 0
        %1842 = vmatpush1.bf16.xpose.msra.mxu0 0
        %1843 = vmatprep.subr.bf16.mxu0 0
        %1844 = vmatpush1.bf16.xpose.msra.mxu0 0
        %1845 = vmatprep.subr.bf16.mxu0 0
        %1846 = vmatpush1.bf16.xpose.msra.mxu0 0
        %1847 = vmatprep.subr.bf16.mxu0 0
        %1848 = vmatpush1.bf16.xpose.msra.mxu0 0
        %1849 = vmatprep.subr.bf16.mxu0 0
        %1850 = vmatpush1.bf16.xpose.msra.mxu0 0
        %1851 = vmatprep.subr.bf16.mxu0 0
        %1852 = vmatpush1.bf16.xpose.msra.mxu0 0
        %1853 = vmatprep.subr.bf16.mxu0 0
        %1854 = vmatpush1.bf16.xpose.msra.mxu0 0
        %1855 = vmatprep.mubr.bf16.mxu0 0
        %1856 = vmatmul.mubr.bf16.gmra.mrb[0].mxu0 %v1818
        %v1857 = vpop.f32.mrb[0].mxu0
        %v1858 = vadd.f32 %v1372, %v1857
        %v1859 = vpop.f32.mrb[0].mxu0
        %v1860 = vpop.f32.mrb[0].mxu0
        %v1861 = vpop.f32.mrb[0].mxu0
        %1862 = vdwg.mxu0
        %v1863 = vsel %vm1485, %v1858, -inf
        %1864 = vmax.xlane.f32.xlu0 %v1863
        %v1865 = vpop.xlane.xlu0 %1864
        %v1866 = vsub.f32 %v1858, %v1865
        %v1867 = vmul.f32 %v1866, 1.442695
        %v1868 = vpow.pop %v1867
        %v1869 = vsel %vm1485, %v1868, 0.0
        %1870 = vadd.xlane.f32.xlu0 %v1869
        %v1871 = vpop.xlane.xlu0 %1870
        %v1872 = vrcp.pop %v1871
        %v1873 = vmul.f32 %v1868, %v1872
        %v1874 = vpack.c.bf16 %v1873, %v1873
        %1875 = vrot.lane.b32.xlu0 %v1481, 40
        %v1876 = vpop.permute.xlu0 %1875
        %v1878 = vsel %vm1485, %v1874, 0
        %v1881 = vsel %vm1549, %v1876, 0
        %1883 = vmatprep.subr.bf16.mxu0 0
        %1884 = vmatpush1.bf16.msra.mxu0 %v1881
        %1885 = vmatprep.subr.bf16.mxu0 0
        %1886 = vmatpush1.bf16.msra.mxu0 0
        %1887 = vmatprep.subr.bf16.mxu0 0
        %1888 = vmatpush1.bf16.msra.mxu0 0
        %1889 = vmatprep.subr.bf16.mxu0 0
        %1890 = vmatpush1.bf16.msra.mxu0 0
        %1891 = vmatprep.subr.bf16.mxu0 0
        %1892 = vmatpush1.bf16.msra.mxu0 0
        %1893 = vmatprep.subr.bf16.mxu0 0
        %1894 = vmatpush1.bf16.msra.mxu0 0
        %1895 = vmatprep.subr.bf16.mxu0 0
        %1896 = vmatpush1.bf16.msra.mxu0 0
        %1897 = vmatprep.subr.bf16.mxu0 0
        %1898 = vmatpush1.bf16.msra.mxu0 0
        %1899 = vmatprep.subr.bf16.mxu0 0
        %1900 = vmatpush1.bf16.msra.mxu0 0
        %1901 = vmatprep.subr.bf16.mxu0 0
        %1902 = vmatpush1.bf16.msra.mxu0 0
        %1903 = vmatprep.subr.bf16.mxu0 0
        %1904 = vmatpush1.bf16.msra.mxu0 0
        %1905 = vmatprep.subr.bf16.mxu0 0
        %1906 = vmatpush1.bf16.msra.mxu0 0
        %1907 = vmatprep.subr.bf16.mxu0 0
        %1908 = vmatpush1.bf16.msra.mxu0 0
        %1909 = vmatprep.subr.bf16.mxu0 0
        %1910 = vmatpush1.bf16.msra.mxu0 0
        %1911 = vmatprep.subr.bf16.mxu0 0
        %1912 = vmatpush1.bf16.msra.mxu0 0
        %1913 = vmatprep.subr.bf16.mxu0 0
        %1914 = vmatpush1.bf16.msra.mxu0 0
        %1915 = vmatprep.mubr.bf16.mxu0 0
        %1916 = vmatmul.mubr.bf16.gmra.mrb[0].mxu0 %v1878
        %v1917 = vpop.f32.mrb[0].mxu0
        %v1918 = vadd.f32 0.0, %v1917
        %v1919 = vpop.f32.mrb[0].mxu0
        %v1920 = vpop.f32.mrb[0].mxu0
        %v1921 = vpop.f32.mrb[0].mxu0
        %1922 = vdwg.mxu0
        %1924 = vrot.lane.b32.xlu0 %v1698, 8
        %v1925 = vpop.permute.xlu0 %1924
        %1928 = vrot.lane.b32.xlu0 %v1808, 16
        %v1929 = vpop.permute.xlu0 %1928
        %1932 = vrot.lane.b32.xlu0 %v1918, 24
        %v1933 = vpop.permute.xlu0 %1932
        %v1935 = vsel %vm1485, %v1588, %v1925
        %vm1936 = vcmask 130048
        %v1937 = vsel %vm1936, %v1935, %v1929
        %vm1938 = vcmask 195584
        %v1939 = vsel %vm1938, %v1937, %v1933
        %v1940 = vpack.c.bf16 %v1939, %v1939
        %v1942 = vlaneseq
        %v1943 = vshrl.u32 %v1942, 7
        %v1944 = vsub.s32 0, %v1943
        %v1945 = vrot.slane %v1480, %v1944
        %v1951 = vunpack.c.l.b16 %v1476
        %v1952 = vunpack.c.l.b16 %v1477
        %v1953 = vunpack.c.l.b16 %v1478
        %v1954 = vunpack.c.l.b16 %v1479
        %v1955 = vpack.c.b16 %v1952, %v1951
        %v1956 = vpack.c.b16 %v1954, %v1953
        %v1960 = vsel %vm1378, %v1940, 0
        %1962 = vmatprep.subr.bf16.mxu0 0
        %1963 = vmatpush1.bf16.msra.mxu0 %v1955
        %1964 = vmatprep.subr.bf16.mxu0 0
        %1965 = vmatpush1.bf16.msra.mxu0 %v1956
        %1966 = vmatprep.subr.bf16.mxu0 0
        %1967 = vmatpush1.bf16.msra.mxu0 0
        %1968 = vmatprep.subr.bf16.mxu0 0
        %1969 = vmatpush1.bf16.msra.mxu0 0
        %1970 = vmatprep.subr.bf16.mxu0 0
        %1971 = vmatpush1.bf16.msra.mxu0 0
        %1972 = vmatprep.subr.bf16.mxu0 0
        %1973 = vmatpush1.bf16.msra.mxu0 0
        %1974 = vmatprep.subr.bf16.mxu0 0
        %1975 = vmatpush1.bf16.msra.mxu0 0
        %1976 = vmatprep.subr.bf16.mxu0 0
        %1977 = vmatpush1.bf16.msra.mxu0 0
        %1978 = vmatprep.subr.bf16.mxu0 0
        %1979 = vmatpush1.bf16.msra.mxu0 0
        %1980 = vmatprep.subr.bf16.mxu0 0
        %1981 = vmatpush1.bf16.msra.mxu0 0
        %1982 = vmatprep.subr.bf16.mxu0 0
        %1983 = vmatpush1.bf16.msra.mxu0 0
        %1984 = vmatprep.subr.bf16.mxu0 0
        %1985 = vmatpush1.bf16.msra.mxu0 0
        %1986 = vmatprep.subr.bf16.mxu0 0
        %1987 = vmatpush1.bf16.msra.mxu0 0
        %1988 = vmatprep.subr.bf16.mxu0 0
        %1989 = vmatpush1.bf16.msra.mxu0 0
        %1990 = vmatprep.subr.bf16.mxu0 0
        %1991 = vmatpush1.bf16.msra.mxu0 0
        %1992 = vmatprep.subr.bf16.mxu0 0
        %1993 = vmatpush1.bf16.msra.mxu0 0
        %1994 = vmatprep.mubr.bf16.mxu0 0
        %1995 = vmatmul.mubr.bf16.gmra.mrb[0].mxu0 %v1960
        %v1996 = vpop.f32.mrb[0].mxu0
        %v1997 = vadd.f32 %v1945, %v1996
        %v1998 = vpop.f32.mrb[0].mxu0
        %v1999 = vpop.f32.mrb[0].mxu0
        %v2000 = vpop.f32.mrb[0].mxu0
        %2001 = vdwg.mxu0
        %v2002 = vadd.f32 %v1374, %v1997
        %v2003 = vld [vmem:[%s1341] sm:$0x1]
        %v2004 = vld [vmem:[%s1344] sm:$0x1]
        %v2005 = vsel %vm1378, %v2002, 0.0
        %2006 = vadd.xlane.f32.xlu0 %v2005
        %v2007 = vpop.xlane.xlu0 %2006
        %v2008 = vmul.f32 %v2007, %v1382
        %v2009 = vmul.f32 %v2002, %v2002
        %v2010 = vsel %vm1378, %v2009, 0.0
        %2011 = vadd.xlane.f32.xlu0 %v2010
        %v2012 = vpop.xlane.xlu0 %2011
        %v2013 = vmul.f32 %v2012, %v1382
        %v2014 = vmul.f32 %v2008, %v2008
        %v2015 = vsub.f32 %v2013, %v2014
        %v2016 = vsub.f32 %v2002, %v2008
        %v2017 = vadd.f32 %v2015, 1e-05
        %v2018 = vrsqrt.pop %v2017
        %v2019 = vmul.f32 %v2016, %v2018
        %v2021 = vlaneseq
        %v2022 = vshrl.u32 %v2021, 7
        %v2023 = vsub.s32 0, %v2022
        %v2024 = vrot.slane %v2003, %v2023
        %v2026 = vmul.f32 %v2019, %v2024
        %v2028 = vlaneseq
        %v2029 = vshrl.u32 %v2028, 7
        %v2030 = vsub.s32 0, %v2029
        %v2031 = vrot.slane %v2004, %v2030
        %v2033 = vadd.f32 %v2026, %v2031
        %v2034 = vpack.c.bf16 %v2033, %v2033
        %v2035 = vld [vmem:[%s1312] sm:$0xf]
        %v2036 = vld [vmem:[%s1312 + $0x4] sm:$0xf]
        %v2037 = vld [vmem:[%s1312 + $0x8] sm:$0xf]
        %v2038 = vld [vmem:[%s1312 + $0xc] sm:$0xf]
        %v2039 = vld [vmem:[%s1315] sm:$0x1]
        %v2041 = vlaneseq
        %v2042 = vshrl.u32 %v2041, 7
        %v2043 = vsub.s32 0, %v2042
        %v2044 = vrot.slane %v2039, %v2043
        %v2050 = vunpack.c.l.b16 %v2035
        %v2051 = vunpack.c.l.b16 %v2036
        %v2052 = vunpack.c.l.b16 %v2037
        %v2053 = vunpack.c.l.b16 %v2038
        %v2054 = vpack.c.b16 %v2051, %v2050
        %v2055 = vpack.c.b16 %v2053, %v2052
        %v2059 = vsel %vm1378, %v2034, 0
        %2061 = vmatprep.subr.bf16.mxu0 0
        %2062 = vmatpush1.bf16.msra.mxu0 %v2054
        %2063 = vmatprep.subr.bf16.mxu0 0
        %2064 = vmatpush1.bf16.msra.mxu0 %v2055
        %2065 = vmatprep.subr.bf16.mxu0 0
        %2066 = vmatpush1.bf16.msra.mxu0 0
        %2067 = vmatprep.subr.bf16.mxu0 0
        %2068 = vmatpush1.bf16.msra.mxu0 0
        %2069 = vmatprep.subr.bf16.mxu0 0
        %2070 = vmatpush1.bf16.msra.mxu0 0
        %2071 = vmatprep.subr.bf16.mxu0 0
        %2072 = vmatpush1.bf16.msra.mxu0 0
        %2073 = vmatprep.subr.bf16.mxu0 0
        %2074 = vmatpush1.bf16.msra.mxu0 0
        %2075 = vmatprep.subr.bf16.mxu0 0
        %2076 = vmatpush1.bf16.msra.mxu0 0
        %2077 = vmatprep.subr.bf16.mxu0 0
        %2078 = vmatpush1.bf16.msra.mxu0 0
        %2079 = vmatprep.subr.bf16.mxu0 0
        %2080 = vmatpush1.bf16.msra.mxu0 0
        %2081 = vmatprep.subr.bf16.mxu0 0
        %2082 = vmatpush1.bf16.msra.mxu0 0
        %2083 = vmatprep.subr.bf16.mxu0 0
        %2084 = vmatpush1.bf16.msra.mxu0 0
        %2085 = vmatprep.subr.bf16.mxu0 0
        %2086 = vmatpush1.bf16.msra.mxu0 0
        %2087 = vmatprep.subr.bf16.mxu0 0
        %2088 = vmatpush1.bf16.msra.mxu0 0
        %2089 = vmatprep.subr.bf16.mxu0 0
        %2090 = vmatpush1.bf16.msra.mxu0 0
        %2091 = vmatprep.subr.bf16.mxu0 0
        %2092 = vmatpush1.bf16.msra.mxu0 0
        %2093 = vmatprep.mubr.bf16.mxu0 0
        %2094 = vmatmul.mubr.bf16.gmra.mrb[0].mxu0 %v2059
        %v2095 = vpop.f32.mrb[0].mxu0
        %v2096 = vadd.f32 %v2044, %v2095
        %v2097 = vpop.f32.mrb[0].mxu0
        %v2098 = vpop.f32.mrb[0].mxu0
        %v2099 = vpop.f32.mrb[0].mxu0
        %2100 = vdwg.mxu0
        %v2101 = vpack.c.bf16 %v1375, %v1375
        %v2102 = vld [vmem:[%s1114] sm:$0xf]
        %v2103 = vld [vmem:[%s1114 + $0x4] sm:$0xf]
        %v2104 = vld [vmem:[%s1114 + $0x8] sm:$0xf]
        %v2105 = vld [vmem:[%s1114 + $0xc] sm:$0xf]
        %v2106 = vld [vmem:[%s1318] sm:$0x1]
        %v2108 = vlaneseq
        %v2109 = vshrl.u32 %v2108, 7
        %v2110 = vsub.s32 0, %v2109
        %v2111 = vrot.slane %v2106, %v2110
        %v2117 = vunpack.c.l.b16 %v2102
        %v2118 = vunpack.c.l.b16 %v2103
        %v2119 = vunpack.c.l.b16 %v2104
        %v2120 = vunpack.c.l.b16 %v2105
        %v2121 = vpack.c.b16 %v2118, %v2117
        %v2122 = vpack.c.b16 %v2120, %v2119
        %v2126 = vsel %vm1378, %v2101, 0
        %2128 = vmatprep.subr.bf16.mxu0 0
        %2129 = vmatpush1.bf16.msra.mxu0 %v2121
        %2130 = vmatprep.subr.bf16.mxu0 0
        %2131 = vmatpush1.bf16.msra.mxu0 %v2122
        %2132 = vmatprep.subr.bf16.mxu0 0
        %2133 = vmatpush1.bf16.msra.mxu0 0
        %2134 = vmatprep.subr.bf16.mxu0 0
        %2135 = vmatpush1.bf16.msra.mxu0 0
        %2136 = vmatprep.subr.bf16.mxu0 0
        %2137 = vmatpush1.bf16.msra.mxu0 0
        %2138 = vmatprep.subr.bf16.mxu0 0
        %2139 = vmatpush1.bf16.msra.mxu0 0
        %2140 = vmatprep.subr.bf16.mxu0 0
        %2141 = vmatpush1.bf16.msra.mxu0 0
        %2142 = vmatprep.subr.bf16.mxu0 0
        %2143 = vmatpush1.bf16.msra.mxu0 0
        %2144 = vmatprep.subr.bf16.mxu0 0
        %2145 = vmatpush1.bf16.msra.mxu0 0
        %2146 = vmatprep.subr.bf16.mxu0 0
        %2147 = vmatpush1.bf16.msra.mxu0 0
        %2148 = vmatprep.subr.bf16.mxu0 0
        %2149 = vmatpush1.bf16.msra.mxu0 0
        %2150 = vmatprep.subr.bf16.mxu0 0
        %2151 = vmatpush1.bf16.msra.mxu0 0
        %2152 = vmatprep.subr.bf16.mxu0 0
        %2153 = vmatpush1.bf16.msra.mxu0 0
        %2154 = vmatprep.subr.bf16.mxu0 0
        %2155 = vmatpush1.bf16.msra.mxu0 0
        %2156 = vmatprep.subr.bf16.mxu0 0
        %2157 = vmatpush1.bf16.msra.mxu0 0
        %2158 = vmatprep.subr.bf16.mxu0 0
        %2159 = vmatpush1.bf16.msra.mxu0 0
        %2160 = vmatprep.mubr.bf16.mxu0 0
        %2161 = vmatmul.mubr.bf16.gmra.mrb[0].mxu0 %v2126
        %v2162 = vpop.f32.mrb[0].mxu0
        %v2163 = vadd.f32 %v2111, %v2162
        %v2164 = vpop.f32.mrb[0].mxu0
        %v2165 = vpop.f32.mrb[0].mxu0
        %v2166 = vpop.f32.mrb[0].mxu0
        %2167 = vdwg.mxu0
        %v2168 = vld [vmem:[%s1123] sm:$0xf]
        %v2169 = vld [vmem:[%s1123 + $0x4] sm:$0xf]
        %v2170 = vld [vmem:[%s1123 + $0x8] sm:$0xf]
        %v2171 = vld [vmem:[%s1123 + $0xc] sm:$0xf]
        %v2172 = vld [vmem:[%s1321] sm:$0x1]
        %v2173 = vpack.c.bf16 %v2096, %v2096
        %v2174 = vpack.c.bf16 %v2163, %v2163
        %v2176 = vlaneseq
        %v2177 = vshrl.u32 %v2176, 7
        %v2178 = vsub.s32 0, %v2177
        %v2179 = vrot.slane %v1373, %v2178
        %v2182 = vsel %vm1485, %v2173, 0
        %v2185 = vsel %vm1485, %v2174, 0
        %2187 = vmatprep.subr.bf16.mxu0 0
        %2188 = vmatpush1.bf16.xpose.msra.mxu0 %v2185
        %2189 = vmatprep.subr.bf16.mxu0 0
        %2190 = vmatpush1.bf16.xpose.msra.mxu0 0
        %2191 = vmatprep.subr.bf16.mxu0 0
        %2192 = vmatpush1.bf16.xpose.msra.mxu0 0
        %2193 = vmatprep.subr.bf16.mxu0 0
        %2194 = vmatpush1.bf16.xpose.msra.mxu0 0
        %2195 = vmatprep.subr.bf16.mxu0 0
        %2196 = vmatpush1.bf16.xpose.msra.mxu0 0
        %2197 = vmatprep.subr.bf16.mxu0 0
        %2198 = vmatpush1.bf16.xpose.msra.mxu0 0
        %2199 = vmatprep.subr.bf16.mxu0 0
        %2200 = vmatpush1.bf16.xpose.msra.mxu0 0
        %2201 = vmatprep.subr.bf16.mxu0 0
        %2202 = vmatpush1.bf16.xpose.msra.mxu0 0
        %2203 = vmatprep.subr.bf16.mxu0 0
        %2204 = vmatpush1.bf16.xpose.msra.mxu0 0
        %2205 = vmatprep.subr.bf16.mxu0 0
        %2206 = vmatpush1.bf16.xpose.msra.mxu0 0
        %2207 = vmatprep.subr.bf16.mxu0 0
        %2208 = vmatpush1.bf16.xpose.msra.mxu0 0
        %2209 = vmatprep.subr.bf16.mxu0 0
        %2210 = vmatpush1.bf16.xpose.msra.mxu0 0
        %2211 = vmatprep.subr.bf16.mxu0 0
        %2212 = vmatpush1.bf16.xpose.msra.mxu0 0
        %2213 = vmatprep.subr.bf16.mxu0 0
        %2214 = vmatpush1.bf16.xpose.msra.mxu0 0
        %2215 = vmatprep.subr.bf16.mxu0 0
        %2216 = vmatpush1.bf16.xpose.msra.mxu0 0
        %2217 = vmatprep.subr.bf16.mxu0 0
        %2218 = vmatpush1.bf16.xpose.msra.mxu0 0
        %2219 = vmatprep.mubr.bf16.mxu0 0
        %2220 = vmatmul.mubr.bf16.gmra.mrb[0].mxu0 %v2182
        %v2221 = vpop.f32.mrb[0].mxu0
        %v2222 = vadd.f32 %v2179, %v2221
        %v2223 = vpop.f32.mrb[0].mxu0
        %v2224 = vpop.f32.mrb[0].mxu0
        %v2225 = vpop.f32.mrb[0].mxu0
        %2226 = vdwg.mxu0
        %v2227 = vsel %vm1485, %v2222, -inf
        %2228 = vmax.xlane.f32.xlu0 %v2227
        %v2229 = vpop.xlane.xlu0 %2228
        %v2230 = vsub.f32 %v2222, %v2229
        %v2231 = vmul.f32 %v2230, 1.442695
        %v2232 = vpow.pop %v2231
        %v2233 = vsel %vm1485, %v2232, 0.0
        %2234 = vadd.xlane.f32.xlu0 %v2233
        %v2235 = vpop.xlane.xlu0 %2234
        %v2236 = vrcp.pop %v2235
        %v2237 = vmul.f32 %v2232, %v2236
        %v2238 = vpack.c.bf16 %v2237, %v2237
        %2240 = vrot.lane.b32.xlu0 %v2174, 96
        %v2241 = vpop.permute.xlu0 %2240
        %v2243 = vsel %vm1485, %v2238, 0
        %v2246 = vsel %vm1549, %v2241, 0
        %2248 = vmatprep.subr.bf16.mxu0 0
        %2249 = vmatpush1.bf16.msra.mxu0 %v2246
        %2250 = vmatprep.subr.bf16.mxu0 0
        %2251 = vmatpush1.bf16.msra.mxu0 0
        %2252 = vmatprep.subr.bf16.mxu0 0
        %2253 = vmatpush1.bf16.msra.mxu0 0
        %2254 = vmatprep.subr.bf16.mxu0 0
        %2255 = vmatpush1.bf16.msra.mxu0 0
        %2256 = vmatprep.subr.bf16.mxu0 0
        %2257 = vmatpush1.bf16.msra.mxu0 0
        %2258 = vmatprep.subr.bf16.mxu0 0
        %2259 = vmatpush1.bf16.msra.mxu0 0
        %2260 = vmatprep.subr.bf16.mxu0 0
        %2261 = vmatpush1.bf16.msra.mxu0 0
        %2262 = vmatprep.subr.bf16.mxu0 0
        %2263 = vmatpush1.bf16.msra.mxu0 0
        %2264 = vmatprep.subr.bf16.mxu0 0
        %2265 = vmatpush1.bf16.msra.mxu0 0
        %2266 = vmatprep.subr.bf16.mxu0 0
        %2267 = vmatpush1.bf16.msra.mxu0 0
        %2268 = vmatprep.subr.bf16.mxu0 0
        %2269 = vmatpush1.bf16.msra.mxu0 0
        %2270 = vmatprep.subr.bf16.mxu0 0
        %2271 = vmatpush1.bf16.msra.mxu0 0
        %2272 = vmatprep.subr.bf16.mxu0 0
        %2273 = vmatpush1.bf16.msra.mxu0 0
        %2274 = vmatprep.subr.bf16.mxu0 0
        %2275 = vmatpush1.bf16.msra.mxu0 0
        %2276 = vmatprep.subr.bf16.mxu0 0
        %2277 = vmatpush1.bf16.msra.mxu0 0
        %2278 = vmatprep.subr.bf16.mxu0 0
        %2279 = vmatpush1.bf16.msra.mxu0 0
        %2280 = vmatprep.mubr.bf16.mxu0 0
        %2281 = vmatmul.mubr.bf16.gmra.mrb[0].mxu0 %v2243
        %v2282 = vpop.f32.mrb[0].mxu0
        %v2283 = vadd.f32 0.0, %v2282
        %v2284 = vpop.f32.mrb[0].mxu0
        %v2285 = vpop.f32.mrb[0].mxu0
        %v2286 = vpop.f32.mrb[0].mxu0
        %2287 = vdwg.mxu0
        %2289 = vrot.lane.b32.xlu0 %v2173, 120
        %v2290 = vpop.permute.xlu0 %2289
        %2291 = vrot.lane.b32.xlu0 %v2174, 120
        %v2292 = vpop.permute.xlu0 %2291
        %v2294 = vsel %vm1485, %v2290, 0
        %v2297 = vsel %vm1485, %v2292, 0
        %2299 = vmatprep.subr.bf16.mxu0 0
        %2300 = vmatpush1.bf16.xpose.msra.mxu0 %v2297
        %2301 = vmatprep.subr.bf16.mxu0 0
        %2302 = vmatpush1.bf16.xpose.msra.mxu0 0
        %2303 = vmatprep.subr.bf16.mxu0 0
        %2304 = vmatpush1.bf16.xpose.msra.mxu0 0
        %2305 = vmatprep.subr.bf16.mxu0 0
        %2306 = vmatpush1.bf16.xpose.msra.mxu0 0
        %2307 = vmatprep.subr.bf16.mxu0 0
        %2308 = vmatpush1.bf16.xpose.msra.mxu0 0
        %2309 = vmatprep.subr.bf16.mxu0 0
        %2310 = vmatpush1.bf16.xpose.msra.mxu0 0
        %2311 = vmatprep.subr.bf16.mxu0 0
        %2312 = vmatpush1.bf16.xpose.msra.mxu0 0
        %2313 = vmatprep.subr.bf16.mxu0 0
        %2314 = vmatpush1.bf16.xpose.msra.mxu0 0
        %2315 = vmatprep.subr.bf16.mxu0 0
        %2316 = vmatpush1.bf16.xpose.msra.mxu0 0
        %2317 = vmatprep.subr.bf16.mxu0 0
        %2318 = vmatpush1.bf16.xpose.msra.mxu0 0
        %2319 = vmatprep.subr.bf16.mxu0 0
        %2320 = vmatpush1.bf16.xpose.msra.mxu0 0
        %2321 = vmatprep.subr.bf16.mxu0 0
        %2322 = vmatpush1.bf16.xpose.msra.mxu0 0
        %2323 = vmatprep.subr.bf16.mxu0 0
        %2324 = vmatpush1.bf16.xpose.msra.mxu0 0
        %2325 = vmatprep.subr.bf16.mxu0 0
        %2326 = vmatpush1.bf16.xpose.msra.mxu0 0
        %2327 = vmatprep.subr.bf16.mxu0 0
        %2328 = vmatpush1.bf16.xpose.msra.mxu0 0
        %2329 = vmatprep.subr.bf16.mxu0 0
        %2330 = vmatpush1.bf16.xpose.msra.mxu0 0
        %2331 = vmatprep.mubr.bf16.mxu0 0
        %2332 = vmatmul.mubr.bf16.gmra.mrb[0].mxu0 %v2294
        %v2333 = vpop.f32.mrb[0].mxu0
        %v2334 = vadd.f32 %v2179, %v2333
        %v2335 = vpop.f32.mrb[0].mxu0
        %v2336 = vpop.f32.mrb[0].mxu0
        %v2337 = vpop.f32.mrb[0].mxu0
        %2338 = vdwg.mxu0
        %v2339 = vsel %vm1485, %v2334, -inf
        %2340 = vmax.xlane.f32.xlu0 %v2339
        %v2341 = vpop.xlane.xlu0 %2340
        %v2342 = vsub.f32 %v2334, %v2341
        %v2343 = vmul.f32 %v2342, 1.442695
        %v2344 = vpow.pop %v2343
        %v2345 = vsel %vm1485, %v2344, 0.0
        %2346 = vadd.xlane.f32.xlu0 %v2345
        %v2347 = vpop.xlane.xlu0 %2346
        %v2348 = vrcp.pop %v2347
        %v2349 = vmul.f32 %v2344, %v2348
        %v2350 = vpack.c.bf16 %v2349, %v2349
        %2351 = vrot.lane.b32.xlu0 %v2174, 88
        %v2352 = vpop.permute.xlu0 %2351
        %v2354 = vsel %vm1485, %v2350, 0
        %v2357 = vsel %vm1549, %v2352, 0
        %2359 = vmatprep.subr.bf16.mxu0 0
        %2360 = vmatpush1.bf16.msra.mxu0 %v2357
        %2361 = vmatprep.subr.bf16.mxu0 0
        %2362 = vmatpush1.bf16.msra.mxu0 0
        %2363 = vmatprep.subr.bf16.mxu0 0
        %2364 = vmatpush1.bf16.msra.mxu0 0
        %2365 = vmatprep.subr.bf16.mxu0 0
        %2366 = vmatpush1.bf16.msra.mxu0 0
        %2367 = vmatprep.subr.bf16.mxu0 0
        %2368 = vmatpush1.bf16.msra.mxu0 0
        %2369 = vmatprep.subr.bf16.mxu0 0
        %2370 = vmatpush1.bf16.msra.mxu0 0
        %2371 = vmatprep.subr.bf16.mxu0 0
        %2372 = vmatpush1.bf16.msra.mxu0 0
        %2373 = vmatprep.subr.bf16.mxu0 0
        %2374 = vmatpush1.bf16.msra.mxu0 0
        %2375 = vmatprep.subr.bf16.mxu0 0
        %2376 = vmatpush1.bf16.msra.mxu0 0
        %2377 = vmatprep.subr.bf16.mxu0 0
        %2378 = vmatpush1.bf16.msra.mxu0 0
        %2379 = vmatprep.subr.bf16.mxu0 0
        %2380 = vmatpush1.bf16.msra.mxu0 0
        %2381 = vmatprep.subr.bf16.mxu0 0
        %2382 = vmatpush1.bf16.msra.mxu0 0
        %2383 = vmatprep.subr.bf16.mxu0 0
        %2384 = vmatpush1.bf16.msra.mxu0 0
        %2385 = vmatprep.subr.bf16.mxu0 0
        %2386 = vmatpush1.bf16.msra.mxu0 0
        %2387 = vmatprep.subr.bf16.mxu0 0
        %2388 = vmatpush1.bf16.msra.mxu0 0
        %2389 = vmatprep.subr.bf16.mxu0 0
        %2390 = vmatpush1.bf16.msra.mxu0 0
        %2391 = vmatprep.mubr.bf16.mxu0 0
        %2392 = vmatmul.mubr.bf16.gmra.mrb[0].mxu0 %v2354
        %v2393 = vpop.f32.mrb[0].mxu0
        %v2394 = vadd.f32 0.0, %v2393
        %v2395 = vpop.f32.mrb[0].mxu0
        %v2396 = vpop.f32.mrb[0].mxu0
        %v2397 = vpop.f32.mrb[0].mxu0
        %2398 = vdwg.mxu0
        %2399 = vrot.lane.b32.xlu0 %v2173, 112
        %v2400 = vpop.permute.xlu0 %2399
        %2401 = vrot.lane.b32.xlu0 %v2174, 112
        %v2402 = vpop.permute.xlu0 %2401
        %v2404 = vsel %vm1485, %v2400, 0
        %v2407 = vsel %vm1485, %v2402, 0
        %2409 = vmatprep.subr.bf16.mxu0 0
        %2410 = vmatpush1.bf16.xpose.msra.mxu0 %v2407
        %2411 = vmatprep.subr.bf16.mxu0 0
        %2412 = vmatpush1.bf16.xpose.msra.mxu0 0
        %2413 = vmatprep.subr.bf16.mxu0 0
        %2414 = vmatpush1.bf16.xpose.msra.mxu0 0
        %2415 = vmatprep.subr.bf16.mxu0 0
        %2416 = vmatpush1.bf16.xpose.msra.mxu0 0
        %2417 = vmatprep.subr.bf16.mxu0 0
        %2418 = vmatpush1.bf16.xpose.msra.mxu0 0
        %2419 = vmatprep.subr.bf16.mxu0 0
        %2420 = vmatpush1.bf16.xpose.msra.mxu0 0
        %2421 = vmatprep.subr.bf16.mxu0 0
        %2422 = vmatpush1.bf16.xpose.msra.mxu0 0
        %2423 = vmatprep.subr.bf16.mxu0 0
        %2424 = vmatpush1.bf16.xpose.msra.mxu0 0
        %2425 = vmatprep.subr.bf16.mxu0 0
        %2426 = vmatpush1.bf16.xpose.msra.mxu0 0
        %2427 = vmatprep.subr.bf16.mxu0 0
        %2428 = vmatpush1.bf16.xpose.msra.mxu0 0
        %2429 = vmatprep.subr.bf16.mxu0 0
        %2430 = vmatpush1.bf16.xpose.msra.mxu0 0
        %2431 = vmatprep.subr.bf16.mxu0 0
        %2432 = vmatpush1.bf16.xpose.msra.mxu0 0
        %2433 = vmatprep.subr.bf16.mxu0 0
        %2434 = vmatpush1.bf16.xpose.msra.mxu0 0
        %2435 = vmatprep.subr.bf16.mxu0 0
        %2436 = vmatpush1.bf16.xpose.msra.mxu0 0
        %2437 = vmatprep.subr.bf16.mxu0 0
        %2438 = vmatpush1.bf16.xpose.msra.mxu0 0
        %2439 = vmatprep.subr.bf16.mxu0 0
        %2440 = vmatpush1.bf16.xpose.msra.mxu0 0
        %2441 = vmatprep.mubr.bf16.mxu0 0
        %2442 = vmatmul.mubr.bf16.gmra.mrb[0].mxu0 %v2404
        %v2443 = vpop.f32.mrb[0].mxu0
        %v2444 = vadd.f32 %v2179, %v2443
        %v2445 = vpop.f32.mrb[0].mxu0
        %v2446 = vpop.f32.mrb[0].mxu0
        %v2447 = vpop.f32.mrb[0].mxu0
        %2448 = vdwg.mxu0
        %v2449 = vsel %vm1485, %v2444, -inf
        %2450 = vmax.xlane.f32.xlu0 %v2449
        %v2451 = vpop.xlane.xlu0 %2450
        %v2452 = vsub.f32 %v2444, %v2451
        %v2453 = vmul.f32 %v2452, 1.442695
        %v2454 = vpow.pop %v2453
        %v2455 = vsel %vm1485, %v2454, 0.0
        %2456 = vadd.xlane.f32.xlu0 %v2455
        %v2457 = vpop.xlane.xlu0 %2456
        %v2458 = vrcp.pop %v2457
        %v2459 = vmul.f32 %v2454, %v2458
        %v2460 = vpack.c.bf16 %v2459, %v2459
        %2461 = vrot.lane.b32.xlu0 %v2174, 80
        %v2462 = vpop.permute.xlu0 %2461
        %v2464 = vsel %vm1485, %v2460, 0
        %v2467 = vsel %vm1549, %v2462, 0
        %2469 = vmatprep.subr.bf16.mxu0 0
        %2470 = vmatpush1.bf16.msra.mxu0 %v2467
        %2471 = vmatprep.subr.bf16.mxu0 0
        %2472 = vmatpush1.bf16.msra.mxu0 0
        %2473 = vmatprep.subr.bf16.mxu0 0
        %2474 = vmatpush1.bf16.msra.mxu0 0
        %2475 = vmatprep.subr.bf16.mxu0 0
        %2476 = vmatpush1.bf16.msra.mxu0 0
        %2477 = vmatprep.subr.bf16.mxu0 0
        %2478 = vmatpush1.bf16.msra.mxu0 0
        %2479 = vmatprep.subr.bf16.mxu0 0
        %2480 = vmatpush1.bf16.msra.mxu0 0
        %2481 = vmatprep.subr.bf16.mxu0 0
        %2482 = vmatpush1.bf16.msra.mxu0 0
        %2483 = vmatprep.subr.bf16.mxu0 0
        %2484 = vmatpush1.bf16.msra.mxu0 0
        %2485 = vmatprep.subr.bf16.mxu0 0
        %2486 = vmatpush1.bf16.msra.mxu0 0
        %2487 = vmatprep.subr.bf16.mxu0 0
        %2488 = vmatpush1.bf16.msra.mxu0 0
        %2489 = vmatprep.subr.bf16.mxu0 0
        %2490 = vmatpush1.bf16.msra.mxu0 0
        %2491 = vmatprep.subr.bf16.mxu0 0
        %2492 = vmatpush1.bf16.msra.mxu0 0
        %2493 = vmatprep.subr.bf16.mxu0 0
        %2494 = vmatpush1.bf16.msra.mxu0 0
        %2495 = vmatprep.subr.bf16.mxu0 0
        %2496 = vmatpush1.bf16.msra.mxu0 0
        %2497 = vmatprep.subr.bf16.mxu0 0
        %2498 = vmatpush1.bf16.msra.mxu0 0
        %2499 = vmatprep.subr.bf16.mxu0 0
        %2500 = vmatpush1.bf16.msra.mxu0 0
        %2501 = vmatprep.mubr.bf16.mxu0 0
        %2502 = vmatmul.mubr.bf16.gmra.mrb[0].mxu0 %v2464
        %v2503 = vpop.f32.mrb[0].mxu0
        %v2504 = vadd.f32 0.0, %v2503
        %v2505 = vpop.f32.mrb[0].mxu0
        %v2506 = vpop.f32.mrb[0].mxu0
        %v2507 = vpop.f32.mrb[0].mxu0
        %2508 = vdwg.mxu0
        %2509 = vrot.lane.b32.xlu0 %v2173, 104
        %v2510 = vpop.permute.xlu0 %2509
        %2511 = vrot.lane.b32.xlu0 %v2174, 104
        %v2512 = vpop.permute.xlu0 %2511
        %v2514 = vsel %vm1485, %v2510, 0
        %v2517 = vsel %vm1485, %v2512, 0
        %2519 = vmatprep.subr.bf16.mxu0 0
        %2520 = vmatpush1.bf16.xpose.msra.mxu0 %v2517
        %2521 = vmatprep.subr.bf16.mxu0 0
        %2522 = vmatpush1.bf16.xpose.msra.mxu0 0
        %2523 = vmatprep.subr.bf16.mxu0 0
        %2524 = vmatpush1.bf16.xpose.msra.mxu0 0
        %2525 = vmatprep.subr.bf16.mxu0 0
        %2526 = vmatpush1.bf16.xpose.msra.mxu0 0
        %2527 = vmatprep.subr.bf16.mxu0 0
        %2528 = vmatpush1.bf16.xpose.msra.mxu0 0
        %2529 = vmatprep.subr.bf16.mxu0 0
        %2530 = vmatpush1.bf16.xpose.msra.mxu0 0
        %2531 = vmatprep.subr.bf16.mxu0 0
        %2532 = vmatpush1.bf16.xpose.msra.mxu0 0
        %2533 = vmatprep.subr.bf16.mxu0 0
        %2534 = vmatpush1.bf16.xpose.msra.mxu0 0
        %2535 = vmatprep.subr.bf16.mxu0 0
        %2536 = vmatpush1.bf16.xpose.msra.mxu0 0
        %2537 = vmatprep.subr.bf16.mxu0 0
        %2538 = vmatpush1.bf16.xpose.msra.mxu0 0
        %2539 = vmatprep.subr.bf16.mxu0 0
        %2540 = vmatpush1.bf16.xpose.msra.mxu0 0
        %2541 = vmatprep.subr.bf16.mxu0 0
        %2542 = vmatpush1.bf16.xpose.msra.mxu0 0
        %2543 = vmatprep.subr.bf16.mxu0 0
        %2544 = vmatpush1.bf16.xpose.msra.mxu0 0
        %2545 = vmatprep.subr.bf16.mxu0 0
        %2546 = vmatpush1.bf16.xpose.msra.mxu0 0
        %2547 = vmatprep.subr.bf16.mxu0 0
        %2548 = vmatpush1.bf16.xpose.msra.mxu0 0
        %2549 = vmatprep.subr.bf16.mxu0 0
        %2550 = vmatpush1.bf16.xpose.msra.mxu0 0
        %2551 = vmatprep.mubr.bf16.mxu0 0
        %2552 = vmatmul.mubr.bf16.gmra.mrb[0].mxu0 %v2514
        %v2553 = vpop.f32.mrb[0].mxu0
        %v2554 = vadd.f32 %v2179, %v2553
        %v2555 = vpop.f32.mrb[0].mxu0
        %v2556 = vpop.f32.mrb[0].mxu0
        %v2557 = vpop.f32.mrb[0].mxu0
        %2558 = vdwg.mxu0
        %v2559 = vsel %vm1485, %v2554, -inf
        %2560 = vmax.xlane.f32.xlu0 %v2559
        %v2561 = vpop.xlane.xlu0 %2560
        %v2562 = vsub.f32 %v2554, %v2561
        %v2563 = vmul.f32 %v2562, 1.442695
        %v2564 = vpow.pop %v2563
        %v2565 = vsel %vm1485, %v2564, 0.0
        %2566 = vadd.xlane.f32.xlu0 %v2565
        %v2567 = vpop.xlane.xlu0 %2566
        %v2568 = vrcp.pop %v2567
        %v2569 = vmul.f32 %v2564, %v2568
        %v2570 = vpack.c.bf16 %v2569, %v2569
        %2571 = vrot.lane.b32.xlu0 %v2174, 72
        %v2572 = vpop.permute.xlu0 %2571
        %v2574 = vsel %vm1485, %v2570, 0
        %v2577 = vsel %vm1549, %v2572, 0
        %2579 = vmatprep.subr.bf16.mxu0 0
        %2580 = vmatpush1.bf16.msra.mxu0 %v2577
        %2581 = vmatprep.subr.bf16.mxu0 0
        %2582 = vmatpush1.bf16.msra.mxu0 0
        %2583 = vmatprep.subr.bf16.mxu0 0
        %2584 = vmatpush1.bf16.msra.mxu0 0
        %2585 = vmatprep.subr.bf16.mxu0 0
        %2586 = vmatpush1.bf16.msra.mxu0 0
        %2587 = vmatprep.subr.bf16.mxu0 0
        %2588 = vmatpush1.bf16.msra.mxu0 0
        %2589 = vmatprep.subr.bf16.mxu0 0
        %2590 = vmatpush1.bf16.msra.mxu0 0
        %2591 = vmatprep.subr.bf16.mxu0 0
        %2592 = vmatpush1.bf16.msra.mxu0 0
        %2593 = vmatprep.subr.bf16.mxu0 0
        %2594 = vmatpush1.bf16.msra.mxu0 0
        %2595 = vmatprep.subr.bf16.mxu0 0
        %2596 = vmatpush1.bf16.msra.mxu0 0
        %2597 = vmatprep.subr.bf16.mxu0 0
        %2598 = vmatpush1.bf16.msra.mxu0 0
        %2599 = vmatprep.subr.bf16.mxu0 0
        %2600 = vmatpush1.bf16.msra.mxu0 0
        %2601 = vmatprep.subr.bf16.mxu0 0
        %2602 = vmatpush1.bf16.msra.mxu0 0
        %2603 = vmatprep.subr.bf16.mxu0 0
        %2604 = vmatpush1.bf16.msra.mxu0 0
        %2605 = vmatprep.subr.bf16.mxu0 0
        %2606 = vmatpush1.bf16.msra.mxu0 0
        %2607 = vmatprep.subr.bf16.mxu0 0
        %2608 = vmatpush1.bf16.msra.mxu0 0
        %2609 = vmatprep.subr.bf16.mxu0 0
        %2610 = vmatpush1.bf16.msra.mxu0 0
        %2611 = vmatprep.mubr.bf16.mxu0 0
        %2612 = vmatmul.mubr.bf16.gmra.mrb[0].mxu0 %v2574
        %v2613 = vpop.f32.mrb[0].mxu0
        %v2614 = vadd.f32 0.0, %v2613
        %v2615 = vpop.f32.mrb[0].mxu0
        %v2616 = vpop.f32.mrb[0].mxu0
        %v2617 = vpop.f32.mrb[0].mxu0
        %2618 = vdwg.mxu0
        %2620 = vrot.lane.b32.xlu0 %v2394, 8
        %v2621 = vpop.permute.xlu0 %2620
        %2624 = vrot.lane.b32.xlu0 %v2504, 16
        %v2625 = vpop.permute.xlu0 %2624
        %2628 = vrot.lane.b32.xlu0 %v2614, 24
        %v2629 = vpop.permute.xlu0 %2628
        %v2631 = vsel %vm1485, %v2283, %v2621
        %v2632 = vsel %vm1936, %v2631, %v2625
        %v2633 = vsel %vm1938, %v2632, %v2629
        %v2634 = vpack.c.bf16 %v2633, %v2633
        %v2636 = vlaneseq
        %v2637 = vshrl.u32 %v2636, 7
        %v2638 = vsub.s32 0, %v2637
        %v2639 = vrot.slane %v2172, %v2638
        %v2645 = vunpack.c.l.b16 %v2168
        %v2646 = vunpack.c.l.b16 %v2169
        %v2647 = vunpack.c.l.b16 %v2170
        %v2648 = vunpack.c.l.b16 %v2171
        %v2649 = vpack.c.b16 %v2646, %v2645
        %v2650 = vpack.c.b16 %v2648, %v2647
        %v2654 = vsel %vm1378, %v2634, 0
        %2656 = vmatprep.subr.bf16.mxu0 0
        %2657 = vmatpush1.bf16.msra.mxu0 %v2649
        %2658 = vmatprep.subr.bf16.mxu0 0
        %2659 = vmatpush1.bf16.msra.mxu0 %v2650
        %2660 = vmatprep.subr.bf16.mxu0 0
        %2661 = vmatpush1.bf16.msra.mxu0 0
        %2662 = vmatprep.subr.bf16.mxu0 0
        %2663 = vmatpush1.bf16.msra.mxu0 0
        %2664 = vmatprep.subr.bf16.mxu0 0
        %2665 = vmatpush1.bf16.msra.mxu0 0
        %2666 = vmatprep.subr.bf16.mxu0 0
        %2667 = vmatpush1.bf16.msra.mxu0 0
        %2668 = vmatprep.subr.bf16.mxu0 0
        %2669 = vmatpush1.bf16.msra.mxu0 0
        %2670 = vmatprep.subr.bf16.mxu0 0
        %2671 = vmatpush1.bf16.msra.mxu0 0
        %2672 = vmatprep.subr.bf16.mxu0 0
        %2673 = vmatpush1.bf16.msra.mxu0 0
        %2674 = vmatprep.subr.bf16.mxu0 0
        %2675 = vmatpush1.bf16.msra.mxu0 0
        %2676 = vmatprep.subr.bf16.mxu0 0
        %2677 = vmatpush1.bf16.msra.mxu0 0
        %2678 = vmatprep.subr.bf16.mxu0 0
        %2679 = vmatpush1.bf16.msra.mxu0 0
        %2680 = vmatprep.subr.bf16.mxu0 0
        %2681 = vmatpush1.bf16.msra.mxu0 0
        %2682 = vmatprep.subr.bf16.mxu0 0
        %2683 = vmatpush1.bf16.msra.mxu0 0
        %2684 = vmatprep.subr.bf16.mxu0 0
        %2685 = vmatpush1.bf16.msra.mxu0 0
        %2686 = vmatprep.subr.bf16.mxu0 0
        %2687 = vmatpush1.bf16.msra.mxu0 0
        %2688 = vmatprep.mubr.bf16.mxu0 0
        %2689 = vmatmul.mubr.bf16.gmra.mrb[0].mxu0 %v2654
        %v2690 = vpop.f32.mrb[0].mxu0
        %v2691 = vadd.f32 %v2639, %v2690
        %v2692 = vpop.f32.mrb[0].mxu0
        %v2693 = vpop.f32.mrb[0].mxu0
        %v2694 = vpop.f32.mrb[0].mxu0
        %2695 = vdwg.mxu0
        %v2696 = vadd.f32 %v2002, %v2691
        %v2697 = vld [vmem:[%s1347] sm:$0x1]
        %v2698 = vld [vmem:[%s1350] sm:$0x1]
        %v2699 = vsel %vm1378, %v2696, 0.0
        %2700 = vadd.xlane.f32.xlu0 %v2699
        %v2701 = vpop.xlane.xlu0 %2700
        %v2702 = vmul.f32 %v2701, %v1382
        %v2703 = vmul.f32 %v2696, %v2696
        %v2704 = vsel %vm1378, %v2703, 0.0
        %2705 = vadd.xlane.f32.xlu0 %v2704
        %v2706 = vpop.xlane.xlu0 %2705
        %v2707 = vmul.f32 %v2706, %v1382
        %v2708 = vmul.f32 %v2702, %v2702
        %v2709 = vsub.f32 %v2707, %v2708
        %v2710 = vsub.f32 %v2696, %v2702
        %v2711 = vadd.f32 %v2709, 1e-05
        %v2712 = vrsqrt.pop %v2711
        %v2713 = vmul.f32 %v2710, %v2712
        %v2715 = vlaneseq
        %v2716 = vshrl.u32 %v2715, 7
        %v2717 = vsub.s32 0, %v2716
        %v2718 = vrot.slane %v2697, %v2717
        %v2720 = vmul.f32 %v2713, %v2718
        %v2722 = vlaneseq
        %v2723 = vshrl.u32 %v2722, 7
        %v2724 = vsub.s32 0, %v2723
        %v2725 = vrot.slane %v2698, %v2724
        %v2727 = vadd.f32 %v2720, %v2725
        %v2728 = vpack.c.bf16 %v2727, %v2727
        %v2729 = vld [vmem:[%s1132] sm:$0xf]
        %v2730 = vld [vmem:[%s1132 + $0x4] sm:$0xf]
        %v2731 = vld [vmem:[%s1132 + $0x8] sm:$0xf]
        %v2732 = vld [vmem:[%s1132 + $0xc] sm:$0xf]
        %v2733 = vld [vmem:[%s1324] sm:$0x1]
        %v2735 = vlaneseq
        %v2736 = vshrl.u32 %v2735, 7
        %v2737 = vsub.s32 0, %v2736
        %v2738 = vrot.slane %v2733, %v2737
        %v2744 = vunpack.c.l.b16 %v2729
        %v2745 = vunpack.c.l.b16 %v2730
        %v2746 = vunpack.c.l.b16 %v2731
        %v2747 = vunpack.c.l.b16 %v2732
        %v2748 = vpack.c.b16 %v2745, %v2744
        %v2749 = vpack.c.b16 %v2747, %v2746
        %v2753 = vsel %vm1378, %v2728, 0
        %2755 = vmatprep.subr.bf16.mxu0 0
        %2756 = vmatpush1.bf16.msra.mxu0 %v2748
        %2757 = vmatprep.subr.bf16.mxu0 0
        %2758 = vmatpush1.bf16.msra.mxu0 %v2749
        %2759 = vmatprep.subr.bf16.mxu0 0
        %2760 = vmatpush1.bf16.msra.mxu0 0
        %2761 = vmatprep.subr.bf16.mxu0 0
        %2762 = vmatpush1.bf16.msra.mxu0 0
        %2763 = vmatprep.subr.bf16.mxu0 0
        %2764 = vmatpush1.bf16.msra.mxu0 0
        %2765 = vmatprep.subr.bf16.mxu0 0
        %2766 = vmatpush1.bf16.msra.mxu0 0
        %2767 = vmatprep.subr.bf16.mxu0 0
        %2768 = vmatpush1.bf16.msra.mxu0 0
        %2769 = vmatprep.subr.bf16.mxu0 0
        %2770 = vmatpush1.bf16.msra.mxu0 0
        %2771 = vmatprep.subr.bf16.mxu0 0
        %2772 = vmatpush1.bf16.msra.mxu0 0
        %2773 = vmatprep.subr.bf16.mxu0 0
        %2774 = vmatpush1.bf16.msra.mxu0 0
        %2775 = vmatprep.subr.bf16.mxu0 0
        %2776 = vmatpush1.bf16.msra.mxu0 0
        %2777 = vmatprep.subr.bf16.mxu0 0
        %2778 = vmatpush1.bf16.msra.mxu0 0
        %2779 = vmatprep.subr.bf16.mxu0 0
        %2780 = vmatpush1.bf16.msra.mxu0 0
        %2781 = vmatprep.subr.bf16.mxu0 0
        %2782 = vmatpush1.bf16.msra.mxu0 0
        %2783 = vmatprep.subr.bf16.mxu0 0
        %2784 = vmatpush1.bf16.msra.mxu0 0
        %2785 = vmatprep.subr.bf16.mxu0 0
        %2786 = vmatpush1.bf16.msra.mxu0 0
        %2787 = vmatprep.mubr.bf16.mxu0 0
        %2788 = vmatmul.mubr.bf16.gmra.mrb[0].mxu0 %v2753
        %v2789 = vpop.f32.mrb[0].mxu0
        %v2790 = vadd.f32 %v2738, %v2789
        %v2791 = vpop.f32.mrb[0].mxu0
        %v2792 = vpop.f32.mrb[0].mxu0
        %v2793 = vpop.f32.mrb[0].mxu0
        %2794 = vdwg.mxu0
        %v2795 = vmax.f32 %v2790, 0.0
        %v2796 = vpack.c.bf16 %v2795, %v2795
        %v2797 = vld [vmem:[%s1329] sm:$0xf]
        %v2798 = vld [vmem:[%s1329 + $0x4] sm:$0xf]
        %v2799 = vld [vmem:[%s1329 + $0x8] sm:$0xf]
        %v2800 = vld [vmem:[%s1329 + $0xc] sm:$0xf]
        %v2801 = vld [vmem:[%s1329 + $0x10] sm:$0xf]
        %v2802 = vld [vmem:[%s1329 + $0x14] sm:$0xf]
        %v2803 = vld [vmem:[%s1329 + $0x18] sm:$0xf]
        %v2804 = vld [vmem:[%s1329 + $0x1c] sm:$0xf]
        %v2813 = vunpack.c.l.b16 %v2797
        %v2814 = vunpack.c.l.b16 %v2798
        %v2815 = vunpack.c.l.b16 %v2799
        %v2816 = vunpack.c.l.b16 %v2800
        %v2817 = vunpack.c.l.b16 %v2801
        %v2818 = vunpack.c.l.b16 %v2802
        %v2819 = vunpack.c.l.b16 %v2803
        %v2820 = vunpack.c.l.b16 %v2804
        %v2821 = vpack.c.b16 %v2814, %v2813
        %v2822 = vpack.c.b16 %v2816, %v2815
        %v2823 = vpack.c.b16 %v2818, %v2817
        %v2824 = vpack.c.b16 %v2820, %v2819
        %vm2829 = vcmask 523264
        %v2831 = vsel %vm2829, %v2796, 0
        %2833 = vmatprep.subr.bf16.mxu0 0
        %2834 = vmatpush1.bf16.msra.mxu0 %v2821
        %2835 = vmatprep.subr.bf16.mxu0 0
        %2836 = vmatpush1.bf16.msra.mxu0 %v2822
        %2837 = vmatprep.subr.bf16.mxu0 0
        %2838 = vmatpush1.bf16.msra.mxu0 %v2823
        %2839 = vmatprep.subr.bf16.mxu0 0
        %2840 = vmatpush1.bf16.msra.mxu0 %v2824
        %2841 = vmatprep.subr.bf16.mxu0 0
        %2842 = vmatpush1.bf16.msra.mxu0 0
        %2843 = vmatprep.subr.bf16.mxu0 0
        %2844 = vmatpush1.bf16.msra.mxu0 0
        %2845 = vmatprep.subr.bf16.mxu0 0
        %2846 = vmatpush1.bf16.msra.mxu0 0
        %2847 = vmatprep.subr.bf16.mxu0 0
        %2848 = vmatpush1.bf16.msra.mxu0 0
        %2849 = vmatprep.subr.bf16.mxu0 0
        %2850 = vmatpush1.bf16.msra.mxu0 0
        %2851 = vmatprep.subr.bf16.mxu0 0
        %2852 = vmatpush1.bf16.msra.mxu0 0
        %2853 = vmatprep.subr.bf16.mxu0 0
        %2854 = vmatpush1.bf16.msra.mxu0 0
        %2855 = vmatprep.subr.bf16.mxu0 0
        %2856 = vmatpush1.bf16.msra.mxu0 0
        %2857 = vmatprep.subr.bf16.mxu0 0
        %2858 = vmatpush1.bf16.msra.mxu0 0
        %2859 = vmatprep.subr.bf16.mxu0 0
        %2860 = vmatpush1.bf16.msra.mxu0 0
        %2861 = vmatprep.subr.bf16.mxu0 0
        %2862 = vmatpush1.bf16.msra.mxu0 0
        %2863 = vmatprep.subr.bf16.mxu0 0
        %2864 = vmatpush1.bf16.msra.mxu0 0
        %2865 = vmatprep.mubr.bf16.mxu0 0
        %2866 = vmatmul.mubr.bf16.gmra.mrb[0].mxu0 %v2831
        %v2867 = vpop.f32.mrb[0].mxu0
        %v2868 = vadd.f32 0.0, %v2867
        %v2869 = vpop.f32.mrb[0].mxu0
        %v2870 = vpop.f32.mrb[0].mxu0
        %v2871 = vpop.f32.mrb[0].mxu0
        %2872 = vdwg.mxu0
        %v2873 = vadd.f32 %v2696, %v2868
        %v2874 = vld [vmem:[%s1332] sm:$0x1]
        %v2876 = vlaneseq
        %v2877 = vshrl.u32 %v2876, 7
        %v2878 = vsub.s32 0, %v2877
        %v2879 = vrot.slane %v2874, %v2878
        %v2881 = vadd.f32 %v2873, %v2879
        %2882 = vst.msk [vmem:[#allocation2] sm:$0xff] %vm1378, %v2881
        %p2883 = scmp.eq.s32.totalorder %s59, 1
        // Predicated region
        $region165: #{tpu_custom_call.1} parent=131 // pred_check
          %p2884 = pneg %p2883
        $region166: #{tpu_custom_call.1} parent=131 // pred_check_branch
          %2886 = sbr.rel (%p2884) target = $region168
        $region167: #{tpu_custom_call.1} parent=131 // pred_region
          %v2887 = vld [vmem:[%s24] sm:$0x1]
          %v2888 = vld [vmem:[%s25] sm:$0x1]
          %v2889 = vsel %vm1378, %v2881, 0.0
          %2890 = vadd.xlane.f32.xlu0 %v2889
          %v2891 = vpop.xlane.xlu0 %2890
          %v2892 = vmul.f32 %v2891, %v1382
          %v2893 = vmul.f32 %v2881, %v2881
          %v2894 = vsel %vm1378, %v2893, 0.0
          %2895 = vadd.xlane.f32.xlu0 %v2894
          %v2896 = vpop.xlane.xlu0 %2895
          %v2897 = vmul.f32 %v2896, %v1382
          %v2898 = vmul.f32 %v2892, %v2892
          %v2899 = vsub.f32 %v2897, %v2898
          %v2900 = vsub.f32 %v2881, %v2892
          %v2901 = vadd.f32 %v2899, 1e-05
          %v2902 = vrsqrt.pop %v2901
          %v2903 = vmul.f32 %v2900, %v2902
          %v2905 = vlaneseq
          %v2906 = vshrl.u32 %v2905, 7
          %v2907 = vsub.s32 0, %v2906
          %v2908 = vrot.slane %v2887, %v2907
          %v2910 = vmul.f32 %v2903, %v2908
          %v2912 = vlaneseq
          %v2913 = vshrl.u32 %v2912, 7
          %v2914 = vsub.s32 0, %v2913
          %v2915 = vrot.slane %v2888, %v2914
          %v2917 = vadd.f32 %v2910, %v2915
          %v2918 = vpack.c.bf16 %v2917, %v2917
          %v2919 = vld [vmem:[%s26] sm:$0xf]
          %v2920 = vld [vmem:[%s26 + $0x4] sm:$0xf]
          %v2921 = vld [vmem:[%s26 + $0x8] sm:$0xf]
          %v2922 = vld [vmem:[%s26 + $0xc] sm:$0xf]
          %v2923 = vld [vmem:[%s27] sm:$0x1]
          %v2925 = vlaneseq
          %v2926 = vshrl.u32 %v2925, 7
          %v2927 = vsub.s32 0, %v2926
          %v2928 = vrot.slane %v2923, %v2927
          %v2934 = vunpack.c.l.b16 %v2919
          %v2935 = vunpack.c.l.b16 %v2920
          %v2936 = vunpack.c.l.b16 %v2921
          %v2937 = vunpack.c.l.b16 %v2922
          %v2938 = vpack.c.b16 %v2935, %v2934
          %v2939 = vpack.c.b16 %v2937, %v2936
          %v2943 = vsel %vm1378, %v2918, 0
          %2945 = vmatprep.subr.bf16.mxu0 0
          %2946 = vmatpush1.bf16.msra.mxu0 %v2938
          %2947 = vmatprep.subr.bf16.mxu0 0
          %2948 = vmatpush1.bf16.msra.mxu0 %v2939
          %2949 = vmatprep.subr.bf16.mxu0 0
          %2950 = vmatpush1.bf16.msra.mxu0 0
          %2951 = vmatprep.subr.bf16.mxu0 0
          %2952 = vmatpush1.bf16.msra.mxu0 0
          %2953 = vmatprep.subr.bf16.mxu0 0
          %2954 = vmatpush1.bf16.msra.mxu0 0
          %2955 = vmatprep.subr.bf16.mxu0 0
          %2956 = vmatpush1.bf16.msra.mxu0 0
          %2957 = vmatprep.subr.bf16.mxu0 0
          %2958 = vmatpush1.bf16.msra.mxu0 0
          %2959 = vmatprep.subr.bf16.mxu0 0
          %2960 = vmatpush1.bf16.msra.mxu0 0
          %2961 = vmatprep.subr.bf16.mxu0 0
          %2962 = vmatpush1.bf16.msra.mxu0 0
          %2963 = vmatprep.subr.bf16.mxu0 0
          %2964 = vmatpush1.bf16.msra.mxu0 0
          %2965 = vmatprep.subr.bf16.mxu0 0
          %2966 = vmatpush1.bf16.msra.mxu0 0
          %2967 = vmatprep.subr.bf16.mxu0 0
          %2968 = vmatpush1.bf16.msra.mxu0 0
          %2969 = vmatprep.subr.bf16.mxu0 0
          %2970 = vmatpush1.bf16.msra.mxu0 0
          %2971 = vmatprep.subr.bf16.mxu0 0
          %2972 = vmatpush1.bf16.msra.mxu0 0
          %2973 = vmatprep.subr.bf16.mxu0 0
          %2974 = vmatpush1.bf16.msra.mxu0 0
          %2975 = vmatprep.subr.bf16.mxu0 0
          %2976 = vmatpush1.bf16.msra.mxu0 0
          %2977 = vmatprep.mubr.bf16.mxu0 0
          %2978 = vmatmul.mubr.bf16.gmra.mrb[0].mxu0 %v2943
          %v2979 = vpop.f32.mrb[0].mxu0
          %v2980 = vadd.f32 %v2928, %v2979
          %v2981 = vpop.f32.mrb[0].mxu0
          %v2982 = vpop.f32.mrb[0].mxu0
          %v2983 = vpop.f32.mrb[0].mxu0
          %2984 = vdwg.mxu0
          %2985 = vst [vmem:[%s1291] sm:$0xff] %v2980
        $region168: #{tpu_custom_call.1} parent=131 // pred_fallthru
          _
        %s2986 = sand.u32 %s782, 1
        %s2987 = scalar_lea.sflag [#allocation5], %s2986
        %s2988 = sand.u32 %s782, 1
        %s2989 = smul.addr %s2988, 8
        %s2990 = scalar_lea.vmem [#allocation15], %s2989
        // Predicated region
        $region169: #{tpu_custom_call.1} parent=131 // pred_check
          %p2991 = pneg %p792
        $region170: #{tpu_custom_call.1} parent=131 // pred_check_branch
          %2993 = sbr.rel (%p2991) target = $region172
        $region171: #{tpu_custom_call.1} parent=131 // pred_region
          %s2995 = ssub.s32 128, 128
          %2996 = vsyncadd %s2987, %s2995
          %s2997 = smul.addr %s58, 128
          %s2998 = scalar_lea.hbm %s28, %s2997
          %s3000 = sshll.u32 %s2990, 4
          %s3001 = int_to_ptr.vmem [resolvable:$true] %s3000
          %3003 = dma.vmem_to_hbm [thread:$0]  %s3001, 128, %s2998, %s2987
        $region172: #{tpu_custom_call.1} parent=131 // pred_fallthru
          _
      $region132: #{tpu_custom_call.1} parent=5 // pred_fallthru
        _
      %p3004 = scmp.le.s32.totalorder 2, %s49
      // Predicated region
      $region173: #{tpu_custom_call.1} parent=5 // pred_check
        %p3005 = pneg %p3004
      $region174: #{tpu_custom_call.1} parent=5 // pred_check_branch
        %3007 = sbr.rel (%p3005) target = $region176
      $region175: #{tpu_custom_call.1} parent=5 // pred_region
        %s3008 = ssub.s32 %s49, 2
        // Predicated region
        $region177: #{tpu_custom_call.1} parent=175 // pred_check
          %p3009 = pneg %p798
        $region178: #{tpu_custom_call.1} parent=175 // pred_check_branch
          %3011 = sbr.rel (%p3009) target = $region180
        $region179: #{tpu_custom_call.1} parent=175 // pred_region
          %s3012 = sand.u32 %s783, 1
          %s3013 = scalar_lea.sflag [#allocation5], %s3012
          %s3014 = sand.u32 %s783, 1
          %s3015 = smul.addr %s3014, 8
          %s3016 = scalar_lea.vmem [#allocation15], %s3015
          %3017 = dma.done %s3013, 128
        $region180: #{tpu_custom_call.1} parent=175 // pred_fallthru
          _
      $region176: #{tpu_custom_call.1} parent=5 // pred_fallthru
        _
    $region6: #{tpu_custom_call.1} parent=1 // loop_footer
      %s53 = sadd.s32 1, %s49
    $region7: #{tpu_custom_call.1} parent=1 // loop_footer_branch
      %48 = sbr.rel target = $region3
    $region8: #{tpu_custom_call.1} parent=1 // loop_exit
      _
    %3018 = vsyncpa [#allocation4], 1
    %s3019 = scalar_lea.sflag [#allocation4], 1
    %3020 = vsyncpa %s3019, 1
    %3021 = vsyncpa [#allocation7], 1
    %s3022 = scalar_lea.sflag [#allocation7], 1
    %3023 = vsyncpa %s3022, 1
    %3024 = vsyncpa [#allocation10], 1
    %s3025 = scalar_lea.sflag [#allocation10], 1
    %3026 = vsyncpa %s3025, 1
    %3027 = vsyncpa [#allocation13], 1
    %s3028 = scalar_lea.sflag [#allocation13], 1
    %3029 = vsyncpa %s3028, 1
    %3030 = vsyncpa [#allocation5], 1
    %s3031 = scalar_lea.sflag [#allocation5], 1
    %3032 = vsyncpa %s3031, 1

</llo_original>
